<compile_context>
chip_gen: v7x
topology: tpu7x:2x2x1
jax: 0.10.0
libtpu: 0.0.40
codegen_flags: <defaults>
</compile_context>

<pallas_src>
import functools

import jax
import jax.numpy as jnp
from jax.experimental import pallas as pl
from jax.experimental.pallas import tpu as pltpu

# Row / K tile sizes for streaming the dense block-diagonal adjacency.
# 128 keeps every A tile lane-dense.  VMEM budget per layer call is roughly
# 2*(TM*TK + TK*H)*2B (double-buffered A and X tiles) + TM*H out + TM*F acc,
# comfortably under the 48 MiB scoped limit below on v5e/v6e (128 MiB) and
# v7x (64 MiB).  Use larger TM/TK for big graphs on v5e/v6e; keep ~half on v7x.
_TM = 128
_TK = 128
_VMEM_LIMIT = 48 * 1024 * 1024


def _round_up(x, m):
    return ((x + m - 1) // m) * m


# ----------------------------------------------------------------------------
# Kernels
# ----------------------------------------------------------------------------
def _gcn_layer_kernel(num_k):
    """relu((A @ X) @ W + b) for one (row-tile, k-tile) grid cell."""

    def kernel(a_ref, x_ref, w_ref, b_ref, y_ref, acc_ref):
        k = pl.program_id(1)

        @pl.when(k == 0)
        def _init():
            acc_ref[...] = jnp.zeros_like(acc_ref)

        # Dominant matmul: bf16 operands, f32 accumulation on the MXU.
        acc_ref[...] += jnp.dot(a_ref[...], x_ref[...],
                                preferred_element_type=jnp.float32)

        @pl.when(k == num_k - 1)
        def _finish():
            # Small (TM, F) @ (F, H) matmul kept in f32: avoids the extra bf16
            # rounding of the A@X intermediate (review correctness concern).
            pre = jnp.dot(acc_ref[...], w_ref[...].astype(jnp.float32),
                          preferred_element_type=jnp.float32) + b_ref[...]
            y_ref[...] = jnp.maximum(pre, 0.0).astype(y_ref.dtype)

    return kernel


def _head_kernel(num_k):
    """Per-branch mean pool (P @ X) -> lin1 -> ReLU -> (dropout=id) -> lin2."""

    def kernel(p_ref, x_ref, w1_ref, b1_ref, w2_ref, b2_ref,
               h_ref, y_ref, acc_ref):
        k = pl.program_id(1)

        @pl.when(k == 0)
        def _init():
            acc_ref[...] = jnp.zeros_like(acc_ref)

        acc_ref[...] += jnp.dot(p_ref[...], x_ref[...],
                                preferred_element_type=jnp.float32)

        @pl.when(k == num_k - 1)
        def _finish():
            h = acc_ref[...]
            h_ref[...] = h
            z = jnp.maximum(
                jnp.dot(h, w1_ref[...].astype(jnp.float32),
                        preferred_element_type=jnp.float32) + b1_ref[...], 0.0)
            # F.dropout(p=0.5, training=False) -> identity (inference).
            y_ref[...] = (jnp.dot(z, w2_ref[...].astype(jnp.float32),
                                  preferred_element_type=jnp.float32)
                          + b2_ref[...])

    return kernel


# ----------------------------------------------------------------------------
# pallas_call wrappers
# ----------------------------------------------------------------------------
def gcn_layer(a_bd, x, w, b, *, n1_tiles, tm=_TM, tk=_TK):
    """One GCN layer over the padded, row-stacked pair of graphs.

    a_bd : [Ntp, Ntp] bf16  block-diagonal normalized adjacency (streamed).
    x    : [Ntp, F]   bf16  input features / previous-layer activation.
    w    : [B, F, H]  bf16  B=2: per-branch weights selected by row tile;
                            B=1: shared weight.
    b    : [B, 1, H]  f32   biases.
    """
    ntp = a_bd.shape[0]
    f_in = x.shape[1]
    hidden = w.shape[-1]
    assert ntp % tm == 0 and ntp % tk == 0
    num_i, num_k = ntp // tm, ntp // tk

    if w.shape[0] == 1:
        wb_idx = lambda i, k: (0, 0, 0)
    else:
        # Branch boundary is row-tile aligned (per-branch node counts padded
        # to multiples of TM), so every row tile uses exactly one weight set
        # (no duplicated matmuls, no jnp.where selects).
        wb_idx = lambda i, k: (jnp.where(i < n1_tiles, 0, 1), 0, 0)

    return pl.pallas_call(
        _gcn_layer_kernel(num_k),
        out_shape=jax.ShapeDtypeStruct((ntp, hidden), jnp.bfloat16),
        grid_spec=pltpu.PrefetchScalarGridSpec(
            num_scalar_prefetch=0,
            grid=(num_i, num_k),
            in_specs=[
                pl.BlockSpec((tm, tk), lambda i, k: (i, k)),     # A tile
                pl.BlockSpec((tk, f_in), lambda i, k: (k, 0)),   # X k-tile
                pl.BlockSpec((None, f_in, hidden), wb_idx),      # W (per branch)
                pl.BlockSpec((None, 1, hidden), wb_idx),         # b (per branch)
            ],
            out_specs=pl.BlockSpec((tm, hidden), lambda i, k: (i, 0)),
            scratch_shapes=[pltpu.VMEM((tm, f_in), jnp.float32)],
        ),
        compiler_params=pltpu.CompilerParams(
            dimension_semantics=("parallel", "arbitrary"),
            vmem_limit_bytes=_VMEM_LIMIT,
        ),
    )(a_bd, x, w, b)


def pool_head(p, x, w1, b1, w2, b2, *, tk=_TK):
    """Per-branch mean pool + MLP head.  grid = (branch, K tiles over nodes)."""
    _, gp, ntp = p.shape
    hidden = w1.shape[-1]
    cp = w2.shape[-1]
    assert ntp % tk == 0
    num_k = ntp // tk
    bsel = lambda bi, k: (bi, 0, 0)

    return pl.pallas_call(
        _head_kernel(num_k),
        out_shape=(
            jax.ShapeDtypeStruct((2, gp, hidden), jnp.float32),   # pooled h
            jax.ShapeDtypeStruct((2, gp, cp), jnp.float32),       # padded logits
        ),
        grid_spec=pltpu.PrefetchScalarGridSpec(
            num_scalar_prefetch=0,
            grid=(2, num_k),
            in_specs=[
                pl.BlockSpec((None, gp, tk), lambda bi, k: (bi, 0, k)),  # P tile
                pl.BlockSpec((tk, hidden), lambda bi, k: (k, 0)),        # X k-tile
                pl.BlockSpec((None, hidden, hidden), bsel),              # lin1 W
                pl.BlockSpec((None, 1, hidden), bsel),                   # lin1 b
                pl.BlockSpec((None, hidden, cp), bsel),                  # lin2 W
                pl.BlockSpec((None, 1, cp), bsel),                       # lin2 b
            ],
            out_specs=(
                pl.BlockSpec((None, gp, hidden), lambda bi, k: (bi, 0, 0)),
                pl.BlockSpec((None, gp, cp), lambda bi, k: (bi, 0, 0)),
            ),
            scratch_shapes=[pltpu.VMEM((gp, hidden), jnp.float32)],
        ),
        compiler_params=pltpu.CompilerParams(
            dimension_semantics=("parallel", "arbitrary"),
            vmem_limit_bytes=_VMEM_LIMIT,
        ),
    )(p, x, w1, b1, w2, b2)


# ----------------------------------------------------------------------------
# Graph-operator construction (plain JAX, fused into the jitted forward)
# ----------------------------------------------------------------------------
def build_norm_adj(edge_index, edge_weight, num_nodes):
    """PyG GCNConv normalization: A_hat = D^-1/2 (A + I) D^-1/2 (dense, f32)."""
    src, dst = edge_index[0], edge_index[1]
    if edge_weight is None:
        edge_weight = jnp.ones(src.shape[0], dtype=jnp.float32)
    a = jnp.zeros((num_nodes, num_nodes), dtype=jnp.float32)
    a = a.at[dst, src].add(edge_weight.astype(jnp.float32))
    a = a + jnp.eye(num_nodes, dtype=jnp.float32)     # self loops, weight 1
    deg = a.sum(axis=1)
    dinv = jnp.where(deg > 0, 1.0 / jnp.sqrt(deg), 0.0)
    return dinv[:, None] * a * dinv[None, :]


def _mean_pool_matrix(batch, num_graphs_padded):
    onehot = (batch[None, :] ==
              jnp.arange(num_graphs_padded)[:, None]).astype(jnp.float32)
    cnt = jnp.maximum(onehot.sum(axis=1, keepdims=True), 1.0)
    return onehot / cnt


@functools.partial(jax.jit,
                   static_argnames=("g1", "g2", "num_classes", "tm", "tk"))
def _mimo_gcn_forward(params, x1, ei1, ew1, batch1, x2, ei2, ew2, batch2, *,
                      g1, g2, num_classes, tm, tk):
    f32, bf16 = jnp.float32, jnp.bfloat16
    n1, n2 = x1.shape[0], x2.shape[0]
    n1p, n2p = _round_up(n1, tm), _round_up(n2, tm)
    ntp = n1p + n2p
    gp = max(_round_up(max(g1, g2), 8), 8)

    # Block-diagonal normalized adjacency (f32 degree math, bf16 MXU operand).
    # Padded rows/cols are zero, so pad nodes never contaminate real nodes or
    # pooled outputs and their (garbage) activations are sliced away below.
    a1 = build_norm_adj(ei1, ew1, n1)
    a2 = build_norm_adj(ei2, ew2, n2)
    a_bd = jnp.zeros((ntp, ntp), f32)
    a_bd = a_bd.at[:n1, :n1].set(a1)
    a_bd = a_bd.at[n1p:n1p + n2, n1p:n1p + n2].set(a2)
    a_bd = a_bd.astype(bf16)

    x_pad = jnp.zeros((ntp, x1.shape[1]), f32)
    x_pad = x_pad.at[:n1].set(x1)
    x_pad = x_pad.at[n1p:n1p + n2].set(x2)
    x_pad = x_pad.astype(bf16)

    # Per-branch mean-pool operators, stacked [2, Gp, Ntp].
    pool = jnp.zeros((2, gp, ntp), f32)
    pool = pool.at[0, :, :n1].set(_mean_pool_matrix(batch1, gp))
    pool = pool.at[1, :, n1p:n1p + n2].set(_mean_pool_matrix(batch2, gp))
    pool = pool.astype(bf16)

    n1_tiles = n1p // tm

    # GCN stack: layer 1 has per-branch weights, deeper layers are shared.
    xs_layers = []
    x = gcn_layer(a_bd, x_pad, params["w1c"], params["b1c"],
                  n1_tiles=n1_tiles, tm=tm, tk=tk)
    xs_layers.append(x)
    for wl, bl in zip(params["ws"], params["bs"]):
        x = gcn_layer(a_bd, x, wl, bl, n1_tiles=n1_tiles, tm=tm, tk=tk)
        xs_layers.append(x)

    h, y = pool_head(pool, x, params["w1l"], params["b1l"],
                     params["w2l"], params["b2l"], tk=tk)

    xss = [[xl[:n1] for xl in xs_layers],
           [xl[n1p:n1p + n2] for xl in xs_layers]]
    hs = [h[0, :g1], h[1, :g2]]
    ys = [y[0, :g1, :num_classes], y[1, :g2, :num_classes]]
    return xss, hs, ys


# ----------------------------------------------------------------------------
# mimoGCN model (two input branches; deeper conv stack shared between them)
# ----------------------------------------------------------------------------
class MimoGCNPallas:
    def __init__(self, in_dim, num_classes, num_layers, hidden, key,
                 dropout=0.5, pool_type="mean", use_jk=False):
        assert pool_type == "mean", "only mean pooling implemented"
        assert not use_jk  # TODO(synk): JumpingKnowledge branch not implemented.

        def init_linear(k, fan_in, fan_out):
            kw, kb = jax.random.split(k)
            bound = 1.0 / jnp.sqrt(fan_in)
            w = jax.random.uniform(kw, (fan_in, fan_out), jnp.float32, -bound, bound)
            b = jax.random.uniform(kb, (fan_out,), jnp.float32, -bound, bound)
            return w, b

        self.in_dim = in_dim
        self.num_classes = num_classes
        self.num_layers = num_layers
        self.hidden = hidden
        self.dropout = dropout
        cp = _round_up(num_classes, 128)   # lane-dense logits, sliced in wrapper
        self.cp = cp

        nshared = num_layers - 1
        keys = jax.random.split(key, 2 + max(nshared, 0) + 4)
        ki = iter(keys)
        conv1 = [init_linear(next(ki), in_dim, hidden) for _ in range(2)]
        shared = [init_linear(next(ki), hidden, hidden) for _ in range(nshared)]
        lin1 = [init_linear(next(ki), hidden, hidden) for _ in range(2)]
        lin2 = [init_linear(next(ki), hidden, num_classes) for _ in range(2)]

        bf16 = jnp.bfloat16
        # conv1: per-branch, stacked for index_map selection by row tile.
        self.w1c = jnp.stack([w for w, _ in conv1]).astype(bf16)            # [2,F,H]
        self.b1c = jnp.stack([b.reshape(1, -1) for _, b in conv1])          # [2,1,H]
        # shared conv layers: one weight set each (B=1).
        self.ws = [w[None].astype(bf16) for w, _ in shared]                 # [1,H,H]
        self.bs = [b.reshape(1, 1, -1) for _, b in shared]                  # [1,1,H]
        # head: per-branch; lin2 zero-padded on the class axis (lane-dense).
        self.w1l = jnp.stack([w for w, _ in lin1]).astype(bf16)             # [2,H,H]
        self.b1l = jnp.stack([b.reshape(1, -1) for _, b in lin1])           # [2,1,H]
        w2p = [jnp.zeros((hidden, cp), jnp.float32).at[:, :num_classes].set(w)
               for w, _ in lin2]
        b2p = [jnp.zeros((1, cp), jnp.float32).at[:, :num_classes].set(b.reshape(1, -1))
               for _, b in lin2]
        self.w2l = jnp.stack(w2p).astype(bf16)                              # [2,H,Cp]
        self.b2l = jnp.stack(b2p)                                           # [2,1,Cp]

        self.params = {
            "w1c": self.w1c, "b1c": self.b1c,
            "ws": self.ws, "bs": self.bs,
            "w1l": self.w1l, "b1l": self.b1l,
            "w2l": self.w2l, "b2l": self.b2l,
        }

    def __call__(self, data, data2):
        def ew(d):
            w = d.get("edge_weights")
            if w is None:
                w = jnp.ones(d["edge_index"].shape[1], jnp.float32)
            return w.astype(jnp.float32)

        xss, hs, ys = _mimo_gcn_forward(
            self.params,
            data["x"].astype(jnp.float32), data["edge_index"], ew(data), data["batch"],
            data2["x"].astype(jnp.float32), data2["edge_index"], ew(data2), data2["batch"],
            g1=int(data["num_graphs"]), g2=int(data2["num_graphs"]),
            num_classes=self.num_classes, tm=_TM, tk=_TK,
        )
        edge_indexs = [data["edge_index"], data2["edge_index"]]
        return ([edge_indexs, xss, hs], ys)

    # Pure-JAX f32 reference of the same forward (for correctness checking).
    def reference(self, data, data2):
        f32 = jnp.float32
        ys = []
        for i, d in enumerate((data, data2)):
            n = d["x"].shape[0]
            g = int(d["num_graphs"])
            a = build_norm_adj(d["edge_index"], d.get("edge_weights"), n)
            onehot = (d["batch"][None, :] == jnp.arange(g)[:, None]).astype(f32)
            p = onehot / jnp.maximum(onehot.sum(axis=1, keepdims=True), 1.0)
            x = d["x"].astype(f32)
            x = jnp.maximum(a @ (x @ self.w1c[i].astype(f32)) + self.b1c[i, 0], 0.0)
            for wl, bl in zip(self.ws, self.bs):
                x = jnp.maximum(a @ (x @ wl[0].astype(f32)) + bl[0, 0], 0.0)
            h = p @ x
            z = jnp.maximum(h @ self.w1l[i].astype(f32) + self.b1l[i, 0], 0.0)
            y = (z @ self.w2l[i, :, :self.num_classes].astype(f32)
                 + self.b2l[i, 0, :self.num_classes])
            ys.append(y)
        return ys


# ----------------------------------------------------------------------------
# Example run
# ----------------------------------------------------------------------------
def make_graph_batch(key, num_nodes, in_dim, num_edges, num_graphs):
    kx, ks, kd, kw = jax.random.split(key, 4)
    x = jax.random.normal(kx, (num_nodes, in_dim), jnp.float32)
    src = jax.random.randint(ks, (num_edges,), 0, num_nodes)
    dst = jax.random.randint(kd, (num_edges,), 0, num_nodes)
    edge_index = jnp.stack([src, dst], axis=0)
    edge_weights = jax.random.uniform(kw, (num_edges,), jnp.float32, 0.5, 1.5)
    nodes_per_graph = max(num_nodes // num_graphs, 1)
    batch = jnp.minimum(jnp.arange(num_nodes) // nodes_per_graph, num_graphs - 1)
    return {"x": x, "edge_index": edge_index, "edge_weights": edge_weights,
            "batch": batch, "num_graphs": num_graphs}


if __name__ == "__main__":
    IN_DIM = 8
    HIDDEN = 128          # multiple of 128: lane-dense MXU ops / stores
    NUM_CLASSES = 4
    NUM_LAYERS = 3
    NUM_NODES = 16
    NUM_EDGES = 40
    NUM_GRAPHS = 2

    root = jax.random.PRNGKey(0)
    k_params, k_g1, k_g2 = jax.random.split(root, 3)

    model = MimoGCNPallas(IN_DIM, NUM_CLASSES, NUM_LAYERS, HIDDEN, k_params)
    data = make_graph_batch(k_g1, NUM_NODES, IN_DIM, NUM_EDGES, NUM_GRAPHS)
    data2 = make_graph_batch(k_g2, NUM_NODES, IN_DIM, NUM_EDGES, NUM_GRAPHS)

    (aux, ys) = model(data, data2)
    ys = [jax.block_until_ready(y) for y in ys]
    hs = [jax.block_until_ready(h) for h in aux[2]]
    xss = aux[1]

    # Shape checks (module semantics).
    assert ys[0].shape == (NUM_GRAPHS, NUM_CLASSES)
    assert ys[1].shape == (NUM_GRAPHS, NUM_CLASSES)
    assert hs[0].shape == (NUM_GRAPHS, HIDDEN)
    assert hs[1].shape == (NUM_GRAPHS, HIDDEN)
    assert all(len(branch) == NUM_LAYERS for branch in xss)
    assert all(xl.shape == (NUM_NODES, HIDDEN) for branch in xss for xl in branch)

    # Numerical check vs pure-JAX f32 reference (bf16 A / activations => loose tol).
    ys_ref = model.reference(data, data2)
    for y, yr in zip(ys, ys_ref):
        err = float(jnp.max(jnp.abs(y - yr)))
        assert err < 1e-1, f"logits mismatch vs reference: max abs err {err}"

    print("KERNEL_OK")
</pallas_src>

<mosaic_0001>
module attributes {stable_mosaic.version = 11 : i64} {
  func.func @kernel(%arg0: i32, %arg1: i32, %arg2: memref<128x128xbf16, #tpu.memory_space<vmem>>, %arg3: memref<128x8xbf16, #tpu.memory_space<vmem>>, %arg4: memref<1x8x128xbf16, #tpu.memory_space<vmem>>, %arg5: memref<1x1x128xf32, #tpu.memory_space<vmem>>, %arg6: memref<128x128xbf16, #tpu.memory_space<vmem>>, %arg7: memref<128x8xf32, #tpu.memory_space<vmem>>) attributes {dimension_semantics = [#tpu.dimension_semantics<parallel>, #tpu.dimension_semantics<arbitrary>], iteration_bounds = array<i64: 2, 2>, scalar_prefetch = 0 : i64, scratch_operands = 1 : i64, tpu.core_type = #tpu.core_type<tc>, window_params = [{transform_indices = @transform_0, window_bounds = array<i64: 128, 128>}, {transform_indices = @transform_1, window_bounds = array<i64: 128, 8>}, {transform_indices = @transform_2, window_bounds = array<i64: 1, 8, 128>}, {transform_indices = @transform_3, window_bounds = array<i64: 1, 1, 128>}, {transform_indices = @transform_4, window_bounds = array<i64: 128, 128>}]} {
    %c0_i32 = arith.constant 0 : i32
    %0 = arith.cmpi eq, %arg1, %c0_i32 : i32
    %1 = arith.extui %0 : i1 to i32
    %c0_i32_0 = arith.constant 0 : i32
    %2 = arith.cmpi ne, %1, %c0_i32_0 : i32
    scf.if %2 {
      %cst_9 = arith.constant 0.000000e+00 : f32
      %12 = vector.broadcast %cst_9 : f32 to vector<128x8xf32>
      %c0_10 = arith.constant 0 : index
      %c0_11 = arith.constant 0 : index
      %13 = vector.load %arg7[%c0_10, %c0_11] : memref<128x8xf32, #tpu.memory_space<vmem>>, vector<128x8xf32>
      tpu.vector_store %arg7[%c0_10, %c0_11], %12 {strides = array<i32>} : memref<128x8xf32, #tpu.memory_space<vmem>>, vector<128x8xf32>,
    } else {
    }
    %c0 = arith.constant 0 : index
    %c0_1 = arith.constant 0 : index
    %3 = vector.load %arg7[%c0, %c0_1] : memref<128x8xf32, #tpu.memory_space<vmem>>, vector<128x8xf32>
    %c0_2 = arith.constant 0 : index
    %c0_3 = arith.constant 0 : index
    %4 = vector.load %arg2[%c0_2, %c0_3] : memref<128x128xbf16, #tpu.memory_space<vmem>>, vector<128x128xbf16>
    %c0_4 = arith.constant 0 : index
    %c0_5 = arith.constant 0 : index
    %5 = vector.load %arg3[%c0_4, %c0_5] : memref<128x8xbf16, #tpu.memory_space<vmem>>, vector<128x8xbf16>
    %cst = arith.constant dense<0.000000e+00> : vector<128x8xf32>
    %6 = tpu.matmul %4, %5, %cst {dimension_numbers = #tpu.dot_dimension_numbers<[1], [0], [0], [1], [0, 0, 1, 1], [], []>} : vector<128x128xbf16>, vector<128x8xbf16>, vector<128x8xf32> -> vector<128x8xf32>
    %7 = arith.addf %3, %6 : vector<128x8xf32>
    %c0_6 = arith.constant 0 : index
    %c0_7 = arith.constant 0 : index
    %8 = vector.load %arg7[%c0_6, %c0_7] : memref<128x8xf32, #tpu.memory_space<vmem>>, vector<128x8xf32>
    tpu.vector_store %arg7[%c0_6, %c0_7], %7 {strides = array<i32>} : memref<128x8xf32, #tpu.memory_space<vmem>>, vector<128x8xf32>,
    %c1_i32 = arith.constant 1 : i32
    %9 = arith.cmpi eq, %arg1, %c1_i32 : i32
    %10 = arith.extui %9 : i1 to i32
    %c0_i32_8 = arith.constant 0 : i32
    %11 = arith.cmpi ne, %10, %c0_i32_8 : i32
    scf.if %11 {
      %c0_9 = arith.constant 0 : index
      %c0_10 = arith.constant 0 : index
      %12 = vector.load %arg7[%c0_9, %c0_10] : memref<128x8xf32, #tpu.memory_space<vmem>>, vector<128x8xf32>
      %c0_11 = arith.constant 0 : index
      %c0_12 = arith.constant 0 : index
      %c0_13 = arith.constant 0 : index
      %13 = vector.load %arg4[%c0_11, %c0_12, %c0_13] : memref<1x8x128xbf16, #tpu.memory_space<vmem>>, vector<1x8x128xbf16>
      %14 = vector.shape_cast %13 : vector<1x8x128xbf16> to vector<8x128xbf16>
      %15 = arith.extf %14 : vector<8x128xbf16> to vector<8x128xf32>
      %cst_14 = arith.constant dense<0.000000e+00> : vector<128x128xf32>
      %16 = tpu.matmul %12, %15, %cst_14 {dimension_numbers = #tpu.dot_dimension_numbers<[1], [0], [0], [1], [0, 0, 1, 1], [], []>} : vector<128x8xf32>, vector<8x128xf32>, vector<128x128xf32> -> vector<128x128xf32>
      %c0_15 = arith.constant 0 : index
      %c0_16 = arith.constant 0 : index
      %c0_17 = arith.constant 0 : index
      %17 = vector.load %arg5[%c0_15, %c0_16, %c0_17] : memref<1x1x128xf32, #tpu.memory_space<vmem>>, vector<1x1x128xf32>
      %18 = vector.shape_cast %17 : vector<1x1x128xf32> to vector<1x128xf32>
      %19 = vector.broadcast %18 : vector<1x128xf32> to vector<128x128xf32>
      %20 = arith.addf %16, %19 : vector<128x128xf32>
      %cst_18 = arith.constant 0.000000e+00 : f32
      %21 = vector.broadcast %cst_18 : f32 to vector<128x128xf32>
      %22 = arith.maximumf %20, %21 : vector<128x128xf32>
      %23 = arith.truncf %22 : vector<128x128xf32> to vector<128x128xbf16>
      %c0_19 = arith.constant 0 : index
      %c0_20 = arith.constant 0 : index
      %24 = vector.load %arg6[%c0_19, %c0_20] : memref<128x128xbf16, #tpu.memory_space<vmem>>, vector<128x128xbf16>
      tpu.vector_store %arg6[%c0_19, %c0_20], %23 {strides = array<i32>} : memref<128x128xbf16, #tpu.memory_space<vmem>>, vector<128x128xbf16>,
    } else {
    }
    return
  }
  func.func @transform_0(%arg0: i32, %arg1: i32) -> (i32, i32) {
    %c0_i32 = arith.constant 0 : i32
    return %arg0, %arg1 : i32, i32
  }
  func.func @transform_1(%arg0: i32, %arg1: i32) -> (i32, i32) {
    %c0_i32 = arith.constant 0 : i32
    %c0_i32_0 = arith.constant 0 : i32
    return %arg1, %c0_i32 : i32, i32
  }
  func.func @transform_2(%arg0: i32, %arg1: i32) -> (i32, i32, i32) {
    %c1_i32 = arith.constant 1 : i32
    %0 = arith.cmpi slt, %arg0, %c1_i32 : i32
    %c0_i32 = arith.constant 0 : i32
    %c1_i32_0 = arith.constant 1 : i32
    %1 = arith.select %0, %c0_i32, %c1_i32_0 : i32
    %c0_i32_1 = arith.constant 0 : i32
    %c0_i32_2 = arith.constant 0 : i32
    %c0_i32_3 = arith.constant 0 : i32
    return %1, %c0_i32_1, %c0_i32_2 : i32, i32, i32
  }
  func.func @transform_3(%arg0: i32, %arg1: i32) -> (i32, i32, i32) {
    %c1_i32 = arith.constant 1 : i32
    %0 = arith.cmpi slt, %arg0, %c1_i32 : i32
    %c0_i32 = arith.constant 0 : i32
    %c1_i32_0 = arith.constant 1 : i32
    %1 = arith.select %0, %c0_i32, %c1_i32_0 : i32
    %c0_i32_1 = arith.constant 0 : i32
    %c0_i32_2 = arith.constant 0 : i32
    %c0_i32_3 = arith.constant 0 : i32
    return %1, %c0_i32_1, %c0_i32_2 : i32, i32, i32
  }
  func.func @transform_4(%arg0: i32, %arg1: i32) -> (i32, i32) {
    %c0_i32 = arith.constant 0 : i32
    %c0_i32_0 = arith.constant 0 : i32
    return %arg0, %c0_i32 : i32, i32
  }
}

module attributes {stable_mosaic.version = 11 : i64} {
  func.func @kernel(%arg0: i32, %arg1: i32, %arg2: memref<128x128xbf16, #tpu.memory_space<vmem>>, %arg3: memref<128x128xbf16, #tpu.memory_space<vmem>>, %arg4: memref<1x128x128xbf16, #tpu.memory_space<vmem>>, %arg5: memref<1x1x128xf32, #tpu.memory_space<vmem>>, %arg6: memref<128x128xbf16, #tpu.memory_space<vmem>>, %arg7: memref<128x128xf32, #tpu.memory_space<vmem>>) attributes {dimension_semantics = [#tpu.dimension_semantics<parallel>, #tpu.dimension_semantics<arbitrary>], iteration_bounds = array<i64: 2, 2>, scalar_prefetch = 0 : i64, scratch_operands = 1 : i64, tpu.core_type = #tpu.core_type<tc>, window_params = [{transform_indices = @transform_0, window_bounds = array<i64: 128, 128>}, {transform_indices = @transform_1, window_bounds = array<i64: 128, 128>}, {pipeline_mode = #tpu.pipeline_mode<synchronous>, transform_indices = @transform_2, window_bounds = array<i64: 1, 128, 128>}, {pipeline_mode = #tpu.pipeline_mode<synchronous>, transform_indices = @transform_3, window_bounds = array<i64: 1, 1, 128>}, {transform_indices = @transform_4, window_bounds = array<i64: 128, 128>}]} {
    %c0_i32 = arith.constant 0 : i32
    %0 = arith.cmpi eq, %arg1, %c0_i32 : i32
    %1 = arith.extui %0 : i1 to i32
    %c0_i32_0 = arith.constant 0 : i32
    %2 = arith.cmpi ne, %1, %c0_i32_0 : i32
    scf.if %2 {
      %cst_9 = arith.constant 0.000000e+00 : f32
      %12 = vector.broadcast %cst_9 : f32 to vector<128x128xf32>
      %c0_10 = arith.constant 0 : index
      %c0_11 = arith.constant 0 : index
      %13 = vector.load %arg7[%c0_10, %c0_11] : memref<128x128xf32, #tpu.memory_space<vmem>>, vector<128x128xf32>
      tpu.vector_store %arg7[%c0_10, %c0_11], %12 {strides = array<i32>} : memref<128x128xf32, #tpu.memory_space<vmem>>, vector<128x128xf32>,
    } else {
    }
    %c0 = arith.constant 0 : index
    %c0_1 = arith.constant 0 : index
    %3 = vector.load %arg7[%c0, %c0_1] : memref<128x128xf32, #tpu.memory_space<vmem>>, vector<128x128xf32>
    %c0_2 = arith.constant 0 : index
    %c0_3 = arith.constant 0 : index
    %4 = vector.load %arg2[%c0_2, %c0_3] : memref<128x128xbf16, #tpu.memory_space<vmem>>, vector<128x128xbf16>
    %c0_4 = arith.constant 0 : index
    %c0_5 = arith.constant 0 : index
    %5 = vector.load %arg3[%c0_4, %c0_5] : memref<128x128xbf16, #tpu.memory_space<vmem>>, vector<128x128xbf16>
    %cst = arith.constant dense<0.000000e+00> : vector<128x128xf32>
    %6 = tpu.matmul %4, %5, %cst {dimension_numbers = #tpu.dot_dimension_numbers<[1], [0], [0], [1], [0, 0, 1, 1], [], []>} : vector<128x128xbf16>, vector<128x128xbf16>, vector<128x128xf32> -> vector<128x128xf32>
    %7 = arith.addf %3, %6 : vector<128x128xf32>
    %c0_6 = arith.constant 0 : index
    %c0_7 = arith.constant 0 : index
    %8 = vector.load %arg7[%c0_6, %c0_7] : memref<128x128xf32, #tpu.memory_space<vmem>>, vector<128x128xf32>
    tpu.vector_store %arg7[%c0_6, %c0_7], %7 {strides = array<i32>} : memref<128x128xf32, #tpu.memory_space<vmem>>, vector<128x128xf32>,
    %c1_i32 = arith.constant 1 : i32
    %9 = arith.cmpi eq, %arg1, %c1_i32 : i32
    %10 = arith.extui %9 : i1 to i32
    %c0_i32_8 = arith.constant 0 : i32
    %11 = arith.cmpi ne, %10, %c0_i32_8 : i32
    scf.if %11 {
      %c0_9 = arith.constant 0 : index
      %c0_10 = arith.constant 0 : index
      %12 = vector.load %arg7[%c0_9, %c0_10] : memref<128x128xf32, #tpu.memory_space<vmem>>, vector<128x128xf32>
      %c0_11 = arith.constant 0 : index
      %c0_12 = arith.constant 0 : index
      %c0_13 = arith.constant 0 : index
      %13 = vector.load %arg4[%c0_11, %c0_12, %c0_13] : memref<1x128x128xbf16, #tpu.memory_space<vmem>>, vector<1x128x128xbf16>
      %14 = vector.shape_cast %13 : vector<1x128x128xbf16> to vector<128x128xbf16>
      %15 = arith.extf %14 : vector<128x128xbf16> to vector<128x128xf32>
      %cst_14 = arith.constant dense<0.000000e+00> : vector<128x128xf32>
      %16 = tpu.matmul %12, %15, %cst_14 {dimension_numbers = #tpu.dot_dimension_numbers<[1], [0], [0], [1], [0, 0, 1, 1], [], []>} : vector<128x128xf32>, vector<128x128xf32>, vector<128x128xf32> -> vector<128x128xf32>
      %c0_15 = arith.constant 0 : index
      %c0_16 = arith.constant 0 : index
      %c0_17 = arith.constant 0 : index
      %17 = vector.load %arg5[%c0_15, %c0_16, %c0_17] : memref<1x1x128xf32, #tpu.memory_space<vmem>>, vector<1x1x128xf32>
      %18 = vector.shape_cast %17 : vector<1x1x128xf32> to vector<1x128xf32>
      %19 = vector.broadcast %18 : vector<1x128xf32> to vector<128x128xf32>
      %20 = arith.addf %16, %19 : vector<128x128xf32>
      %cst_18 = arith.constant 0.000000e+00 : f32
      %21 = vector.broadcast %cst_18 : f32 to vector<128x128xf32>
      %22 = arith.maximumf %20, %21 : vector<128x128xf32>
      %23 = arith.truncf %22 : vector<128x128xf32> to vector<128x128xbf16>
      %c0_19 = arith.constant 0 : index
      %c0_20 = arith.constant 0 : index
      %24 = vector.load %arg6[%c0_19, %c0_20] : memref<128x128xbf16, #tpu.memory_space<vmem>>, vector<128x128xbf16>
      tpu.vector_store %arg6[%c0_19, %c0_20], %23 {strides = array<i32>} : memref<128x128xbf16, #tpu.memory_space<vmem>>, vector<128x128xbf16>,
    } else {
    }
    return
  }
  func.func @transform_0(%arg0: i32, %arg1: i32) -> (i32, i32) {
    %c0_i32 = arith.constant 0 : i32
    return %arg0, %arg1 : i32, i32
  }
  func.func @transform_1(%arg0: i32, %arg1: i32) -> (i32, i32) {
    %c0_i32 = arith.constant 0 : i32
    %c0_i32_0 = arith.constant 0 : i32
    return %arg1, %c0_i32 : i32, i32
  }
  func.func @transform_2(%arg0: i32, %arg1: i32) -> (i32, i32, i32) {
    %c0_i32 = arith.constant 0 : i32
    %c0_i32_0 = arith.constant 0 : i32
    %c0_i32_1 = arith.constant 0 : i32
    %c0_i32_2 = arith.constant 0 : i32
    return %c0_i32, %c0_i32_0, %c0_i32_1 : i32, i32, i32
  }
  func.func @transform_3(%arg0: i32, %arg1: i32) -> (i32, i32, i32) {
    %c0_i32 = arith.constant 0 : i32
    %c0_i32_0 = arith.constant 0 : i32
    %c0_i32_1 = arith.constant 0 : i32
    %c0_i32_2 = arith.constant 0 : i32
    return %c0_i32, %c0_i32_0, %c0_i32_1 : i32, i32, i32
  }
  func.func @transform_4(%arg0: i32, %arg1: i32) -> (i32, i32) {
    %c0_i32 = arith.constant 0 : i32
    %c0_i32_0 = arith.constant 0 : i32
    return %arg0, %c0_i32 : i32, i32
  }
}

module attributes {stable_mosaic.version = 11 : i64} {
  func.func @kernel(%arg0: i32, %arg1: i32, %arg2: memref<1x8x128xbf16, #tpu.memory_space<vmem>>, %arg3: memref<128x128xbf16, #tpu.memory_space<vmem>>, %arg4: memref<1x128x128xbf16, #tpu.memory_space<vmem>>, %arg5: memref<1x1x128xf32, #tpu.memory_space<vmem>>, %arg6: memref<1x128x128xbf16, #tpu.memory_space<vmem>>, %arg7: memref<1x1x128xf32, #tpu.memory_space<vmem>>, %arg8: memref<1x8x128xf32, #tpu.memory_space<vmem>>, %arg9: memref<1x8x128xf32, #tpu.memory_space<vmem>>, %arg10: memref<8x128xf32, #tpu.memory_space<vmem>>) attributes {dimension_semantics = [#tpu.dimension_semantics<parallel>, #tpu.dimension_semantics<arbitrary>], iteration_bounds = array<i64: 2, 2>, scalar_prefetch = 0 : i64, scratch_operands = 1 : i64, tpu.core_type = #tpu.core_type<tc>, window_params = [{transform_indices = @transform_0, window_bounds = array<i64: 1, 8, 128>}, {transform_indices = @transform_1, window_bounds = array<i64: 128, 128>}, {transform_indices = @transform_2, window_bounds = array<i64: 1, 128, 128>}, {transform_indices = @transform_3, window_bounds = array<i64: 1, 1, 128>}, {transform_indices = @transform_4, window_bounds = array<i64: 1, 128, 128>}, {transform_indices = @transform_5, window_bounds = array<i64: 1, 1, 128>}, {transform_indices = @transform_6, window_bounds = array<i64: 1, 8, 128>}, {transform_indices = @transform_7, window_bounds = array<i64: 1, 8, 128>}]} {
    %c0_i32 = arith.constant 0 : i32
    %0 = arith.cmpi eq, %arg1, %c0_i32 : i32
    %1 = arith.extui %0 : i1 to i32
    %c0_i32_0 = arith.constant 0 : i32
    %2 = arith.cmpi ne, %1, %c0_i32_0 : i32
    scf.if %2 {
      %cst_10 = arith.constant 0.000000e+00 : f32
      %13 = vector.broadcast %cst_10 : f32 to vector<8x128xf32>
      %c0_11 = arith.constant 0 : index
      %c0_12 = arith.constant 0 : index
      %14 = vector.load %arg10[%c0_11, %c0_12] : memref<8x128xf32, #tpu.memory_space<vmem>>, vector<8x128xf32>
      tpu.vector_store %arg10[%c0_11, %c0_12], %13 {strides = array<i32>} : memref<8x128xf32, #tpu.memory_space<vmem>>, vector<8x128xf32>,
    } else {
    }
    %c0 = arith.constant 0 : index
    %c0_1 = arith.constant 0 : index
    %3 = vector.load %arg10[%c0, %c0_1] : memref<8x128xf32, #tpu.memory_space<vmem>>, vector<8x128xf32>
    %c0_2 = arith.constant 0 : index
    %c0_3 = arith.constant 0 : index
    %c0_4 = arith.constant 0 : index
    %4 = vector.load %arg2[%c0_2, %c0_3, %c0_4] : memref<1x8x128xbf16, #tpu.memory_space<vmem>>, vector<1x8x128xbf16>
    %5 = vector.shape_cast %4 : vector<1x8x128xbf16> to vector<8x128xbf16>
    %c0_5 = arith.constant 0 : index
    %c0_6 = arith.constant 0 : index
    %6 = vector.load %arg3[%c0_5, %c0_6] : memref<128x128xbf16, #tpu.memory_space<vmem>>, vector<128x128xbf16>
    %cst = arith.constant dense<0.000000e+00> : vector<8x128xf32>
    %7 = tpu.matmul %5, %6, %cst {dimension_numbers = #tpu.dot_dimension_numbers<[1], [0], [0], [1], [0, 0, 1, 1], [], []>} : vector<8x128xbf16>, vector<128x128xbf16>, vector<8x128xf32> -> vector<8x128xf32>
    %8 = arith.addf %3, %7 : vector<8x128xf32>
    %c0_7 = arith.constant 0 : index
    %c0_8 = arith.constant 0 : index
    %9 = vector.load %arg10[%c0_7, %c0_8] : memref<8x128xf32, #tpu.memory_space<vmem>>, vector<8x128xf32>
    tpu.vector_store %arg10[%c0_7, %c0_8], %8 {strides = array<i32>} : memref<8x128xf32, #tpu.memory_space<vmem>>, vector<8x128xf32>,
    %c1_i32 = arith.constant 1 : i32
    %10 = arith.cmpi eq, %arg1, %c1_i32 : i32
    %11 = arith.extui %10 : i1 to i32
    %c0_i32_9 = arith.constant 0 : i32
    %12 = arith.cmpi ne, %11, %c0_i32_9 : i32
    scf.if %12 {
      %c0_10 = arith.constant 0 : index
      %c0_11 = arith.constant 0 : index
      %13 = vector.load %arg10[%c0_10, %c0_11] : memref<8x128xf32, #tpu.memory_space<vmem>>, vector<8x128xf32>
      %c0_12 = arith.constant 0 : index
      %c0_13 = arith.constant 0 : index
      %c0_14 = arith.constant 0 : index
      %14 = vector.load %arg8[%c0_12, %c0_13, %c0_14] : memref<1x8x128xf32, #tpu.memory_space<vmem>>, vector<1x8x128xf32>
      %15 = vector.shape_cast %14 : vector<1x8x128xf32> to vector<8x128xf32>
      %16 = vector.shape_cast %13 : vector<8x128xf32> to vector<1x8x128xf32>
      tpu.vector_store %arg8[%c0_12, %c0_13, %c0_14], %16 {strides = array<i32>} : memref<1x8x128xf32, #tpu.memory_space<vmem>>, vector<1x8x128xf32>,
      %c0_15 = arith.constant 0 : index
      %c0_16 = arith.constant 0 : index
      %c0_17 = arith.constant 0 : index
      %17 = vector.load %arg4[%c0_15, %c0_16, %c0_17] : memref<1x128x128xbf16, #tpu.memory_space<vmem>>, vector<1x128x128xbf16>
      %18 = vector.shape_cast %17 : vector<1x128x128xbf16> to vector<128x128xbf16>
      %19 = arith.extf %18 : vector<128x128xbf16> to vector<128x128xf32>
      %cst_18 = arith.constant dense<0.000000e+00> : vector<8x128xf32>
      %20 = tpu.matmul %13, %19, %cst_18 {dimension_numbers = #tpu.dot_dimension_numbers<[1], [0], [0], [1], [0, 0, 1, 1], [], []>} : vector<8x128xf32>, vector<128x128xf32>, vector<8x128xf32> -> vector<8x128xf32>
      %c0_19 = arith.constant 0 : index
      %c0_20 = arith.constant 0 : index
      %c0_21 = arith.constant 0 : index
      %21 = vector.load %arg5[%c0_19, %c0_20, %c0_21] : memref<1x1x128xf32, #tpu.memory_space<vmem>>, vector<1x1x128xf32>
      %22 = vector.shape_cast %21 : vector<1x1x128xf32> to vector<1x128xf32>
      %23 = vector.broadcast %22 : vector<1x128xf32> to vector<8x128xf32>
      %24 = arith.addf %20, %23 : vector<8x128xf32>
      %cst_22 = arith.constant 0.000000e+00 : f32
      %25 = vector.broadcast %cst_22 : f32 to vector<8x128xf32>
      %26 = arith.maximumf %24, %25 : vector<8x128xf32>
      %c0_23 = arith.constant 0 : index
      %c0_24 = arith.constant 0 : index
      %c0_25 = arith.constant 0 : index
      %27 = vector.load %arg6[%c0_23, %c0_24, %c0_25] : memref<1x128x128xbf16, #tpu.memory_space<vmem>>, vector<1x128x128xbf16>
      %28 = vector.shape_cast %27 : vector<1x128x128xbf16> to vector<128x128xbf16>
      %29 = arith.extf %28 : vector<128x128xbf16> to vector<128x128xf32>
      %cst_26 = arith.constant dense<0.000000e+00> : vector<8x128xf32>
      %30 = tpu.matmul %26, %29, %cst_26 {dimension_numbers = #tpu.dot_dimension_numbers<[1], [0], [0], [1], [0, 0, 1, 1], [], []>} : vector<8x128xf32>, vector<128x128xf32>, vector<8x128xf32> -> vector<8x128xf32>
      %c0_27 = arith.constant 0 : index
      %c0_28 = arith.constant 0 : index
      %c0_29 = arith.constant 0 : index
      %31 = vector.load %arg7[%c0_27, %c0_28, %c0_29] : memref<1x1x128xf32, #tpu.memory_space<vmem>>, vector<1x1x128xf32>
      %32 = vector.shape_cast %31 : vector<1x1x128xf32> to vector<1x128xf32>
      %33 = vector.broadcast %32 : vector<1x128xf32> to vector<8x128xf32>
      %34 = arith.addf %30, %33 : vector<8x128xf32>
      %c0_30 = arith.constant 0 : index
      %c0_31 = arith.constant 0 : index
      %c0_32 = arith.constant 0 : index
      %35 = vector.load %arg9[%c0_30, %c0_31, %c0_32] : memref<1x8x128xf32, #tpu.memory_space<vmem>>, vector<1x8x128xf32>
      %36 = vector.shape_cast %35 : vector<1x8x128xf32> to vector<8x128xf32>
      %37 = vector.shape_cast %34 : vector<8x128xf32> to vector<1x8x128xf32>
      tpu.vector_store %arg9[%c0_30, %c0_31, %c0_32], %37 {strides = array<i32>} : memref<1x8x128xf32, #tpu.memory_space<vmem>>, vector<1x8x128xf32>,
    } else {
    }
    return
  }
  func.func @transform_0(%arg0: i32, %arg1: i32) -> (i32, i32, i32) {
    %c0_i32 = arith.constant 0 : i32
    %c0_i32_0 = arith.constant 0 : i32
    return %arg0, %c0_i32, %arg1 : i32, i32, i32
  }
  func.func @transform_1(%arg0: i32, %arg1: i32) -> (i32, i32) {
    %c0_i32 = arith.constant 0 : i32
    %c0_i32_0 = arith.constant 0 : i32
    return %arg1, %c0_i32 : i32, i32
  }
  func.func @transform_2(%arg0: i32, %arg1: i32) -> (i32, i32, i32) {
    %c0_i32 = arith.constant 0 : i32
    %c0_i32_0 = arith.constant 0 : i32
    %c0_i32_1 = arith.constant 0 : i32
    return %arg0, %c0_i32, %c0_i32_0 : i32, i32, i32
  }
  func.func @transform_3(%arg0: i32, %arg1: i32) -> (i32, i32, i32) {
    %c0_i32 = arith.constant 0 : i32
    %c0_i32_0 = arith.constant 0 : i32
    %c0_i32_1 = arith.constant 0 : i32
    return %arg0, %c0_i32, %c0_i32_0 : i32, i32, i32
  }
  func.func @transform_4(%arg0: i32, %arg1: i32) -> (i32, i32, i32) {
    %c0_i32 = arith.constant 0 : i32
    %c0_i32_0 = arith.constant 0 : i32
    %c0_i32_1 = arith.constant 0 : i32
    return %arg0, %c0_i32, %c0_i32_0 : i32, i32, i32
  }
  func.func @transform_5(%arg0: i32, %arg1: i32) -> (i32, i32, i32) {
    %c0_i32 = arith.constant 0 : i32
    %c0_i32_0 = arith.constant 0 : i32
    %c0_i32_1 = arith.constant 0 : i32
    return %arg0, %c0_i32, %c0_i32_0 : i32, i32, i32
  }
  func.func @transform_6(%arg0: i32, %arg1: i32) -> (i32, i32, i32) {
    %c0_i32 = arith.constant 0 : i32
    %c0_i32_0 = arith.constant 0 : i32
    %c0_i32_1 = arith.constant 0 : i32
    return %arg0, %c0_i32, %c0_i32_0 : i32, i32, i32
  }
  func.func @transform_7(%arg0: i32, %arg1: i32) -> (i32, i32, i32) {
    %c0_i32 = arith.constant 0 : i32
    %c0_i32_0 = arith.constant 0 : i32
    %c0_i32_1 = arith.constant 0 : i32
    return %arg0, %c0_i32, %c0_i32_0 : i32, i32, i32
  }
}

</mosaic_0001>

<llo_original>
// kernel: _mimo_gcn_forward.5
$region0: #{_mimo_gcn_forward.5}
  #allocation0 [shape = 'u32[]', space=smem, size = 0x4, offset = 0x4, fixed_abs, tag = 'smem constant byte address 0x4 - core index']
  #allocation1 [shape = 'u32[144,128]{1,0:T(1,128)}', space=vmem, size = 0x12000, scoped, tag = 'internal scratch']
  #allocation2 [shape = 'f32[128,128]{1,0:T(8,128)}', space=vmem, size = 0x10000, scoped, tag = 'scratch operand']
  %s0 = inlined_call_operand.vmem [shape: bf16[256,256], index: 0, kind: input, shape index: {}]
  %s1 = inlined_call_operand.vmem [shape: bf16[256,128], index: 1, kind: input, shape index: {}]
  %s2 = inlined_call_operand.vmem [shape: bf16[1,128,128], index: 2, kind: input, shape index: {}]
  %s3 = inlined_call_operand.vmem [shape: f32[1,1,128], index: 3, kind: input, shape index: {}]
  %s4 = inlined_call_operand.vmem [shape: bf16[256,128], index: 4, kind: output, shape index: {}]
  %s5 = sld [smem:[#allocation0]]
  $region98: #{_mimo_gcn_forward.5} parent=0
    _
  %s7 = ssub.s32 1, %s5
  %s8 = scalar_select 0, %s7, %s5
  $region1: #{_mimo_gcn_forward.5} parent=0
    #allocation3 [shape = 'u8[65536]{0}', space=vmem, size = 0x10000, scoped, tag = 'input window, operand 0']
    loop: start=0, step=1, limit=6
    $region2: #{_mimo_gcn_forward.5} parent=1 // loop_pre_header
      _
    $region3: #{_mimo_gcn_forward.5} parent=1 // loop_header
      %s10 = sphi 0, %s14
      %p11 = scmp.ge.s32.totalorder %s10, 6
      %s17 = sphi 0, %s29
      %s18 = sphi 0, %s25
      %s19 = sphi 0, %s17
      %s20 = sphi 0, %s18
      %s21 = sphi 0, %s19
      %s22 = sphi 0, %s20
      %s34 = sphi 0, %s36
      %s37 = sphi 0, %s34
      %s38 = sphi 0, %s37
      %s54 = sphi 0, %s38
      %s60 = sphi 0, %s62
      %s63 = sphi 0, %s60
      %s64 = sphi 0, %s63
      %s80 = sphi 0, %s64
      %s84 = sphi 0, %s84
      %s86 = sphi 0, %s84
      %s87 = sphi 0, %s86
      %s101 = sphi 0, %s87
      %s105 = sphi 0, %s105
      %s107 = sphi 0, %s105
      %s108 = sphi 0, %s107
      %s122 = sphi 0, %s108
      %s128 = sphi 0, %s130
      %s131 = sphi 0, %s128
      %s132 = sphi 0, %s131
      %s148 = sphi 0, %s132
    $region4: #{_mimo_gcn_forward.5} parent=1 // loop_header_branch
      %13 = sbr.rel (%p11) target = $region8
    $region5: #{_mimo_gcn_forward.5} parent=1 // loop_body
      %s15 = ssub.s32 %s10, 1
      %s16 = ssub.s32 %s10, 2
      %s23 = sadd.s32 1, %s18
      %p24 = scmp.ge.s32.totalorder %s23, 2
      %s25 = scalar_select %p24, 0, %s23
      %s26 = sadd.s32 1, %s17
      %s27 = scalar_select %p24, %s26, %s17
      %p28 = scmp.ge.s32.totalorder %s27, 2
      %s29 = scalar_select %p28, 0, %s27
      %s30 = ssub.s32 %s17, %s29
      %s31 = ssub.s32 %s18, %s25
      %s32 = sor.u32 %s30, %s31
      %p33 = scmp.eq.s32.totalorder %s32, 0
      %s35 = sadd.s32 %s34, 1
      %s36 = scalar_select %p33, %s34, %s35
      %p39 = pneg %p33
      %p40 = scmp.eq.s32.totalorder %s10, 3
      %p41 = por %p39, %p40
      %p42 = scmp.ne.s32.totalorder %s34, %s37
      %p43 = scmp.eq.s32.totalorder %s10, 0
      %p44 = por %p42, %p43
      %p45 = scmp.ne.s32.totalorder %s34, %s37
      %p46 = scmp.eq.s32.totalorder %s15, 3
      %p47 = por %p45, %p46
      %p48 = scmp.ne.s32.totalorder %s37, %s38
      %p49 = scmp.eq.s32.totalorder %s15, 0
      %p50 = por %p48, %p49
      %p51 = scmp.ne.s32.totalorder %s37, %s38
      %p52 = scmp.eq.s32.totalorder %s16, 3
      %p53 = por %p51, %p52
      %p55 = scmp.ne.s32.totalorder %s38, %s54
      %p56 = scmp.eq.s32.totalorder %s16, 0
      %p57 = por %p55, %p56
      %s58 = ssub.s32 %s18, %s25
      %p59 = scmp.eq.s32.totalorder %s58, 0
      %s61 = sadd.s32 %s60, 1
      %s62 = scalar_select %p59, %s60, %s61
      %p65 = pneg %p59
      %p66 = scmp.eq.s32.totalorder %s10, 3
      %p67 = por %p65, %p66
      %p68 = scmp.ne.s32.totalorder %s60, %s63
      %p69 = scmp.eq.s32.totalorder %s10, 0
      %p70 = por %p68, %p69
      %p71 = scmp.ne.s32.totalorder %s60, %s63
      %p72 = scmp.eq.s32.totalorder %s15, 3
      %p73 = por %p71, %p72
      %p74 = scmp.ne.s32.totalorder %s63, %s64
      %p75 = scmp.eq.s32.totalorder %s15, 0
      %p76 = por %p74, %p75
      %p77 = scmp.ne.s32.totalorder %s63, %s64
      %p78 = scmp.eq.s32.totalorder %s16, 3
      %p79 = por %p77, %p78
      %p81 = scmp.ne.s32.totalorder %s64, %s80
      %p82 = scmp.eq.s32.totalorder %s16, 0
      %p83 = por %p81, %p82
      %s85 = sadd.s32 %s84, 1
      %p88 = scmp.eq.s32.totalorder %s10, 3
      %p89 = scmp.ne.s32.totalorder %s84, %s86
      %p90 = scmp.eq.s32.totalorder %s10, 0
      %p91 = por %p89, %p90
      %p92 = scmp.ne.s32.totalorder %s84, %s86
      %p93 = scmp.eq.s32.totalorder %s15, 3
      %p94 = por %p92, %p93
      %p95 = scmp.ne.s32.totalorder %s86, %s87
      %p96 = scmp.eq.s32.totalorder %s15, 0
      %p97 = por %p95, %p96
      %p98 = scmp.ne.s32.totalorder %s86, %s87
      %p99 = scmp.eq.s32.totalorder %s16, 3
      %p100 = por %p98, %p99
      %p102 = scmp.ne.s32.totalorder %s87, %s101
      %p103 = scmp.eq.s32.totalorder %s16, 0
      %p104 = por %p102, %p103
      %s106 = sadd.s32 %s105, 1
      %p109 = scmp.eq.s32.totalorder %s10, 3
      %p110 = scmp.ne.s32.totalorder %s105, %s107
      %p111 = scmp.eq.s32.totalorder %s10, 0
      %p112 = por %p110, %p111
      %p113 = scmp.ne.s32.totalorder %s105, %s107
      %p114 = scmp.eq.s32.totalorder %s15, 3
      %p115 = por %p113, %p114
      %p116 = scmp.ne.s32.totalorder %s107, %s108
      %p117 = scmp.eq.s32.totalorder %s15, 0
      %p118 = por %p116, %p117
      %p119 = scmp.ne.s32.totalorder %s107, %s108
      %p120 = scmp.eq.s32.totalorder %s16, 3
      %p121 = por %p119, %p120
      %p123 = scmp.ne.s32.totalorder %s108, %s122
      %p124 = scmp.eq.s32.totalorder %s16, 0
      %p125 = por %p123, %p124
      %s126 = ssub.s32 %s17, %s29
      %p127 = scmp.eq.s32.totalorder %s126, 0
      %s129 = sadd.s32 %s128, 1
      %s130 = scalar_select %p127, %s128, %s129
      %p133 = pneg %p127
      %p134 = scmp.eq.s32.totalorder %s10, 3
      %p135 = por %p133, %p134
      %p136 = scmp.ne.s32.totalorder %s128, %s131
      %p137 = scmp.eq.s32.totalorder %s10, 0
      %p138 = por %p136, %p137
      %p139 = scmp.ne.s32.totalorder %s128, %s131
      %p140 = scmp.eq.s32.totalorder %s15, 3
      %p141 = por %p139, %p140
      %p142 = scmp.ne.s32.totalorder %s131, %s132
      %p143 = scmp.eq.s32.totalorder %s15, 0
      %p144 = por %p142, %p143
      %p145 = scmp.ne.s32.totalorder %s131, %s132
      %p146 = scmp.eq.s32.totalorder %s16, 3
      %p147 = por %p145, %p146
      %p149 = scmp.ne.s32.totalorder %s132, %s148
      %p150 = scmp.eq.s32.totalorder %s16, 0
      %p151 = por %p149, %p150
      %p152 = scmp.le.s32.totalorder 1, %s10
      %p153 = scmp.lt.s32.totalorder %s10, 5
      %p154 = pnand %p152, %p153
      %p155 = pneg %p154
      // Predicated region
      $region9: #{_mimo_gcn_forward.5} parent=5 // pred_check
        _
      $region10: #{_mimo_gcn_forward.5} parent=5 // pred_check_branch
        %157 = sbr.rel (%p154) target = $region12
      $region11: #{_mimo_gcn_forward.5} parent=5 // pred_region
        %s158 = ssub.s32 %s10, 1
        // Predicated region
        $region13: #{_mimo_gcn_forward.5} parent=11 // pred_check
          %p159 = pneg %p97
        $region14: #{_mimo_gcn_forward.5} parent=11 // pred_check_branch
          %161 = sbr.rel (%p159) target = $region16
        $region15: #{_mimo_gcn_forward.5} parent=11 // pred_region
          _
        $region16: #{_mimo_gcn_forward.5} parent=11 // pred_fallthru
          _
        // Predicated region
        $region17: #{_mimo_gcn_forward.5} parent=11 // pred_check
          %p162 = pneg %p118
        $region18: #{_mimo_gcn_forward.5} parent=11 // pred_check_branch
          %164 = sbr.rel (%p162) target = $region20
        $region19: #{_mimo_gcn_forward.5} parent=11 // pred_region
          _
        $region20: #{_mimo_gcn_forward.5} parent=11 // pred_fallthru
          _
      $region12: #{_mimo_gcn_forward.5} parent=5 // pred_fallthru
        _
      %p165 = scmp.lt.s32.totalorder %s10, 4
      // Predicated region
      $region21: #{_mimo_gcn_forward.5} parent=5 // pred_check
        %p166 = pneg %p165
      $region22: #{_mimo_gcn_forward.5} parent=5 // pred_check_branch
        %168 = sbr.rel (%p166) target = $region24
      $region23: #{_mimo_gcn_forward.5} parent=5 // pred_region
        // Predicated region
        $region25: #{_mimo_gcn_forward.5} parent=23 // pred_check
          %p169 = pneg %p44
        $region26: #{_mimo_gcn_forward.5} parent=23 // pred_check_branch
          %171 = sbr.rel (%p169) target = $region28
        $region27: #{_mimo_gcn_forward.5} parent=23 // pred_region
          %s172 = sand.u32 %s34, 1
          %s173 = sand.u32 %s34, 1
          %s174 = smul.addr %s173, 64
          %s175 = scalar_lea.vmem [#allocation3], %s174
          %s176 = smul.u32 16, %s17
          %s177 = smul.addr %s176, 2
          %s178 = sadd.s32 %s18, %s177
          %s179 = smul.addr %s178, 4
          %s180 = scalar_lea.vmem %s0, %s179
          // Predicated region
          $region29: #{_mimo_gcn_forward.5} parent=27 // pred_check
            _
          $region30: #{_mimo_gcn_forward.5} parent=27 // pred_check_branch
            %182 = sbr.rel (0) target = $region32
          $region31: #{_mimo_gcn_forward.5} parent=27 // pred_region
            // Predicated region
            $region33: #{_mimo_gcn_forward.5} parent=31 // pred_check
              _
            $region34: #{_mimo_gcn_forward.5} parent=31 // pred_check_branch
              %184 = sbr.rel target = $region36
            $region35: #{_mimo_gcn_forward.5} parent=31 // pred_region
              // Predicated region
              $region48: #{_mimo_gcn_forward.5} parent=35 // pred_check
                _
              $region49: #{_mimo_gcn_forward.5} parent=35 // pred_check_branch
                %229 = sbr.rel (0) target = $region51
              $region50: #{_mimo_gcn_forward.5} parent=35 // pred_region
                loop: start=0, step=1, limit=1
                $region52: #{_mimo_gcn_forward.5} parent=50 // loop_pre_header
                  _
                $region53: #{_mimo_gcn_forward.5} parent=50 // loop_header
                  %s231 = sphi 0, %s235
                  %p232 = scmp.ge.s32.totalorder %s231, 1
                  %s236 = sphi %s180, %s180
                  %s237 = sphi %s175, %s175
                $region54: #{_mimo_gcn_forward.5} parent=50 // loop_header_branch
                  %234 = sbr.rel (%p232) target = $region58
                $region55: #{_mimo_gcn_forward.5} parent=50 // loop_body
                  _
                $region56: #{_mimo_gcn_forward.5} parent=50 // loop_footer
                  %s235 = sadd.s32 1, %s231
                $region57: #{_mimo_gcn_forward.5} parent=50 // loop_footer_branch
                  %230 = sbr.rel target = $region53
                $region58: #{_mimo_gcn_forward.5} parent=50 // loop_exit
                  _
                loop: start=0, step=1, limit=1
                $region59: #{_mimo_gcn_forward.5} parent=50 // loop_pre_header
                  _
                $region60: #{_mimo_gcn_forward.5} parent=50 // loop_header
                  %s240 = sphi 0, %s244
                  %p241 = scmp.ge.s32.totalorder %s240, 1
                  %s245 = sphi %s180, %s180
                  %s246 = sphi %s175, %s175
                $region61: #{_mimo_gcn_forward.5} parent=50 // loop_header_branch
                  %243 = sbr.rel (%p241) target = $region65
                $region62: #{_mimo_gcn_forward.5} parent=50 // loop_body
                  %v247 = vld [vmem:[%s245] sm:$0xf]
                  %248 = vst [vmem:[%s246] sm:$0xf] %v247
                  %v249 = vld [vmem:[%s245 + $0x8] sm:$0xf]
                  %250 = vst [vmem:[%s246 + $0x4] sm:$0xf] %v249
                  %v251 = vld [vmem:[%s245 + $0x10] sm:$0xf]
                  %252 = vst [vmem:[%s246 + $0x8] sm:$0xf] %v251
                  %v253 = vld [vmem:[%s245 + $0x18] sm:$0xf]
                  %254 = vst [vmem:[%s246 + $0xc] sm:$0xf] %v253
                  %v255 = vld [vmem:[%s245 + $0x20] sm:$0xf]
                  %256 = vst [vmem:[%s246 + $0x10] sm:$0xf] %v255
                  %v257 = vld [vmem:[%s245 + $0x28] sm:$0xf]
                  %258 = vst [vmem:[%s246 + $0x14] sm:$0xf] %v257
                  %v259 = vld [vmem:[%s245 + $0x30] sm:$0xf]
                  %260 = vst [vmem:[%s246 + $0x18] sm:$0xf] %v259
                  %v261 = vld [vmem:[%s245 + $0x38] sm:$0xf]
                  %262 = vst [vmem:[%s246 + $0x1c] sm:$0xf] %v261
                  %v263 = vld [vmem:[%s245 + $0x40] sm:$0xf]
                  %264 = vst [vmem:[%s246 + $0x20] sm:$0xf] %v263
                  %v265 = vld [vmem:[%s245 + $0x48] sm:$0xf]
                  %266 = vst [vmem:[%s246 + $0x24] sm:$0xf] %v265
                  %v267 = vld [vmem:[%s245 + $0x50] sm:$0xf]
                  %268 = vst [vmem:[%s246 + $0x28] sm:$0xf] %v267
                  %v269 = vld [vmem:[%s245 + $0x58] sm:$0xf]
                  %270 = vst [vmem:[%s246 + $0x2c] sm:$0xf] %v269
                  %v271 = vld [vmem:[%s245 + $0x60] sm:$0xf]
                  %272 = vst [vmem:[%s246 + $0x30] sm:$0xf] %v271
                  %v273 = vld [vmem:[%s245 + $0x68] sm:$0xf]
                  %274 = vst [vmem:[%s246 + $0x34] sm:$0xf] %v273
                  %v275 = vld [vmem:[%s245 + $0x70] sm:$0xf]
                  %276 = vst [vmem:[%s246 + $0x38] sm:$0xf] %v275
                  %v277 = vld [vmem:[%s245 + $0x78] sm:$0xf]
                  %278 = vst [vmem:[%s246 + $0x3c] sm:$0xf] %v277
                $region63: #{_mimo_gcn_forward.5} parent=50 // loop_footer
                  %s244 = sadd.s32 1, %s240
                $region64: #{_mimo_gcn_forward.5} parent=50 // loop_footer_branch
                  %239 = sbr.rel target = $region60
                $region65: #{_mimo_gcn_forward.5} parent=50 // loop_exit
                  _
              $region51: #{_mimo_gcn_forward.5} parent=35 // pred_fallthru
                _
            $region36: #{_mimo_gcn_forward.5} parent=31 // pred_fallthru
              _
            // Predicated region
            $region37: #{_mimo_gcn_forward.5} parent=31 // pred_check
              _
            $region38: #{_mimo_gcn_forward.5} parent=31 // pred_check_branch
              %186 = sbr.rel (0) target = $region40
            $region39: #{_mimo_gcn_forward.5} parent=31 // pred_region
              loop: start=0, step=1, limit=1
              $region41: #{_mimo_gcn_forward.5} parent=39 // loop_pre_header
                _
              $region42: #{_mimo_gcn_forward.5} parent=39 // loop_header
                %s189 = sphi 0, %s193
                %p190 = scmp.ge.s32.totalorder %s189, 1
                %s194 = sphi %s180, %s180
                %s195 = sphi %s175, %s175
              $region43: #{_mimo_gcn_forward.5} parent=39 // loop_header_branch
                %192 = sbr.rel (%p190) target = $region47
              $region44: #{_mimo_gcn_forward.5} parent=39 // loop_body
                %v196 = vld [vmem:[%s194] sm:$0xf]
                %197 = vst [vmem:[%s195] sm:$0xf] %v196
                %v198 = vld [vmem:[%s194 + $0x8] sm:$0xf]
                %199 = vst [vmem:[%s195 + $0x4] sm:$0xf] %v198
                %v200 = vld [vmem:[%s194 + $0x10] sm:$0xf]
                %201 = vst [vmem:[%s195 + $0x8] sm:$0xf] %v200
                %v202 = vld [vmem:[%s194 + $0x18] sm:$0xf]
                %203 = vst [vmem:[%s195 + $0xc] sm:$0xf] %v202
                %v204 = vld [vmem:[%s194 + $0x20] sm:$0xf]
                %205 = vst [vmem:[%s195 + $0x10] sm:$0xf] %v204
                %v206 = vld [vmem:[%s194 + $0x28] sm:$0xf]
                %207 = vst [vmem:[%s195 + $0x14] sm:$0xf] %v206
                %v208 = vld [vmem:[%s194 + $0x30] sm:$0xf]
                %209 = vst [vmem:[%s195 + $0x18] sm:$0xf] %v208
                %v210 = vld [vmem:[%s194 + $0x38] sm:$0xf]
                %211 = vst [vmem:[%s195 + $0x1c] sm:$0xf] %v210
                %v212 = vld [vmem:[%s194 + $0x40] sm:$0xf]
                %213 = vst [vmem:[%s195 + $0x20] sm:$0xf] %v212
                %v214 = vld [vmem:[%s194 + $0x48] sm:$0xf]
                %215 = vst [vmem:[%s195 + $0x24] sm:$0xf] %v214
                %v216 = vld [vmem:[%s194 + $0x50] sm:$0xf]
                %217 = vst [vmem:[%s195 + $0x28] sm:$0xf] %v216
                %v218 = vld [vmem:[%s194 + $0x58] sm:$0xf]
                %219 = vst [vmem:[%s195 + $0x2c] sm:$0xf] %v218
                %v220 = vld [vmem:[%s194 + $0x60] sm:$0xf]
                %221 = vst [vmem:[%s195 + $0x30] sm:$0xf] %v220
                %v222 = vld [vmem:[%s194 + $0x68] sm:$0xf]
                %223 = vst [vmem:[%s195 + $0x34] sm:$0xf] %v222
                %v224 = vld [vmem:[%s194 + $0x70] sm:$0xf]
                %225 = vst [vmem:[%s195 + $0x38] sm:$0xf] %v224
                %v226 = vld [vmem:[%s194 + $0x78] sm:$0xf]
                %227 = vst [vmem:[%s195 + $0x3c] sm:$0xf] %v226
              $region45: #{_mimo_gcn_forward.5} parent=39 // loop_footer
                %s193 = sadd.s32 1, %s189
              $region46: #{_mimo_gcn_forward.5} parent=39 // loop_footer_branch
                %188 = sbr.rel target = $region42
              $region47: #{_mimo_gcn_forward.5} parent=39 // loop_exit
                _
            $region40: #{_mimo_gcn_forward.5} parent=31 // pred_fallthru
              _
          $region32: #{_mimo_gcn_forward.5} parent=27 // pred_fallthru
            _
          %279 = vnop
        $region28: #{_mimo_gcn_forward.5} parent=23 // pred_fallthru
          _
        // Predicated region
        $region66: #{_mimo_gcn_forward.5} parent=23 // pred_check
          %p280 = pneg %p70
        $region67: #{_mimo_gcn_forward.5} parent=23 // pred_check_branch
          %282 = sbr.rel (%p280) target = $region69
        $region68: #{_mimo_gcn_forward.5} parent=23 // pred_region
          %s283 = smul.u32 16, %s18
          %p284 = scmp.lt.s32.totalorder %s283, 31
          %s285 = scalar_select %p284, %s283, 31
          %s286 = smul.addr %s285, 4
          %s287 = scalar_lea.vmem %s1, %s286
          %s288 = smul.u32 16, %s18
        $region69: #{_mimo_gcn_forward.5} parent=23 // pred_fallthru
          _
      $region24: #{_mimo_gcn_forward.5} parent=5 // pred_fallthru
        _
      %p289 = scmp.le.s32.totalorder 1, %s10
      %p290 = scmp.lt.s32.totalorder %s10, 5
      %p291 = pnand %p289, %p290
      %p292 = pneg %p291
      // Predicated region
      $region70: #{_mimo_gcn_forward.5} parent=5 // pred_check
        _
      $region71: #{_mimo_gcn_forward.5} parent=5 // pred_check_branch
        %294 = sbr.rel (%p291) target = $region73
      $region72: #{_mimo_gcn_forward.5} parent=5 // pred_region
        %s295 = ssub.s32 %s10, 1
        %s296 = sand.u32 %s37, 1
        %s297 = sand.u32 %s37, 1
        %s298 = smul.addr %s297, 64
        %s299 = scalar_lea.vmem [#allocation3], %s298
        // Predicated region
        $region74: #{_mimo_gcn_forward.5} parent=72 // pred_check
          %p300 = pneg %p50
        $region75: #{_mimo_gcn_forward.5} parent=72 // pred_check_branch
          %302 = sbr.rel (%p300) target = $region77
        $region76: #{_mimo_gcn_forward.5} parent=72 // pred_region
          _
        $region77: #{_mimo_gcn_forward.5} parent=72 // pred_fallthru
          _
        %s303 = sand.u32 %s37, 1
        %s304 = sand.u32 %s37, 1
        %s305 = smul.addr %s304, 64
        %s306 = scalar_lea.vmem [#allocation3], %s305
        %p307 = pneg %p50
        %p308 = pneg %p47
        %s309 = smul.u32 16, %s20
        %p310 = scmp.lt.s32.totalorder %s309, 31
        %s311 = scalar_select %p310, %s309, 31
        %s312 = smul.addr %s311, 4
        %s313 = scalar_lea.vmem %s1, %s312
        %p314 = pneg %p76
        %p315 = pneg %p73
        %p316 = pneg %p97
        %p317 = pneg %p94
        %p318 = pneg %p118
        %p319 = pneg %p115
        %p320 = pneg %p144
        %p321 = pneg %p141
        %s322 = smul.u32 16, %s19
        %p323 = scmp.lt.s32.totalorder %s322, 31
        %s324 = scalar_select %p323, %s322, 31
        %s325 = smul.addr %s324, 4
        %s326 = scalar_lea.vmem %s4, %s325
        %s327 = smul.u32 16, %s19
        %s328 = smul.u32 16, %s20
        %p329 = scmp.lt.s32.totalorder %s328, 31
        %s330 = scalar_select %p329, %s328, 31
        %s331 = smul.addr %s330, 4
        %s332 = scalar_lea.vmem %s1, %s331
        %s333 = smul.u32 16, %s20
        %s334 = smul.u32 16, %s19
        %p335 = scmp.lt.s32.totalorder %s334, 31
        %s336 = scalar_select %p335, %s334, 31
        %s337 = smul.addr %s336, 4
        %s338 = scalar_lea.vmem %s4, %s337
        %s339 = smul.u32 16, %s19
        %p341 = scmp.eq.s32.totalorder %s20, 0
        // Predicated region
        $region78: #{_mimo_gcn_forward.5} parent=72 // pred_check
          %p342 = pneg %p341
        $region79: #{_mimo_gcn_forward.5} parent=72 // pred_check_branch
          %344 = sbr.rel (%p342) target = $region81
        $region80: #{_mimo_gcn_forward.5} parent=72 // pred_region
          %345 = vst [vmem:[#allocation2] sm:$0xff] 0.0
          %346 = vst [vmem:[#allocation2 + $0x8] sm:$0xff] 0.0
          %347 = vst [vmem:[#allocation2 + $0x10] sm:$0xff] 0.0
          %348 = vst [vmem:[#allocation2 + $0x18] sm:$0xff] 0.0
          %349 = vst [vmem:[#allocation2 + $0x20] sm:$0xff] 0.0
          %350 = vst [vmem:[#allocation2 + $0x28] sm:$0xff] 0.0
          %351 = vst [vmem:[#allocation2 + $0x30] sm:$0xff] 0.0
          %352 = vst [vmem:[#allocation2 + $0x38] sm:$0xff] 0.0
          %353 = vst [vmem:[#allocation2 + $0x40] sm:$0xff] 0.0
          %354 = vst [vmem:[#allocation2 + $0x48] sm:$0xff] 0.0
          %355 = vst [vmem:[#allocation2 + $0x50] sm:$0xff] 0.0
          %356 = vst [vmem:[#allocation2 + $0x58] sm:$0xff] 0.0
          %357 = vst [vmem:[#allocation2 + $0x60] sm:$0xff] 0.0
          %358 = vst [vmem:[#allocation2 + $0x68] sm:$0xff] 0.0
          %359 = vst [vmem:[#allocation2 + $0x70] sm:$0xff] 0.0
          %360 = vst [vmem:[#allocation2 + $0x78] sm:$0xff] 0.0
        $region81: #{_mimo_gcn_forward.5} parent=72 // pred_fallthru
          _
        %v361 = vld [vmem:[#allocation2] sm:$0xff]
        %v362 = vld [vmem:[#allocation2 + $0x8] sm:$0xff]
        %v363 = vld [vmem:[#allocation2 + $0x10] sm:$0xff]
        %v364 = vld [vmem:[#allocation2 + $0x18] sm:$0xff]
        %v365 = vld [vmem:[#allocation2 + $0x20] sm:$0xff]
        %v366 = vld [vmem:[#allocation2 + $0x28] sm:$0xff]
        %v367 = vld [vmem:[#allocation2 + $0x30] sm:$0xff]
        %v368 = vld [vmem:[#allocation2 + $0x38] sm:$0xff]
        %v369 = vld [vmem:[#allocation2 + $0x40] sm:$0xff]
        %v370 = vld [vmem:[#allocation2 + $0x48] sm:$0xff]
        %v371 = vld [vmem:[#allocation2 + $0x50] sm:$0xff]
        %v372 = vld [vmem:[#allocation2 + $0x58] sm:$0xff]
        %v373 = vld [vmem:[#allocation2 + $0x60] sm:$0xff]
        %v374 = vld [vmem:[#allocation2 + $0x68] sm:$0xff]
        %v375 = vld [vmem:[#allocation2 + $0x70] sm:$0xff]
        %v376 = vld [vmem:[#allocation2 + $0x78] sm:$0xff]
        %v377 = vld [vmem:[%s299] sm:$0xf]
        %v378 = vld [vmem:[%s299 + $0x4] sm:$0xf]
        %v379 = vld [vmem:[%s299 + $0x8] sm:$0xf]
        %v380 = vld [vmem:[%s299 + $0xc] sm:$0xf]
        %v381 = vld [vmem:[%s299 + $0x10] sm:$0xf]
        %v382 = vld [vmem:[%s299 + $0x14] sm:$0xf]
        %v383 = vld [vmem:[%s299 + $0x18] sm:$0xf]
        %v384 = vld [vmem:[%s299 + $0x1c] sm:$0xf]
        %v385 = vld [vmem:[%s299 + $0x20] sm:$0xf]
        %v386 = vld [vmem:[%s299 + $0x24] sm:$0xf]
        %v387 = vld [vmem:[%s299 + $0x28] sm:$0xf]
        %v388 = vld [vmem:[%s299 + $0x2c] sm:$0xf]
        %v389 = vld [vmem:[%s299 + $0x30] sm:$0xf]
        %v390 = vld [vmem:[%s299 + $0x34] sm:$0xf]
        %v391 = vld [vmem:[%s299 + $0x38] sm:$0xf]
        %v392 = vld [vmem:[%s299 + $0x3c] sm:$0xf]
        %v393 = vld [vmem:[%s332] sm:$0xf]
        %v394 = vld [vmem:[%s332 + $0x4] sm:$0xf]
        %v395 = vld [vmem:[%s332 + $0x8] sm:$0xf]
        %v396 = vld [vmem:[%s332 + $0xc] sm:$0xf]
        %v397 = vld [vmem:[%s332 + $0x10] sm:$0xf]
        %v398 = vld [vmem:[%s332 + $0x14] sm:$0xf]
        %v399 = vld [vmem:[%s332 + $0x18] sm:$0xf]
        %v400 = vld [vmem:[%s332 + $0x1c] sm:$0xf]
        %v401 = vld [vmem:[%s332 + $0x20] sm:$0xf]
        %v402 = vld [vmem:[%s332 + $0x24] sm:$0xf]
        %v403 = vld [vmem:[%s332 + $0x28] sm:$0xf]
        %v404 = vld [vmem:[%s332 + $0x2c] sm:$0xf]
        %v405 = vld [vmem:[%s332 + $0x30] sm:$0xf]
        %v406 = vld [vmem:[%s332 + $0x34] sm:$0xf]
        %v407 = vld [vmem:[%s332 + $0x38] sm:$0xf]
        %v408 = vld [vmem:[%s332 + $0x3c] sm:$0xf]
        %v425 = vunpack.c.l.b16 %v377
        %v426 = vunpack.c.l.b16 %v378
        %v427 = vunpack.c.l.b16 %v379
        %v428 = vunpack.c.l.b16 %v380
        %v429 = vunpack.c.l.b16 %v381
        %v430 = vunpack.c.l.b16 %v382
        %v431 = vunpack.c.l.b16 %v383
        %v432 = vunpack.c.l.b16 %v384
        %v433 = vunpack.c.l.b16 %v385
        %v434 = vunpack.c.l.b16 %v386
        %v435 = vunpack.c.l.b16 %v387
        %v436 = vunpack.c.l.b16 %v388
        %v437 = vunpack.c.l.b16 %v389
        %v438 = vunpack.c.l.b16 %v390
        %v439 = vunpack.c.l.b16 %v391
        %v440 = vunpack.c.l.b16 %v392
        %v441 = vpack.c.b16 %v426, %v425
        %v442 = vpack.c.b16 %v428, %v427
        %v443 = vpack.c.b16 %v430, %v429
        %v444 = vpack.c.b16 %v432, %v431
        %v445 = vpack.c.b16 %v434, %v433
        %v446 = vpack.c.b16 %v436, %v435
        %v447 = vpack.c.b16 %v438, %v437
        %v448 = vpack.c.b16 %v440, %v439
        %v473 = vunpack.c.l.b16 %v393
        %v474 = vunpack.c.l.b16 %v394
        %v475 = vunpack.c.l.b16 %v395
        %v476 = vunpack.c.l.b16 %v396
        %v477 = vunpack.c.l.b16 %v397
        %v478 = vunpack.c.l.b16 %v398
        %v479 = vunpack.c.l.b16 %v399
        %v480 = vunpack.c.l.b16 %v400
        %v481 = vunpack.c.l.b16 %v401
        %v482 = vunpack.c.l.b16 %v402
        %v483 = vunpack.c.l.b16 %v403
        %v484 = vunpack.c.l.b16 %v404
        %v485 = vunpack.c.l.b16 %v405
        %v486 = vunpack.c.l.b16 %v406
        %v487 = vunpack.c.l.b16 %v407
        %v488 = vunpack.c.l.b16 %v408
        %v489 = vpack.c.b16 %v474, %v473
        %v490 = vpack.c.b16 %v476, %v475
        %v491 = vpack.c.b16 %v478, %v477
        %v492 = vpack.c.b16 %v480, %v479
        %v493 = vpack.c.b16 %v482, %v481
        %v494 = vpack.c.b16 %v484, %v483
        %v495 = vpack.c.b16 %v486, %v485
        %v496 = vpack.c.b16 %v488, %v487
        %505 = vmatprep.subr.bf16.mxu0 0
        %506 = vmatpush1.bf16.msra.mxu0 %v489
        %507 = vmatprep.subr.bf16.mxu0 0
        %508 = vmatpush1.bf16.msra.mxu0 %v490
        %509 = vmatprep.subr.bf16.mxu0 0
        %510 = vmatpush1.bf16.msra.mxu0 %v491
        %511 = vmatprep.subr.bf16.mxu0 0
        %512 = vmatpush1.bf16.msra.mxu0 %v492
        %513 = vmatprep.subr.bf16.mxu0 0
        %514 = vmatpush1.bf16.msra.mxu0 %v493
        %515 = vmatprep.subr.bf16.mxu0 0
        %516 = vmatpush1.bf16.msra.mxu0 %v494
        %517 = vmatprep.subr.bf16.mxu0 0
        %518 = vmatpush1.bf16.msra.mxu0 %v495
        %519 = vmatprep.subr.bf16.mxu0 0
        %520 = vmatpush1.bf16.msra.mxu0 %v496
        %521 = vmatprep.subr.bf16.mxu0 0
        %522 = vmatpush1.bf16.msra.mxu0 0
        %523 = vmatprep.subr.bf16.mxu0 0
        %524 = vmatpush1.bf16.msra.mxu0 0
        %525 = vmatprep.subr.bf16.mxu0 0
        %526 = vmatpush1.bf16.msra.mxu0 0
        %527 = vmatprep.subr.bf16.mxu0 0
        %528 = vmatpush1.bf16.msra.mxu0 0
        %529 = vmatprep.subr.bf16.mxu0 0
        %530 = vmatpush1.bf16.msra.mxu0 0
        %531 = vmatprep.subr.bf16.mxu0 0
        %532 = vmatpush1.bf16.msra.mxu0 0
        %533 = vmatprep.subr.bf16.mxu0 0
        %534 = vmatpush1.bf16.msra.mxu0 0
        %535 = vmatprep.subr.bf16.mxu0 0
        %536 = vmatpush1.bf16.msra.mxu0 0
        %537 = vmatprep.mubr.bf16.mxu0 0
        %538 = vmatmul.mubr.bf16.gmra.mrb[0].mxu0 %v441
        %v539 = vpop.f32.mrb[0].mxu0
        %v540 = vadd.f32 0.0, %v539
        %v541 = vpop.f32.mrb[0].mxu0
        %v542 = vpop.f32.mrb[0].mxu0
        %v543 = vadd.f32 0.0, %v542
        %v544 = vpop.f32.mrb[0].mxu0
        %545 = vmatprep.mubr.bf16.mxu0 0
        %546 = vmatmul.mubr.bf16.gmra.mrb[0].mxu0 %v442
        %v547 = vpop.f32.mrb[0].mxu0
        %v548 = vadd.f32 0.0, %v547
        %v549 = vpop.f32.mrb[0].mxu0
        %v550 = vpop.f32.mrb[0].mxu0
        %v551 = vadd.f32 0.0, %v550
        %v552 = vpop.f32.mrb[0].mxu0
        %553 = vmatprep.mubr.bf16.mxu0 0
        %554 = vmatmul.mubr.bf16.gmra.mrb[0].mxu0 %v443
        %v555 = vpop.f32.mrb[0].mxu0
        %v556 = vadd.f32 0.0, %v555
        %v557 = vpop.f32.mrb[0].mxu0
        %v558 = vpop.f32.mrb[0].mxu0
        %v559 = vadd.f32 0.0, %v558
        %v560 = vpop.f32.mrb[0].mxu0
        %561 = vmatprep.mubr.bf16.mxu0 0
        %562 = vmatmul.mubr.bf16.gmra.mrb[0].mxu0 %v444
        %v563 = vpop.f32.mrb[0].mxu0
        %v564 = vadd.f32 0.0, %v563
        %v565 = vpop.f32.mrb[0].mxu0
        %v566 = vpop.f32.mrb[0].mxu0
        %v567 = vadd.f32 0.0, %v566
        %v568 = vpop.f32.mrb[0].mxu0
        %569 = vmatprep.mubr.bf16.mxu0 0
        %570 = vmatmul.mubr.bf16.gmra.mrb[0].mxu0 %v445
        %v571 = vpop.f32.mrb[0].mxu0
        %v572 = vadd.f32 0.0, %v571
        %v573 = vpop.f32.mrb[0].mxu0
        %v574 = vpop.f32.mrb[0].mxu0
        %v575 = vadd.f32 0.0, %v574
        %v576 = vpop.f32.mrb[0].mxu0
        %577 = vmatprep.mubr.bf16.mxu0 0
        %578 = vmatmul.mubr.bf16.gmra.mrb[0].mxu0 %v446
        %v579 = vpop.f32.mrb[0].mxu0
        %v580 = vadd.f32 0.0, %v579
        %v581 = vpop.f32.mrb[0].mxu0
        %v582 = vpop.f32.mrb[0].mxu0
        %v583 = vadd.f32 0.0, %v582
        %v584 = vpop.f32.mrb[0].mxu0
        %585 = vmatprep.mubr.bf16.mxu0 0
        %586 = vmatmul.mubr.bf16.gmra.mrb[0].mxu0 %v447
        %v587 = vpop.f32.mrb[0].mxu0
        %v588 = vadd.f32 0.0, %v587
        %v589 = vpop.f32.mrb[0].mxu0
        %v590 = vpop.f32.mrb[0].mxu0
        %v591 = vadd.f32 0.0, %v590
        %v592 = vpop.f32.mrb[0].mxu0
        %593 = vmatprep.mubr.bf16.mxu0 0
        %594 = vmatmul.mubr.bf16.gmra.mrb[0].mxu0 %v448
        %v595 = vpop.f32.mrb[0].mxu0
        %v596 = vadd.f32 0.0, %v595
        %v597 = vpop.f32.mrb[0].mxu0
        %v598 = vpop.f32.mrb[0].mxu0
        %v599 = vadd.f32 0.0, %v598
        %v600 = vpop.f32.mrb[0].mxu0
        %601 = vdwg.mxu0
        %v602 = vadd.f32 %v361, %v540
        %v603 = vadd.f32 %v362, %v543
        %v604 = vadd.f32 %v363, %v548
        %v605 = vadd.f32 %v364, %v551
        %v606 = vadd.f32 %v365, %v556
        %v607 = vadd.f32 %v366, %v559
        %v608 = vadd.f32 %v367, %v564
        %v609 = vadd.f32 %v368, %v567
        %v610 = vadd.f32 %v369, %v572
        %v611 = vadd.f32 %v370, %v575
        %v612 = vadd.f32 %v371, %v580
        %v613 = vadd.f32 %v372, %v583
        %v614 = vadd.f32 %v373, %v588
        %v615 = vadd.f32 %v374, %v591
        %v616 = vadd.f32 %v375, %v596
        %v617 = vadd.f32 %v376, %v599
        %618 = vst [vmem:[#allocation2] sm:$0xff] %v602
        %619 = vst [vmem:[#allocation2 + $0x8] sm:$0xff] %v603
        %620 = vst [vmem:[#allocation2 + $0x10] sm:$0xff] %v604
        %621 = vst [vmem:[#allocation2 + $0x18] sm:$0xff] %v605
        %622 = vst [vmem:[#allocation2 + $0x20] sm:$0xff] %v606
        %623 = vst [vmem:[#allocation2 + $0x28] sm:$0xff] %v607
        %624 = vst [vmem:[#allocation2 + $0x30] sm:$0xff] %v608
        %625 = vst [vmem:[#allocation2 + $0x38] sm:$0xff] %v609
        %626 = vst [vmem:[#allocation2 + $0x40] sm:$0xff] %v610
        %627 = vst [vmem:[#allocation2 + $0x48] sm:$0xff] %v611
        %628 = vst [vmem:[#allocation2 + $0x50] sm:$0xff] %v612
        %629 = vst [vmem:[#allocation2 + $0x58] sm:$0xff] %v613
        %630 = vst [vmem:[#allocation2 + $0x60] sm:$0xff] %v614
        %631 = vst [vmem:[#allocation2 + $0x68] sm:$0xff] %v615
        %632 = vst [vmem:[#allocation2 + $0x70] sm:$0xff] %v616
        %633 = vst [vmem:[#allocation2 + $0x78] sm:$0xff] %v617
        %p634 = scmp.eq.s32.totalorder %s20, 1
        // Predicated region
        $region82: #{_mimo_gcn_forward.5} parent=72 // pred_check
          %p635 = pneg %p634
        $region83: #{_mimo_gcn_forward.5} parent=72 // pred_check_branch
          %637 = sbr.rel (%p635) target = $region85
        $region84: #{_mimo_gcn_forward.5} parent=72 // pred_region
          %v638 = vld [vmem:[#allocation2] sm:$0xff]
          %v639 = vld [vmem:[#allocation2 + $0x8] sm:$0xff]
          %v640 = vld [vmem:[#allocation2 + $0x10] sm:$0xff]
          %v641 = vld [vmem:[#allocation2 + $0x18] sm:$0xff]
          %v642 = vld [vmem:[#allocation2 + $0x20] sm:$0xff]
          %v643 = vld [vmem:[#allocation2 + $0x28] sm:$0xff]
          %v644 = vld [vmem:[#allocation2 + $0x30] sm:$0xff]
          %v645 = vld [vmem:[#allocation2 + $0x38] sm:$0xff]
          %v646 = vld [vmem:[#allocation2 + $0x40] sm:$0xff]
          %v647 = vld [vmem:[#allocation2 + $0x48] sm:$0xff]
          %v648 = vld [vmem:[#allocation2 + $0x50] sm:$0xff]
          %v649 = vld [vmem:[#allocation2 + $0x58] sm:$0xff]
          %v650 = vld [vmem:[#allocation2 + $0x60] sm:$0xff]
          %v651 = vld [vmem:[#allocation2 + $0x68] sm:$0xff]
          %v652 = vld [vmem:[#allocation2 + $0x70] sm:$0xff]
          %v653 = vld [vmem:[#allocation2 + $0x78] sm:$0xff]
          %v654 = vld [vmem:[%s2] sm:$0xf]
          %v655 = vld [vmem:[%s2 + $0x4] sm:$0xf]
          %v656 = vld [vmem:[%s2 + $0x8] sm:$0xf]
          %v657 = vld [vmem:[%s2 + $0xc] sm:$0xf]
          %v658 = vld [vmem:[%s2 + $0x10] sm:$0xf]
          %v659 = vld [vmem:[%s2 + $0x14] sm:$0xf]
          %v660 = vld [vmem:[%s2 + $0x18] sm:$0xf]
          %v661 = vld [vmem:[%s2 + $0x1c] sm:$0xf]
          %v662 = vld [vmem:[%s2 + $0x20] sm:$0xf]
          %v663 = vld [vmem:[%s2 + $0x24] sm:$0xf]
          %v664 = vld [vmem:[%s2 + $0x28] sm:$0xf]
          %v665 = vld [vmem:[%s2 + $0x2c] sm:$0xf]
          %v666 = vld [vmem:[%s2 + $0x30] sm:$0xf]
          %v667 = vld [vmem:[%s2 + $0x34] sm:$0xf]
          %v668 = vld [vmem:[%s2 + $0x38] sm:$0xf]
          %v669 = vld [vmem:[%s2 + $0x3c] sm:$0xf]
          %v670 = vunpack.c.l.bf16 %v654
          %v671 = vunpack.c.l.bf16 %v655
          %v672 = vunpack.c.l.bf16 %v656
          %v673 = vunpack.c.l.bf16 %v657
          %v674 = vunpack.c.l.bf16 %v658
          %v675 = vunpack.c.l.bf16 %v659
          %v676 = vunpack.c.l.bf16 %v660
          %v677 = vunpack.c.l.bf16 %v661
          %v678 = vunpack.c.l.bf16 %v662
          %v679 = vunpack.c.l.bf16 %v663
          %v680 = vunpack.c.l.bf16 %v664
          %v681 = vunpack.c.l.bf16 %v665
          %v682 = vunpack.c.l.bf16 %v666
          %v683 = vunpack.c.l.bf16 %v667
          %v684 = vunpack.c.l.bf16 %v668
          %v685 = vunpack.c.l.bf16 %v669
          %v686 = vld [vmem:[%s3] sm:$0x1]
          %v688 = vlaneseq
          %v689 = vshrl.u32 %v688, 7
          %v690 = vsub.s32 0, %v689
          %v691 = vrot.slane %v686, %v690
          %693 = vmatprep.subr.mxu0 0.0
          %694 = vmatpush1.msra.mxu0 %v670
          %695 = vmatprep.subr.mxu0 0.0
          %696 = vmatpush1.msra.mxu0 %v671
          %697 = vmatprep.subr.mxu0 0.0
          %698 = vmatpush1.msra.mxu0 %v672
          %699 = vmatprep.subr.mxu0 0.0
          %700 = vmatpush1.msra.mxu0 %v673
          %701 = vmatprep.subr.mxu0 0.0
          %702 = vmatpush1.msra.mxu0 %v674
          %703 = vmatprep.subr.mxu0 0.0
          %704 = vmatpush1.msra.mxu0 %v675
          %705 = vmatprep.subr.mxu0 0.0
          %706 = vmatpush1.msra.mxu0 %v676
          %707 = vmatprep.subr.mxu0 0.0
          %708 = vmatpush1.msra.mxu0 %v677
          %709 = vmatprep.subr.mxu0 0.0
          %710 = vmatpush1.msra.mxu0 %v678
          %711 = vmatprep.subr.mxu0 0.0
          %712 = vmatpush1.msra.mxu0 %v679
          %713 = vmatprep.subr.mxu0 0.0
          %714 = vmatpush1.msra.mxu0 %v680
          %715 = vmatprep.subr.mxu0 0.0
          %716 = vmatpush1.msra.mxu0 %v681
          %717 = vmatprep.subr.mxu0 0.0
          %718 = vmatpush1.msra.mxu0 %v682
          %719 = vmatprep.subr.mxu0 0.0
          %720 = vmatpush1.msra.mxu0 %v683
          %721 = vmatprep.subr.mxu0 0.0
          %722 = vmatpush1.msra.mxu0 %v684
          %723 = vmatprep.subr.mxu0 0.0
          %724 = vmatpush1.msra.mxu0 %v685
          %725 = vmatprep.subr.mxu0 0.0
          %726 = vmatpush1.msra.mxu0 0.0
          %727 = vmatprep.subr.mxu0 0.0
          %728 = vmatpush1.msra.mxu0 0.0
          %729 = vmatprep.subr.mxu0 0.0
          %730 = vmatpush1.msra.mxu0 0.0
          %731 = vmatprep.subr.mxu0 0.0
          %732 = vmatpush1.msra.mxu0 0.0
          %733 = vmatprep.subr.mxu0 0.0
          %734 = vmatpush1.msra.mxu0 0.0
          %735 = vmatprep.subr.mxu0 0.0
          %736 = vmatpush1.msra.mxu0 0.0
          %737 = vmatprep.subr.mxu0 0.0
          %738 = vmatpush1.msra.mxu0 0.0
          %739 = vmatprep.subr.mxu0 0.0
          %740 = vmatpush1.msra.mxu0 0.0
          %741 = vmatprep.subr.mxu0 0.0
          %742 = vmatpush1.msra.mxu0 0.0
          %743 = vmatprep.subr.mxu0 0.0
          %744 = vmatpush1.msra.mxu0 0.0
          %745 = vmatprep.subr.mxu0 0.0
          %746 = vmatpush1.msra.mxu0 0.0
          %747 = vmatprep.subr.mxu0 0.0
          %748 = vmatpush1.msra.mxu0 0.0
          %749 = vmatprep.subr.mxu0 0.0
          %750 = vmatpush1.msra.mxu0 0.0
          %751 = vmatprep.subr.mxu0 0.0
          %752 = vmatpush1.msra.mxu0 0.0
          %753 = vmatprep.subr.mxu0 0.0
          %754 = vmatpush1.msra.mxu0 0.0
          %755 = vmatprep.subr.mxu0 0.0
          %756 = vmatpush1.msra.mxu0 0.0
          %757 = vmatprep.mubr.f32.mxu0 0.0
          %758 = vmatmul.mubr.f32.gmra.mrb[0].mxu0 %v638
          %v759 = vpop.f32.mrb[0].mxu0
          %v760 = vadd.f32 %v691, %v759
          %v761 = vpop.f32.mrb[0].mxu0
          %762 = vmatprep.mubr.f32.mxu0 0.0
          %763 = vmatmul.mubr.f32.gmra.mrb[0].mxu0 %v639
          %v764 = vpop.f32.mrb[0].mxu0
          %v765 = vadd.f32 %v691, %v764
          %v766 = vpop.f32.mrb[0].mxu0
          %767 = vmatprep.mubr.f32.mxu0 0.0
          %768 = vmatmul.mubr.f32.gmra.mrb[0].mxu0 %v640
          %v769 = vpop.f32.mrb[0].mxu0
          %v770 = vadd.f32 %v691, %v769
          %v771 = vpop.f32.mrb[0].mxu0
          %772 = vmatprep.mubr.f32.mxu0 0.0
          %773 = vmatmul.mubr.f32.gmra.mrb[0].mxu0 %v641
          %v774 = vpop.f32.mrb[0].mxu0
          %v775 = vadd.f32 %v691, %v774
          %v776 = vpop.f32.mrb[0].mxu0
          %777 = vmatprep.mubr.f32.mxu0 0.0
          %778 = vmatmul.mubr.f32.gmra.mrb[0].mxu0 %v642
          %v779 = vpop.f32.mrb[0].mxu0
          %v780 = vadd.f32 %v691, %v779
          %v781 = vpop.f32.mrb[0].mxu0
          %782 = vmatprep.mubr.f32.mxu0 0.0
          %783 = vmatmul.mubr.f32.gmra.mrb[0].mxu0 %v643
          %v784 = vpop.f32.mrb[0].mxu0
          %v785 = vadd.f32 %v691, %v784
          %v786 = vpop.f32.mrb[0].mxu0
          %787 = vmatprep.mubr.f32.mxu0 0.0
          %788 = vmatmul.mubr.f32.gmra.mrb[0].mxu0 %v644
          %v789 = vpop.f32.mrb[0].mxu0
          %v790 = vadd.f32 %v691, %v789
          %v791 = vpop.f32.mrb[0].mxu0
          %792 = vmatprep.mubr.f32.mxu0 0.0
          %793 = vmatmul.mubr.f32.gmra.mrb[0].mxu0 %v645
          %v794 = vpop.f32.mrb[0].mxu0
          %v795 = vadd.f32 %v691, %v794
          %v796 = vpop.f32.mrb[0].mxu0
          %797 = vmatprep.mubr.f32.mxu0 0.0
          %798 = vmatmul.mubr.f32.gmra.mrb[0].mxu0 %v646
          %v799 = vpop.f32.mrb[0].mxu0
          %v800 = vadd.f32 %v691, %v799
          %v801 = vpop.f32.mrb[0].mxu0
          %802 = vmatprep.mubr.f32.mxu0 0.0
          %803 = vmatmul.mubr.f32.gmra.mrb[0].mxu0 %v647
          %v804 = vpop.f32.mrb[0].mxu0
          %v805 = vadd.f32 %v691, %v804
          %v806 = vpop.f32.mrb[0].mxu0
          %807 = vmatprep.mubr.f32.mxu0 0.0
          %808 = vmatmul.mubr.f32.gmra.mrb[0].mxu0 %v648
          %v809 = vpop.f32.mrb[0].mxu0
          %v810 = vadd.f32 %v691, %v809
          %v811 = vpop.f32.mrb[0].mxu0
          %812 = vmatprep.mubr.f32.mxu0 0.0
          %813 = vmatmul.mubr.f32.gmra.mrb[0].mxu0 %v649
          %v814 = vpop.f32.mrb[0].mxu0
          %v815 = vadd.f32 %v691, %v814
          %v816 = vpop.f32.mrb[0].mxu0
          %817 = vmatprep.mubr.f32.mxu0 0.0
          %818 = vmatmul.mubr.f32.gmra.mrb[0].mxu0 %v650
          %v819 = vpop.f32.mrb[0].mxu0
          %v820 = vadd.f32 %v691, %v819
          %v821 = vpop.f32.mrb[0].mxu0
          %822 = vmatprep.mubr.f32.mxu0 0.0
          %823 = vmatmul.mubr.f32.gmra.mrb[0].mxu0 %v651
          %v824 = vpop.f32.mrb[0].mxu0
          %v825 = vadd.f32 %v691, %v824
          %v826 = vpop.f32.mrb[0].mxu0
          %827 = vmatprep.mubr.f32.mxu0 0.0
          %828 = vmatmul.mubr.f32.gmra.mrb[0].mxu0 %v652
          %v829 = vpop.f32.mrb[0].mxu0
          %v830 = vadd.f32 %v691, %v829
          %v831 = vpop.f32.mrb[0].mxu0
          %832 = vmatprep.mubr.f32.mxu0 0.0
          %833 = vmatmul.mubr.f32.gmra.mrb[0].mxu0 %v653
          %v834 = vpop.f32.mrb[0].mxu0
          %v835 = vadd.f32 %v691, %v834
          %v836 = vpop.f32.mrb[0].mxu0
          %837 = vdwg.mxu0
          %v838 = vmax.f32 %v760, 0.0
          %v839 = vmax.f32 %v765, 0.0
          %v840 = vmax.f32 %v770, 0.0
          %v841 = vmax.f32 %v775, 0.0
          %v842 = vmax.f32 %v780, 0.0
          %v843 = vmax.f32 %v785, 0.0
          %v844 = vmax.f32 %v790, 0.0
          %v845 = vmax.f32 %v795, 0.0
          %v846 = vmax.f32 %v800, 0.0
          %v847 = vmax.f32 %v805, 0.0
          %v848 = vmax.f32 %v810, 0.0
          %v849 = vmax.f32 %v815, 0.0
          %v850 = vmax.f32 %v820, 0.0
          %v851 = vmax.f32 %v825, 0.0
          %v852 = vmax.f32 %v830, 0.0
          %v853 = vmax.f32 %v835, 0.0
          %v854 = vpack.c.bf16 %v839, %v838
          %v855 = vpack.c.bf16 %v841, %v840
          %v856 = vpack.c.bf16 %v843, %v842
          %v857 = vpack.c.bf16 %v845, %v844
          %v858 = vpack.c.bf16 %v847, %v846
          %v859 = vpack.c.bf16 %v849, %v848
          %v860 = vpack.c.bf16 %v851, %v850
          %v861 = vpack.c.bf16 %v853, %v852
          %v870 = vunpack.c.l.b16 %v854
          %v871 = vunpack.c.h.b16 %v854
          %v872 = vunpack.c.l.b16 %v855
          %v873 = vunpack.c.h.b16 %v855
          %v874 = vunpack.c.l.b16 %v856
          %v875 = vunpack.c.h.b16 %v856
          %v876 = vunpack.c.l.b16 %v857
          %v877 = vunpack.c.h.b16 %v857
          %v878 = vunpack.c.l.b16 %v858
          %v879 = vunpack.c.h.b16 %v858
          %v880 = vunpack.c.l.b16 %v859
          %v881 = vunpack.c.h.b16 %v859
          %v882 = vunpack.c.l.b16 %v860
          %v883 = vunpack.c.h.b16 %v860
          %v884 = vunpack.c.l.b16 %v861
          %v885 = vunpack.c.h.b16 %v861
          %v886 = vpack.c.b16 %v870, %v870
          %v887 = vpack.c.b16 %v871, %v871
          %v888 = vpack.c.b16 %v872, %v872
          %v889 = vpack.c.b16 %v873, %v873
          %v890 = vpack.c.b16 %v874, %v874
          %v891 = vpack.c.b16 %v875, %v875
          %v892 = vpack.c.b16 %v876, %v876
          %v893 = vpack.c.b16 %v877, %v877
          %v894 = vpack.c.b16 %v878, %v878
          %v895 = vpack.c.b16 %v879, %v879
          %v896 = vpack.c.b16 %v880, %v880
          %v897 = vpack.c.b16 %v881, %v881
          %v898 = vpack.c.b16 %v882, %v882
          %v899 = vpack.c.b16 %v883, %v883
          %v900 = vpack.c.b16 %v884, %v884
          %v901 = vpack.c.b16 %v885, %v885
          %918 = vst [vmem:[%s338] sm:$0xf] %v886
          %919 = vst [vmem:[%s338 + $0x4] sm:$0xf] %v887
          %920 = vst [vmem:[%s338 + $0x8] sm:$0xf] %v888
          %921 = vst [vmem:[%s338 + $0xc] sm:$0xf] %v889
          %922 = vst [vmem:[%s338 + $0x10] sm:$0xf] %v890
          %923 = vst [vmem:[%s338 + $0x14] sm:$0xf] %v891
          %924 = vst [vmem:[%s338 + $0x18] sm:$0xf] %v892
          %925 = vst [vmem:[%s338 + $0x1c] sm:$0xf] %v893
          %926 = vst [vmem:[%s338 + $0x20] sm:$0xf] %v894
          %927 = vst [vmem:[%s338 + $0x24] sm:$0xf] %v895
          %928 = vst [vmem:[%s338 + $0x28] sm:$0xf] %v896
          %929 = vst [vmem:[%s338 + $0x2c] sm:$0xf] %v897
          %930 = vst [vmem:[%s338 + $0x30] sm:$0xf] %v898
          %931 = vst [vmem:[%s338 + $0x34] sm:$0xf] %v899
          %932 = vst [vmem:[%s338 + $0x38] sm:$0xf] %v900
          %933 = vst [vmem:[%s338 + $0x3c] sm:$0xf] %v901
        $region85: #{_mimo_gcn_forward.5} parent=72 // pred_fallthru
          _
        %s934 = smul.u32 16, %s19
        %p935 = scmp.lt.s32.totalorder %s934, 31
        %s936 = scalar_select %p935, %s934, 31
        %s937 = smul.addr %s936, 4
        %s938 = scalar_lea.vmem %s4, %s937
        // Predicated region
        $region86: #{_mimo_gcn_forward.5} parent=72 // pred_check
          %p939 = pneg %p141
        $region87: #{_mimo_gcn_forward.5} parent=72 // pred_check_branch
          %941 = sbr.rel (%p939) target = $region89
        $region88: #{_mimo_gcn_forward.5} parent=72 // pred_region
          %s942 = smul.u32 16, %s19
        $region89: #{_mimo_gcn_forward.5} parent=72 // pred_fallthru
          _
      $region73: #{_mimo_gcn_forward.5} parent=5 // pred_fallthru
        _
      %p943 = scmp.le.s32.totalorder 2, %s10
      // Predicated region
      $region90: #{_mimo_gcn_forward.5} parent=5 // pred_check
        %p944 = pneg %p943
      $region91: #{_mimo_gcn_forward.5} parent=5 // pred_check_branch
        %946 = sbr.rel (%p944) target = $region93
      $region92: #{_mimo_gcn_forward.5} parent=5 // pred_region
        %s947 = ssub.s32 %s10, 2
        // Predicated region
        $region94: #{_mimo_gcn_forward.5} parent=92 // pred_check
          %p948 = pneg %p147
        $region95: #{_mimo_gcn_forward.5} parent=92 // pred_check_branch
          %950 = sbr.rel (%p948) target = $region97
        $region96: #{_mimo_gcn_forward.5} parent=92 // pred_region
          %s951 = smul.u32 16, %s21
          %p952 = scmp.lt.s32.totalorder %s951, 31
          %s953 = scalar_select %p952, %s951, 31
          %s954 = smul.addr %s953, 4
          %s955 = scalar_lea.vmem %s4, %s954
        $region97: #{_mimo_gcn_forward.5} parent=92 // pred_fallthru
          _
      $region93: #{_mimo_gcn_forward.5} parent=5 // pred_fallthru
        _
    $region6: #{_mimo_gcn_forward.5} parent=1 // loop_footer
      %s14 = sadd.s32 1, %s10
    $region7: #{_mimo_gcn_forward.5} parent=1 // loop_footer_branch
      %9 = sbr.rel target = $region3
    $region8: #{_mimo_gcn_forward.5} parent=1 // loop_exit
      _

// kernel: _mimo_gcn_forward.4
$region0: #{_mimo_gcn_forward.4}
  #allocation0 [shape = 'u32[]', space=smem, size = 0x4, offset = 0x4, fixed_abs, tag = 'smem constant byte address 0x4 - core index']
  #allocation1 [shape = 'u32[144,128]{1,0:T(1,128)}', space=vmem, size = 0x12000, scoped, tag = 'internal scratch']
  #allocation2 [shape = 'f32[128,8]{1,0:T(8,128)}', space=vmem, size = 0x10000, scoped, tag = 'scratch operand']
  %s0 = inlined_call_operand.vmem [shape: bf16[256,256], index: 0, kind: input, shape index: {}]
  %s1 = inlined_call_operand.vmem [shape: bf16[256,8], index: 1, kind: input, shape index: {}]
  %s2 = inlined_call_operand.vmem [shape: bf16[2,8,128], index: 2, kind: input, shape index: {}]
  %s3 = inlined_call_operand.vmem [shape: f32[2,1,128], index: 3, kind: input, shape index: {}]
  %s4 = inlined_call_operand.vmem [shape: bf16[256,128], index: 4, kind: output, shape index: {}]
  %s5 = sld [smem:[#allocation0]]
  $region98: #{_mimo_gcn_forward.4} parent=0
    _
  %s7 = ssub.s32 1, %s5
  %s8 = scalar_select 0, %s7, %s5
  $region1: #{_mimo_gcn_forward.4} parent=0
    #allocation3 [shape = 'u8[65536]{0}', space=vmem, size = 0x10000, scoped, tag = 'input window, operand 0']
    loop: start=0, step=1, limit=6
    $region2: #{_mimo_gcn_forward.4} parent=1 // loop_pre_header
      _
    $region3: #{_mimo_gcn_forward.4} parent=1 // loop_header
      %s10 = sphi 0, %s14
      %p11 = scmp.ge.s32.totalorder %s10, 6
      %s17 = sphi 0, %s29
      %s18 = sphi 0, %s25
      %s19 = sphi 0, %s17
      %s20 = sphi 0, %s18
      %s21 = sphi 0, %s19
      %s22 = sphi 0, %s20
      %s34 = sphi 0, %s36
      %s37 = sphi 0, %s34
      %s38 = sphi 0, %s37
      %s54 = sphi 0, %s38
      %s60 = sphi 0, %s62
      %s63 = sphi 0, %s60
      %s64 = sphi 0, %s63
      %s80 = sphi 0, %s64
      %s90 = sphi 0, %s92
      %s93 = sphi 0, %s90
      %s94 = sphi 0, %s93
      %s110 = sphi 0, %s94
      %s120 = sphi 0, %s122
      %s123 = sphi 0, %s120
      %s124 = sphi 0, %s123
      %s140 = sphi 0, %s124
      %s146 = sphi 0, %s148
      %s149 = sphi 0, %s146
      %s150 = sphi 0, %s149
      %s166 = sphi 0, %s150
    $region4: #{_mimo_gcn_forward.4} parent=1 // loop_header_branch
      %13 = sbr.rel (%p11) target = $region8
    $region5: #{_mimo_gcn_forward.4} parent=1 // loop_body
      %s15 = ssub.s32 %s10, 1
      %s16 = ssub.s32 %s10, 2
      %s23 = sadd.s32 1, %s18
      %p24 = scmp.ge.s32.totalorder %s23, 2
      %s25 = scalar_select %p24, 0, %s23
      %s26 = sadd.s32 1, %s17
      %s27 = scalar_select %p24, %s26, %s17
      %p28 = scmp.ge.s32.totalorder %s27, 2
      %s29 = scalar_select %p28, 0, %s27
      %s30 = ssub.s32 %s17, %s29
      %s31 = ssub.s32 %s18, %s25
      %s32 = sor.u32 %s30, %s31
      %p33 = scmp.eq.s32.totalorder %s32, 0
      %s35 = sadd.s32 %s34, 1
      %s36 = scalar_select %p33, %s34, %s35
      %p39 = pneg %p33
      %p40 = scmp.eq.s32.totalorder %s10, 3
      %p41 = por %p39, %p40
      %p42 = scmp.ne.s32.totalorder %s34, %s37
      %p43 = scmp.eq.s32.totalorder %s10, 0
      %p44 = por %p42, %p43
      %p45 = scmp.ne.s32.totalorder %s34, %s37
      %p46 = scmp.eq.s32.totalorder %s15, 3
      %p47 = por %p45, %p46
      %p48 = scmp.ne.s32.totalorder %s37, %s38
      %p49 = scmp.eq.s32.totalorder %s15, 0
      %p50 = por %p48, %p49
      %p51 = scmp.ne.s32.totalorder %s37, %s38
      %p52 = scmp.eq.s32.totalorder %s16, 3
      %p53 = por %p51, %p52
      %p55 = scmp.ne.s32.totalorder %s38, %s54
      %p56 = scmp.eq.s32.totalorder %s16, 0
      %p57 = por %p55, %p56
      %s58 = ssub.s32 %s18, %s25
      %p59 = scmp.eq.s32.totalorder %s58, 0
      %s61 = sadd.s32 %s60, 1
      %s62 = scalar_select %p59, %s60, %s61
      %p65 = pneg %p59
      %p66 = scmp.eq.s32.totalorder %s10, 3
      %p67 = por %p65, %p66
      %p68 = scmp.ne.s32.totalorder %s60, %s63
      %p69 = scmp.eq.s32.totalorder %s10, 0
      %p70 = por %p68, %p69
      %p71 = scmp.ne.s32.totalorder %s60, %s63
      %p72 = scmp.eq.s32.totalorder %s15, 3
      %p73 = por %p71, %p72
      %p74 = scmp.ne.s32.totalorder %s63, %s64
      %p75 = scmp.eq.s32.totalorder %s15, 0
      %p76 = por %p74, %p75
      %p77 = scmp.ne.s32.totalorder %s63, %s64
      %p78 = scmp.eq.s32.totalorder %s16, 3
      %p79 = por %p77, %p78
      %p81 = scmp.ne.s32.totalorder %s64, %s80
      %p82 = scmp.eq.s32.totalorder %s16, 0
      %p83 = por %p81, %p82
      %p84 = scmp.ge.s32.totalorder %s17, 1
      %s85 = scalar_select %p84, 1, 0
      %p86 = scmp.ge.s32.totalorder %s29, 1
      %s87 = scalar_select %p86, 1, 0
      %s88 = ssub.s32 %s85, %s87
      %p89 = scmp.eq.s32.totalorder %s88, 0
      %s91 = sadd.s32 %s90, 1
      %s92 = scalar_select %p89, %s90, %s91
      %p95 = pneg %p89
      %p96 = scmp.eq.s32.totalorder %s10, 3
      %p97 = por %p95, %p96
      %p98 = scmp.ne.s32.totalorder %s90, %s93
      %p99 = scmp.eq.s32.totalorder %s10, 0
      %p100 = por %p98, %p99
      %p101 = scmp.ne.s32.totalorder %s90, %s93
      %p102 = scmp.eq.s32.totalorder %s15, 3
      %p103 = por %p101, %p102
      %p104 = scmp.ne.s32.totalorder %s93, %s94
      %p105 = scmp.eq.s32.totalorder %s15, 0
      %p106 = por %p104, %p105
      %p107 = scmp.ne.s32.totalorder %s93, %s94
      %p108 = scmp.eq.s32.totalorder %s16, 3
      %p109 = por %p107, %p108
      %p111 = scmp.ne.s32.totalorder %s94, %s110
      %p112 = scmp.eq.s32.totalorder %s16, 0
      %p113 = por %p111, %p112
      %p114 = scmp.ge.s32.totalorder %s17, 1
      %s115 = scalar_select %p114, 1, 0
      %p116 = scmp.ge.s32.totalorder %s29, 1
      %s117 = scalar_select %p116, 1, 0
      %s118 = ssub.s32 %s115, %s117
      %p119 = scmp.eq.s32.totalorder %s118, 0
      %s121 = sadd.s32 %s120, 1
      %s122 = scalar_select %p119, %s120, %s121
      %p125 = pneg %p119
      %p126 = scmp.eq.s32.totalorder %s10, 3
      %p127 = por %p125, %p126
      %p128 = scmp.ne.s32.totalorder %s120, %s123
      %p129 = scmp.eq.s32.totalorder %s10, 0
      %p130 = por %p128, %p129
      %p131 = scmp.ne.s32.totalorder %s120, %s123
      %p132 = scmp.eq.s32.totalorder %s15, 3
      %p133 = por %p131, %p132
      %p134 = scmp.ne.s32.totalorder %s123, %s124
      %p135 = scmp.eq.s32.totalorder %s15, 0
      %p136 = por %p134, %p135
      %p137 = scmp.ne.s32.totalorder %s123, %s124
      %p138 = scmp.eq.s32.totalorder %s16, 3
      %p139 = por %p137, %p138
      %p141 = scmp.ne.s32.totalorder %s124, %s140
      %p142 = scmp.eq.s32.totalorder %s16, 0
      %p143 = por %p141, %p142
      %s144 = ssub.s32 %s17, %s29
      %p145 = scmp.eq.s32.totalorder %s144, 0
      %s147 = sadd.s32 %s146, 1
      %s148 = scalar_select %p145, %s146, %s147
      %p151 = pneg %p145
      %p152 = scmp.eq.s32.totalorder %s10, 3
      %p153 = por %p151, %p152
      %p154 = scmp.ne.s32.totalorder %s146, %s149
      %p155 = scmp.eq.s32.totalorder %s10, 0
      %p156 = por %p154, %p155
      %p157 = scmp.ne.s32.totalorder %s146, %s149
      %p158 = scmp.eq.s32.totalorder %s15, 3
      %p159 = por %p157, %p158
      %p160 = scmp.ne.s32.totalorder %s149, %s150
      %p161 = scmp.eq.s32.totalorder %s15, 0
      %p162 = por %p160, %p161
      %p163 = scmp.ne.s32.totalorder %s149, %s150
      %p164 = scmp.eq.s32.totalorder %s16, 3
      %p165 = por %p163, %p164
      %p167 = scmp.ne.s32.totalorder %s150, %s166
      %p168 = scmp.eq.s32.totalorder %s16, 0
      %p169 = por %p167, %p168
      %p170 = scmp.le.s32.totalorder 1, %s10
      %p171 = scmp.lt.s32.totalorder %s10, 5
      %p172 = pnand %p170, %p171
      %p173 = pneg %p172
      // Predicated region
      $region9: #{_mimo_gcn_forward.4} parent=5 // pred_check
        _
      $region10: #{_mimo_gcn_forward.4} parent=5 // pred_check_branch
        %175 = sbr.rel (%p172) target = $region12
      $region11: #{_mimo_gcn_forward.4} parent=5 // pred_region
        %s176 = ssub.s32 %s10, 1
      $region12: #{_mimo_gcn_forward.4} parent=5 // pred_fallthru
        _
      %p177 = scmp.lt.s32.totalorder %s10, 4
      // Predicated region
      $region13: #{_mimo_gcn_forward.4} parent=5 // pred_check
        %p178 = pneg %p177
      $region14: #{_mimo_gcn_forward.4} parent=5 // pred_check_branch
        %180 = sbr.rel (%p178) target = $region16
      $region15: #{_mimo_gcn_forward.4} parent=5 // pred_region
        // Predicated region
        $region17: #{_mimo_gcn_forward.4} parent=15 // pred_check
          %p181 = pneg %p44
        $region18: #{_mimo_gcn_forward.4} parent=15 // pred_check_branch
          %183 = sbr.rel (%p181) target = $region20
        $region19: #{_mimo_gcn_forward.4} parent=15 // pred_region
          %s184 = sand.u32 %s34, 1
          %s185 = sand.u32 %s34, 1
          %s186 = smul.addr %s185, 64
          %s187 = scalar_lea.vmem [#allocation3], %s186
          %s188 = smul.u32 16, %s17
          %s189 = smul.addr %s188, 2
          %s190 = sadd.s32 %s18, %s189
          %s191 = smul.addr %s190, 4
          %s192 = scalar_lea.vmem %s0, %s191
          // Predicated region
          $region21: #{_mimo_gcn_forward.4} parent=19 // pred_check
            _
          $region22: #{_mimo_gcn_forward.4} parent=19 // pred_check_branch
            %194 = sbr.rel (0) target = $region24
          $region23: #{_mimo_gcn_forward.4} parent=19 // pred_region
            // Predicated region
            $region25: #{_mimo_gcn_forward.4} parent=23 // pred_check
              _
            $region26: #{_mimo_gcn_forward.4} parent=23 // pred_check_branch
              %196 = sbr.rel target = $region28
            $region27: #{_mimo_gcn_forward.4} parent=23 // pred_region
              // Predicated region
              $region40: #{_mimo_gcn_forward.4} parent=27 // pred_check
                _
              $region41: #{_mimo_gcn_forward.4} parent=27 // pred_check_branch
                %241 = sbr.rel (0) target = $region43
              $region42: #{_mimo_gcn_forward.4} parent=27 // pred_region
                loop: start=0, step=1, limit=1
                $region44: #{_mimo_gcn_forward.4} parent=42 // loop_pre_header
                  _
                $region45: #{_mimo_gcn_forward.4} parent=42 // loop_header
                  %s243 = sphi 0, %s247
                  %p244 = scmp.ge.s32.totalorder %s243, 1
                  %s248 = sphi %s192, %s192
                  %s249 = sphi %s187, %s187
                $region46: #{_mimo_gcn_forward.4} parent=42 // loop_header_branch
                  %246 = sbr.rel (%p244) target = $region50
                $region47: #{_mimo_gcn_forward.4} parent=42 // loop_body
                  _
                $region48: #{_mimo_gcn_forward.4} parent=42 // loop_footer
                  %s247 = sadd.s32 1, %s243
                $region49: #{_mimo_gcn_forward.4} parent=42 // loop_footer_branch
                  %242 = sbr.rel target = $region45
                $region50: #{_mimo_gcn_forward.4} parent=42 // loop_exit
                  _
                loop: start=0, step=1, limit=1
                $region51: #{_mimo_gcn_forward.4} parent=42 // loop_pre_header
                  _
                $region52: #{_mimo_gcn_forward.4} parent=42 // loop_header
                  %s252 = sphi 0, %s256
                  %p253 = scmp.ge.s32.totalorder %s252, 1
                  %s257 = sphi %s192, %s192
                  %s258 = sphi %s187, %s187
                $region53: #{_mimo_gcn_forward.4} parent=42 // loop_header_branch
                  %255 = sbr.rel (%p253) target = $region57
                $region54: #{_mimo_gcn_forward.4} parent=42 // loop_body
                  %v259 = vld [vmem:[%s257] sm:$0xf]
                  %260 = vst [vmem:[%s258] sm:$0xf] %v259
                  %v261 = vld [vmem:[%s257 + $0x8] sm:$0xf]
                  %262 = vst [vmem:[%s258 + $0x4] sm:$0xf] %v261
                  %v263 = vld [vmem:[%s257 + $0x10] sm:$0xf]
                  %264 = vst [vmem:[%s258 + $0x8] sm:$0xf] %v263
                  %v265 = vld [vmem:[%s257 + $0x18] sm:$0xf]
                  %266 = vst [vmem:[%s258 + $0xc] sm:$0xf] %v265
                  %v267 = vld [vmem:[%s257 + $0x20] sm:$0xf]
                  %268 = vst [vmem:[%s258 + $0x10] sm:$0xf] %v267
                  %v269 = vld [vmem:[%s257 + $0x28] sm:$0xf]
                  %270 = vst [vmem:[%s258 + $0x14] sm:$0xf] %v269
                  %v271 = vld [vmem:[%s257 + $0x30] sm:$0xf]
                  %272 = vst [vmem:[%s258 + $0x18] sm:$0xf] %v271
                  %v273 = vld [vmem:[%s257 + $0x38] sm:$0xf]
                  %274 = vst [vmem:[%s258 + $0x1c] sm:$0xf] %v273
                  %v275 = vld [vmem:[%s257 + $0x40] sm:$0xf]
                  %276 = vst [vmem:[%s258 + $0x20] sm:$0xf] %v275
                  %v277 = vld [vmem:[%s257 + $0x48] sm:$0xf]
                  %278 = vst [vmem:[%s258 + $0x24] sm:$0xf] %v277
                  %v279 = vld [vmem:[%s257 + $0x50] sm:$0xf]
                  %280 = vst [vmem:[%s258 + $0x28] sm:$0xf] %v279
                  %v281 = vld [vmem:[%s257 + $0x58] sm:$0xf]
                  %282 = vst [vmem:[%s258 + $0x2c] sm:$0xf] %v281
                  %v283 = vld [vmem:[%s257 + $0x60] sm:$0xf]
                  %284 = vst [vmem:[%s258 + $0x30] sm:$0xf] %v283
                  %v285 = vld [vmem:[%s257 + $0x68] sm:$0xf]
                  %286 = vst [vmem:[%s258 + $0x34] sm:$0xf] %v285
                  %v287 = vld [vmem:[%s257 + $0x70] sm:$0xf]
                  %288 = vst [vmem:[%s258 + $0x38] sm:$0xf] %v287
                  %v289 = vld [vmem:[%s257 + $0x78] sm:$0xf]
                  %290 = vst [vmem:[%s258 + $0x3c] sm:$0xf] %v289
                $region55: #{_mimo_gcn_forward.4} parent=42 // loop_footer
                  %s256 = sadd.s32 1, %s252
                $region56: #{_mimo_gcn_forward.4} parent=42 // loop_footer_branch
                  %251 = sbr.rel target = $region52
                $region57: #{_mimo_gcn_forward.4} parent=42 // loop_exit
                  _
              $region43: #{_mimo_gcn_forward.4} parent=27 // pred_fallthru
                _
            $region28: #{_mimo_gcn_forward.4} parent=23 // pred_fallthru
              _
            // Predicated region
            $region29: #{_mimo_gcn_forward.4} parent=23 // pred_check
              _
            $region30: #{_mimo_gcn_forward.4} parent=23 // pred_check_branch
              %198 = sbr.rel (0) target = $region32
            $region31: #{_mimo_gcn_forward.4} parent=23 // pred_region
              loop: start=0, step=1, limit=1
              $region33: #{_mimo_gcn_forward.4} parent=31 // loop_pre_header
                _
              $region34: #{_mimo_gcn_forward.4} parent=31 // loop_header
                %s201 = sphi 0, %s205
                %p202 = scmp.ge.s32.totalorder %s201, 1
                %s206 = sphi %s192, %s192
                %s207 = sphi %s187, %s187
              $region35: #{_mimo_gcn_forward.4} parent=31 // loop_header_branch
                %204 = sbr.rel (%p202) target = $region39
              $region36: #{_mimo_gcn_forward.4} parent=31 // loop_body
                %v208 = vld [vmem:[%s206] sm:$0xf]
                %209 = vst [vmem:[%s207] sm:$0xf] %v208
                %v210 = vld [vmem:[%s206 + $0x8] sm:$0xf]
                %211 = vst [vmem:[%s207 + $0x4] sm:$0xf] %v210
                %v212 = vld [vmem:[%s206 + $0x10] sm:$0xf]
                %213 = vst [vmem:[%s207 + $0x8] sm:$0xf] %v212
                %v214 = vld [vmem:[%s206 + $0x18] sm:$0xf]
                %215 = vst [vmem:[%s207 + $0xc] sm:$0xf] %v214
                %v216 = vld [vmem:[%s206 + $0x20] sm:$0xf]
                %217 = vst [vmem:[%s207 + $0x10] sm:$0xf] %v216
                %v218 = vld [vmem:[%s206 + $0x28] sm:$0xf]
                %219 = vst [vmem:[%s207 + $0x14] sm:$0xf] %v218
                %v220 = vld [vmem:[%s206 + $0x30] sm:$0xf]
                %221 = vst [vmem:[%s207 + $0x18] sm:$0xf] %v220
                %v222 = vld [vmem:[%s206 + $0x38] sm:$0xf]
                %223 = vst [vmem:[%s207 + $0x1c] sm:$0xf] %v222
                %v224 = vld [vmem:[%s206 + $0x40] sm:$0xf]
                %225 = vst [vmem:[%s207 + $0x20] sm:$0xf] %v224
                %v226 = vld [vmem:[%s206 + $0x48] sm:$0xf]
                %227 = vst [vmem:[%s207 + $0x24] sm:$0xf] %v226
                %v228 = vld [vmem:[%s206 + $0x50] sm:$0xf]
                %229 = vst [vmem:[%s207 + $0x28] sm:$0xf] %v228
                %v230 = vld [vmem:[%s206 + $0x58] sm:$0xf]
                %231 = vst [vmem:[%s207 + $0x2c] sm:$0xf] %v230
                %v232 = vld [vmem:[%s206 + $0x60] sm:$0xf]
                %233 = vst [vmem:[%s207 + $0x30] sm:$0xf] %v232
                %v234 = vld [vmem:[%s206 + $0x68] sm:$0xf]
                %235 = vst [vmem:[%s207 + $0x34] sm:$0xf] %v234
                %v236 = vld [vmem:[%s206 + $0x70] sm:$0xf]
                %237 = vst [vmem:[%s207 + $0x38] sm:$0xf] %v236
                %v238 = vld [vmem:[%s206 + $0x78] sm:$0xf]
                %239 = vst [vmem:[%s207 + $0x3c] sm:$0xf] %v238
              $region37: #{_mimo_gcn_forward.4} parent=31 // loop_footer
                %s205 = sadd.s32 1, %s201
              $region38: #{_mimo_gcn_forward.4} parent=31 // loop_footer_branch
                %200 = sbr.rel target = $region34
              $region39: #{_mimo_gcn_forward.4} parent=31 // loop_exit
                _
            $region32: #{_mimo_gcn_forward.4} parent=23 // pred_fallthru
              _
          $region24: #{_mimo_gcn_forward.4} parent=19 // pred_fallthru
            _
          %291 = vnop
        $region20: #{_mimo_gcn_forward.4} parent=15 // pred_fallthru
          _
        // Predicated region
        $region58: #{_mimo_gcn_forward.4} parent=15 // pred_check
          %p292 = pneg %p70
        $region59: #{_mimo_gcn_forward.4} parent=15 // pred_check_branch
          %294 = sbr.rel (%p292) target = $region61
        $region60: #{_mimo_gcn_forward.4} parent=15 // pred_region
          %s295 = smul.u32 16, %s18
          %p296 = scmp.lt.s32.totalorder %s295, 31
          %s297 = scalar_select %p296, %s295, 31
          %s298 = smul.addr %s297, 4
          %s299 = scalar_lea.vmem %s1, %s298
          %s300 = smul.u32 16, %s18
        $region61: #{_mimo_gcn_forward.4} parent=15 // pred_fallthru
          _
        // Predicated region
        $region62: #{_mimo_gcn_forward.4} parent=15 // pred_check
          %p301 = pneg %p100
        $region63: #{_mimo_gcn_forward.4} parent=15 // pred_check_branch
          %303 = sbr.rel (%p301) target = $region65
        $region64: #{_mimo_gcn_forward.4} parent=15 // pred_region
          %p304 = scmp.ge.s32.totalorder %s17, 1
          %s305 = scalar_select %p304, 1, 0
          %p306 = scmp.lt.s32.totalorder %s305, 1
          %s307 = scalar_select %p306, %s305, 1
          %s308 = smul.addr %s307, 4
          %s309 = scalar_lea.vmem %s2, %s308
          %p310 = scmp.ge.s32.totalorder %s17, 1
          %s311 = scalar_select %p310, 1, 0
        $region65: #{_mimo_gcn_forward.4} parent=15 // pred_fallthru
          _
        // Predicated region
        $region66: #{_mimo_gcn_forward.4} parent=15 // pred_check
          %p312 = pneg %p130
        $region67: #{_mimo_gcn_forward.4} parent=15 // pred_check_branch
          %314 = sbr.rel (%p312) target = $region69
        $region68: #{_mimo_gcn_forward.4} parent=15 // pred_region
          %p315 = scmp.ge.s32.totalorder %s17, 1
          %s316 = scalar_select %p315, 1, 0
          %p317 = scmp.lt.s32.totalorder %s316, 1
          %s318 = scalar_select %p317, %s316, 1
          %s319 = scalar_lea.vmem %s3, %s318
          %p320 = scmp.ge.s32.totalorder %s17, 1
          %s321 = scalar_select %p320, 1, 0
        $region69: #{_mimo_gcn_forward.4} parent=15 // pred_fallthru
          _
      $region16: #{_mimo_gcn_forward.4} parent=5 // pred_fallthru
        _
      %p322 = scmp.le.s32.totalorder 1, %s10
      %p323 = scmp.lt.s32.totalorder %s10, 5
      %p324 = pnand %p322, %p323
      %p325 = pneg %p324
      // Predicated region
      $region70: #{_mimo_gcn_forward.4} parent=5 // pred_check
        _
      $region71: #{_mimo_gcn_forward.4} parent=5 // pred_check_branch
        %327 = sbr.rel (%p324) target = $region73
      $region72: #{_mimo_gcn_forward.4} parent=5 // pred_region
        %s328 = ssub.s32 %s10, 1
        %s329 = sand.u32 %s37, 1
        %s330 = sand.u32 %s37, 1
        %s331 = smul.addr %s330, 64
        %s332 = scalar_lea.vmem [#allocation3], %s331
        // Predicated region
        $region74: #{_mimo_gcn_forward.4} parent=72 // pred_check
          %p333 = pneg %p50
        $region75: #{_mimo_gcn_forward.4} parent=72 // pred_check_branch
          %335 = sbr.rel (%p333) target = $region77
        $region76: #{_mimo_gcn_forward.4} parent=72 // pred_region
          _
        $region77: #{_mimo_gcn_forward.4} parent=72 // pred_fallthru
          _
        %s336 = sand.u32 %s37, 1
        %s337 = sand.u32 %s37, 1
        %s338 = smul.addr %s337, 64
        %s339 = scalar_lea.vmem [#allocation3], %s338
        %p340 = pneg %p50
        %p341 = pneg %p47
        %s342 = smul.u32 16, %s20
        %p343 = scmp.lt.s32.totalorder %s342, 31
        %s344 = scalar_select %p343, %s342, 31
        %s345 = smul.addr %s344, 4
        %s346 = scalar_lea.vmem %s1, %s345
        %p347 = pneg %p76
        %p348 = pneg %p73
        %p349 = scmp.ge.s32.totalorder %s19, 1
        %s350 = scalar_select %p349, 1, 0
        %p351 = scmp.lt.s32.totalorder %s350, 1
        %s352 = scalar_select %p351, %s350, 1
        %s353 = smul.addr %s352, 4
        %s354 = scalar_lea.vmem %s2, %s353
        %p355 = pneg %p106
        %p356 = pneg %p103
        %p357 = scmp.ge.s32.totalorder %s19, 1
        %s358 = scalar_select %p357, 1, 0
        %p359 = scmp.lt.s32.totalorder %s358, 1
        %s360 = scalar_select %p359, %s358, 1
        %s361 = scalar_lea.vmem %s3, %s360
        %p362 = pneg %p136
        %p363 = pneg %p133
        %p364 = pneg %p162
        %p365 = pneg %p159
        %s366 = smul.u32 16, %s19
        %p367 = scmp.lt.s32.totalorder %s366, 31
        %s368 = scalar_select %p367, %s366, 31
        %s369 = smul.addr %s368, 4
        %s370 = scalar_lea.vmem %s4, %s369
        %s371 = smul.u32 16, %s19
        %s372 = smul.u32 16, %s20
        %p373 = scmp.lt.s32.totalorder %s372, 31
        %s374 = scalar_select %p373, %s372, 31
        %s375 = smul.addr %s374, 4
        %s376 = scalar_lea.vmem %s1, %s375
        %s377 = smul.u32 16, %s20
        %p378 = scmp.ge.s32.totalorder %s19, 1
        %s379 = scalar_select %p378, 1, 0
        %p380 = scmp.lt.s32.totalorder %s379, 1
        %s381 = scalar_select %p380, %s379, 1
        %s382 = smul.addr %s381, 4
        %s383 = scalar_lea.vmem %s2, %s382
        %p384 = scmp.ge.s32.totalorder %s19, 1
        %s385 = scalar_select %p384, 1, 0
        %p386 = scmp.ge.s32.totalorder %s19, 1
        %s387 = scalar_select %p386, 1, 0
        %p388 = scmp.lt.s32.totalorder %s387, 1
        %s389 = scalar_select %p388, %s387, 1
        %s390 = scalar_lea.vmem %s3, %s389
        %p391 = scmp.ge.s32.totalorder %s19, 1
        %s392 = scalar_select %p391, 1, 0
        %s393 = smul.u32 16, %s19
        %p394 = scmp.lt.s32.totalorder %s393, 31
        %s395 = scalar_select %p394, %s393, 31
        %s396 = smul.addr %s395, 4
        %s397 = scalar_lea.vmem %s4, %s396
        %s398 = smul.u32 16, %s19
        %p400 = scmp.eq.s32.totalorder %s20, 0
        // Predicated region
        $region78: #{_mimo_gcn_forward.4} parent=72 // pred_check
          %p401 = pneg %p400
        $region79: #{_mimo_gcn_forward.4} parent=72 // pred_check_branch
          %403 = sbr.rel (%p401) target = $region81
        $region80: #{_mimo_gcn_forward.4} parent=72 // pred_region
          %vm404 = vcmask 64512
          %405 = vst.msk [vmem:[#allocation2] sm:$0xff] %vm404, 0.0
          %406 = vst.msk [vmem:[#allocation2 + $0x8] sm:$0xff] %vm404, 0.0
          %407 = vst.msk [vmem:[#allocation2 + $0x10] sm:$0xff] %vm404, 0.0
          %408 = vst.msk [vmem:[#allocation2 + $0x18] sm:$0xff] %vm404, 0.0
          %409 = vst.msk [vmem:[#allocation2 + $0x20] sm:$0xff] %vm404, 0.0
          %410 = vst.msk [vmem:[#allocation2 + $0x28] sm:$0xff] %vm404, 0.0
          %411 = vst.msk [vmem:[#allocation2 + $0x30] sm:$0xff] %vm404, 0.0
          %412 = vst.msk [vmem:[#allocation2 + $0x38] sm:$0xff] %vm404, 0.0
          %413 = vst.msk [vmem:[#allocation2 + $0x40] sm:$0xff] %vm404, 0.0
          %414 = vst.msk [vmem:[#allocation2 + $0x48] sm:$0xff] %vm404, 0.0
          %415 = vst.msk [vmem:[#allocation2 + $0x50] sm:$0xff] %vm404, 0.0
          %416 = vst.msk [vmem:[#allocation2 + $0x58] sm:$0xff] %vm404, 0.0
          %417 = vst.msk [vmem:[#allocation2 + $0x60] sm:$0xff] %vm404, 0.0
          %418 = vst.msk [vmem:[#allocation2 + $0x68] sm:$0xff] %vm404, 0.0
          %419 = vst.msk [vmem:[#allocation2 + $0x70] sm:$0xff] %vm404, 0.0
          %420 = vst.msk [vmem:[#allocation2 + $0x78] sm:$0xff] %vm404, 0.0
        $region81: #{_mimo_gcn_forward.4} parent=72 // pred_fallthru
          _
        %v421 = vld [vmem:[#allocation2] sm:$0xff]
        %v422 = vld [vmem:[#allocation2 + $0x8] sm:$0xff]
        %v423 = vld [vmem:[#allocation2 + $0x10] sm:$0xff]
        %v424 = vld [vmem:[#allocation2 + $0x18] sm:$0xff]
        %v425 = vld [vmem:[#allocation2 + $0x20] sm:$0xff]
        %v426 = vld [vmem:[#allocation2 + $0x28] sm:$0xff]
        %v427 = vld [vmem:[#allocation2 + $0x30] sm:$0xff]
        %v428 = vld [vmem:[#allocation2 + $0x38] sm:$0xff]
        %v429 = vld [vmem:[#allocation2 + $0x40] sm:$0xff]
        %v430 = vld [vmem:[#allocation2 + $0x48] sm:$0xff]
        %v431 = vld [vmem:[#allocation2 + $0x50] sm:$0xff]
        %v432 = vld [vmem:[#allocation2 + $0x58] sm:$0xff]
        %v433 = vld [vmem:[#allocation2 + $0x60] sm:$0xff]
        %v434 = vld [vmem:[#allocation2 + $0x68] sm:$0xff]
        %v435 = vld [vmem:[#allocation2 + $0x70] sm:$0xff]
        %v436 = vld [vmem:[#allocation2 + $0x78] sm:$0xff]
        %v437 = vld [vmem:[%s332] sm:$0xf]
        %v438 = vld [vmem:[%s332 + $0x4] sm:$0xf]
        %v439 = vld [vmem:[%s332 + $0x8] sm:$0xf]
        %v440 = vld [vmem:[%s332 + $0xc] sm:$0xf]
        %v441 = vld [vmem:[%s332 + $0x10] sm:$0xf]
        %v442 = vld [vmem:[%s332 + $0x14] sm:$0xf]
        %v443 = vld [vmem:[%s332 + $0x18] sm:$0xf]
        %v444 = vld [vmem:[%s332 + $0x1c] sm:$0xf]
        %v445 = vld [vmem:[%s332 + $0x20] sm:$0xf]
        %v446 = vld [vmem:[%s332 + $0x24] sm:$0xf]
        %v447 = vld [vmem:[%s332 + $0x28] sm:$0xf]
        %v448 = vld [vmem:[%s332 + $0x2c] sm:$0xf]
        %v449 = vld [vmem:[%s332 + $0x30] sm:$0xf]
        %v450 = vld [vmem:[%s332 + $0x34] sm:$0xf]
        %v451 = vld [vmem:[%s332 + $0x38] sm:$0xf]
        %v452 = vld [vmem:[%s332 + $0x3c] sm:$0xf]
        %v453 = vld [vmem:[%s376] sm:$0xf]
        %v454 = vld [vmem:[%s376 + $0x4] sm:$0xf]
        %v455 = vld [vmem:[%s376 + $0x8] sm:$0xf]
        %v456 = vld [vmem:[%s376 + $0xc] sm:$0xf]
        %v457 = vld [vmem:[%s376 + $0x10] sm:$0xf]
        %v458 = vld [vmem:[%s376 + $0x14] sm:$0xf]
        %v459 = vld [vmem:[%s376 + $0x18] sm:$0xf]
        %v460 = vld [vmem:[%s376 + $0x1c] sm:$0xf]
        %v461 = vld [vmem:[%s376 + $0x20] sm:$0xf]
        %v462 = vld [vmem:[%s376 + $0x24] sm:$0xf]
        %v463 = vld [vmem:[%s376 + $0x28] sm:$0xf]
        %v464 = vld [vmem:[%s376 + $0x2c] sm:$0xf]
        %v465 = vld [vmem:[%s376 + $0x30] sm:$0xf]
        %v466 = vld [vmem:[%s376 + $0x34] sm:$0xf]
        %v467 = vld [vmem:[%s376 + $0x38] sm:$0xf]
        %v468 = vld [vmem:[%s376 + $0x3c] sm:$0xf]
        %v485 = vunpack.c.l.b16 %v437
        %v486 = vunpack.c.l.b16 %v438
        %v487 = vunpack.c.l.b16 %v439
        %v488 = vunpack.c.l.b16 %v440
        %v489 = vunpack.c.l.b16 %v441
        %v490 = vunpack.c.l.b16 %v442
        %v491 = vunpack.c.l.b16 %v443
        %v492 = vunpack.c.l.b16 %v444
        %v493 = vunpack.c.l.b16 %v445
        %v494 = vunpack.c.l.b16 %v446
        %v495 = vunpack.c.l.b16 %v447
        %v496 = vunpack.c.l.b16 %v448
        %v497 = vunpack.c.l.b16 %v449
        %v498 = vunpack.c.l.b16 %v450
        %v499 = vunpack.c.l.b16 %v451
        %v500 = vunpack.c.l.b16 %v452
        %v501 = vpack.c.b16 %v486, %v485
        %v502 = vpack.c.b16 %v488, %v487
        %v503 = vpack.c.b16 %v490, %v489
        %v504 = vpack.c.b16 %v492, %v491
        %v505 = vpack.c.b16 %v494, %v493
        %v506 = vpack.c.b16 %v496, %v495
        %v507 = vpack.c.b16 %v498, %v497
        %v508 = vpack.c.b16 %v500, %v499
        %v533 = vunpack.c.l.b16 %v453
        %v534 = vunpack.c.l.b16 %v454
        %v535 = vunpack.c.l.b16 %v455
        %v536 = vunpack.c.l.b16 %v456
        %v537 = vunpack.c.l.b16 %v457
        %v538 = vunpack.c.l.b16 %v458
        %v539 = vunpack.c.l.b16 %v459
        %v540 = vunpack.c.l.b16 %v460
        %v541 = vunpack.c.l.b16 %v461
        %v542 = vunpack.c.l.b16 %v462
        %v543 = vunpack.c.l.b16 %v463
        %v544 = vunpack.c.l.b16 %v464
        %v545 = vunpack.c.l.b16 %v465
        %v546 = vunpack.c.l.b16 %v466
        %v547 = vunpack.c.l.b16 %v467
        %v548 = vunpack.c.l.b16 %v468
        %v549 = vpack.c.b16 %v534, %v533
        %v550 = vpack.c.b16 %v536, %v535
        %v551 = vpack.c.b16 %v538, %v537
        %v552 = vpack.c.b16 %v540, %v539
        %v553 = vpack.c.b16 %v542, %v541
        %v554 = vpack.c.b16 %v544, %v543
        %v555 = vpack.c.b16 %v546, %v545
        %v556 = vpack.c.b16 %v548, %v547
        %565 = vmatprep.subr.bf16.mxu0 0
        %566 = vmatpush1.bf16.msra.mxu0 %v549
        %567 = vmatprep.subr.bf16.mxu0 0
        %568 = vmatpush1.bf16.msra.mxu0 %v550
        %569 = vmatprep.subr.bf16.mxu0 0
        %570 = vmatpush1.bf16.msra.mxu0 %v551
        %571 = vmatprep.subr.bf16.mxu0 0
        %572 = vmatpush1.bf16.msra.mxu0 %v552
        %573 = vmatprep.subr.bf16.mxu0 0
        %574 = vmatpush1.bf16.msra.mxu0 %v553
        %575 = vmatprep.subr.bf16.mxu0 0
        %576 = vmatpush1.bf16.msra.mxu0 %v554
        %577 = vmatprep.subr.bf16.mxu0 0
        %578 = vmatpush1.bf16.msra.mxu0 %v555
        %579 = vmatprep.subr.bf16.mxu0 0
        %580 = vmatpush1.bf16.msra.mxu0 %v556
        %581 = vmatprep.subr.bf16.mxu0 0
        %582 = vmatpush1.bf16.msra.mxu0 0
        %583 = vmatprep.subr.bf16.mxu0 0
        %584 = vmatpush1.bf16.msra.mxu0 0
        %585 = vmatprep.subr.bf16.mxu0 0
        %586 = vmatpush1.bf16.msra.mxu0 0
        %587 = vmatprep.subr.bf16.mxu0 0
        %588 = vmatpush1.bf16.msra.mxu0 0
        %589 = vmatprep.subr.bf16.mxu0 0
        %590 = vmatpush1.bf16.msra.mxu0 0
        %591 = vmatprep.subr.bf16.mxu0 0
        %592 = vmatpush1.bf16.msra.mxu0 0
        %593 = vmatprep.subr.bf16.mxu0 0
        %594 = vmatpush1.bf16.msra.mxu0 0
        %595 = vmatprep.subr.bf16.mxu0 0
        %596 = vmatpush1.bf16.msra.mxu0 0
        %597 = vmatprep.mubr.bf16.mxu0 0
        %598 = vmatmul.mubr.bf16.gmra.mrb[0].mxu0 %v501
        %v599 = vpop.f32.mrb[0].mxu0
        %v600 = vadd.f32 0.0, %v599
        %v601 = vpop.f32.mrb[0].mxu0
        %v602 = vpop.f32.mrb[0].mxu0
        %v603 = vadd.f32 0.0, %v602
        %v604 = vpop.f32.mrb[0].mxu0
        %605 = vmatprep.mubr.bf16.mxu0 0
        %606 = vmatmul.mubr.bf16.gmra.mrb[0].mxu0 %v502
        %v607 = vpop.f32.mrb[0].mxu0
        %v608 = vadd.f32 0.0, %v607
        %v609 = vpop.f32.mrb[0].mxu0
        %v610 = vpop.f32.mrb[0].mxu0
        %v611 = vadd.f32 0.0, %v610
        %v612 = vpop.f32.mrb[0].mxu0
        %613 = vmatprep.mubr.bf16.mxu0 0
        %614 = vmatmul.mubr.bf16.gmra.mrb[0].mxu0 %v503
        %v615 = vpop.f32.mrb[0].mxu0
        %v616 = vadd.f32 0.0, %v615
        %v617 = vpop.f32.mrb[0].mxu0
        %v618 = vpop.f32.mrb[0].mxu0
        %v619 = vadd.f32 0.0, %v618
        %v620 = vpop.f32.mrb[0].mxu0
        %621 = vmatprep.mubr.bf16.mxu0 0
        %622 = vmatmul.mubr.bf16.gmra.mrb[0].mxu0 %v504
        %v623 = vpop.f32.mrb[0].mxu0
        %v624 = vadd.f32 0.0, %v623
        %v625 = vpop.f32.mrb[0].mxu0
        %v626 = vpop.f32.mrb[0].mxu0
        %v627 = vadd.f32 0.0, %v626
        %v628 = vpop.f32.mrb[0].mxu0
        %629 = vmatprep.mubr.bf16.mxu0 0
        %630 = vmatmul.mubr.bf16.gmra.mrb[0].mxu0 %v505
        %v631 = vpop.f32.mrb[0].mxu0
        %v632 = vadd.f32 0.0, %v631
        %v633 = vpop.f32.mrb[0].mxu0
        %v634 = vpop.f32.mrb[0].mxu0
        %v635 = vadd.f32 0.0, %v634
        %v636 = vpop.f32.mrb[0].mxu0
        %637 = vmatprep.mubr.bf16.mxu0 0
        %638 = vmatmul.mubr.bf16.gmra.mrb[0].mxu0 %v506
        %v639 = vpop.f32.mrb[0].mxu0
        %v640 = vadd.f32 0.0, %v639
        %v641 = vpop.f32.mrb[0].mxu0
        %v642 = vpop.f32.mrb[0].mxu0
        %v643 = vadd.f32 0.0, %v642
        %v644 = vpop.f32.mrb[0].mxu0
        %645 = vmatprep.mubr.bf16.mxu0 0
        %646 = vmatmul.mubr.bf16.gmra.mrb[0].mxu0 %v507
        %v647 = vpop.f32.mrb[0].mxu0
        %v648 = vadd.f32 0.0, %v647
        %v649 = vpop.f32.mrb[0].mxu0
        %v650 = vpop.f32.mrb[0].mxu0
        %v651 = vadd.f32 0.0, %v650
        %v652 = vpop.f32.mrb[0].mxu0
        %653 = vmatprep.mubr.bf16.mxu0 0
        %654 = vmatmul.mubr.bf16.gmra.mrb[0].mxu0 %v508
        %v655 = vpop.f32.mrb[0].mxu0
        %v656 = vadd.f32 0.0, %v655
        %v657 = vpop.f32.mrb[0].mxu0
        %v658 = vpop.f32.mrb[0].mxu0
        %v659 = vadd.f32 0.0, %v658
        %v660 = vpop.f32.mrb[0].mxu0
        %661 = vdwg.mxu0
        %v662 = vadd.f32 %v421, %v600
        %v663 = vadd.f32 %v422, %v603
        %v664 = vadd.f32 %v423, %v608
        %v665 = vadd.f32 %v424, %v611
        %v666 = vadd.f32 %v425, %v616
        %v667 = vadd.f32 %v426, %v619
        %v668 = vadd.f32 %v427, %v624
        %v669 = vadd.f32 %v428, %v627
        %v670 = vadd.f32 %v429, %v632
        %v671 = vadd.f32 %v430, %v635
        %v672 = vadd.f32 %v431, %v640
        %v673 = vadd.f32 %v432, %v643
        %v674 = vadd.f32 %v433, %v648
        %v675 = vadd.f32 %v434, %v651
        %v676 = vadd.f32 %v435, %v656
        %v677 = vadd.f32 %v436, %v659
        %vm678 = vcmask 64512
        %679 = vst.msk [vmem:[#allocation2] sm:$0xff] %vm678, %v662
        %680 = vst.msk [vmem:[#allocation2 + $0x8] sm:$0xff] %vm678, %v663
        %681 = vst.msk [vmem:[#allocation2 + $0x10] sm:$0xff] %vm678, %v664
        %682 = vst.msk [vmem:[#allocation2 + $0x18] sm:$0xff] %vm678, %v665
        %683 = vst.msk [vmem:[#allocation2 + $0x20] sm:$0xff] %vm678, %v666
        %684 = vst.msk [vmem:[#allocation2 + $0x28] sm:$0xff] %vm678, %v667
        %685 = vst.msk [vmem:[#allocation2 + $0x30] sm:$0xff] %vm678, %v668
        %686 = vst.msk [vmem:[#allocation2 + $0x38] sm:$0xff] %vm678, %v669
        %687 = vst.msk [vmem:[#allocation2 + $0x40] sm:$0xff] %vm678, %v670
        %688 = vst.msk [vmem:[#allocation2 + $0x48] sm:$0xff] %vm678, %v671
        %689 = vst.msk [vmem:[#allocation2 + $0x50] sm:$0xff] %vm678, %v672
        %690 = vst.msk [vmem:[#allocation2 + $0x58] sm:$0xff] %vm678, %v673
        %691 = vst.msk [vmem:[#allocation2 + $0x60] sm:$0xff] %vm678, %v674
        %692 = vst.msk [vmem:[#allocation2 + $0x68] sm:$0xff] %vm678, %v675
        %693 = vst.msk [vmem:[#allocation2 + $0x70] sm:$0xff] %vm678, %v676
        %694 = vst.msk [vmem:[#allocation2 + $0x78] sm:$0xff] %vm678, %v677
        %p695 = scmp.eq.s32.totalorder %s20, 1
        // Predicated region
        $region82: #{_mimo_gcn_forward.4} parent=72 // pred_check
          %p696 = pneg %p695
        $region83: #{_mimo_gcn_forward.4} parent=72 // pred_check_branch
          %698 = sbr.rel (%p696) target = $region85
        $region84: #{_mimo_gcn_forward.4} parent=72 // pred_region
          %v699 = vld [vmem:[#allocation2] sm:$0xff]
          %v700 = vld [vmem:[#allocation2 + $0x8] sm:$0xff]
          %v701 = vld [vmem:[#allocation2 + $0x10] sm:$0xff]
          %v702 = vld [vmem:[#allocation2 + $0x18] sm:$0xff]
          %v703 = vld [vmem:[#allocation2 + $0x20] sm:$0xff]
          %v704 = vld [vmem:[#allocation2 + $0x28] sm:$0xff]
          %v705 = vld [vmem:[#allocation2 + $0x30] sm:$0xff]
          %v706 = vld [vmem:[#allocation2 + $0x38] sm:$0xff]
          %v707 = vld [vmem:[#allocation2 + $0x40] sm:$0xff]
          %v708 = vld [vmem:[#allocation2 + $0x48] sm:$0xff]
          %v709 = vld [vmem:[#allocation2 + $0x50] sm:$0xff]
          %v710 = vld [vmem:[#allocation2 + $0x58] sm:$0xff]
          %v711 = vld [vmem:[#allocation2 + $0x60] sm:$0xff]
          %v712 = vld [vmem:[#allocation2 + $0x68] sm:$0xff]
          %v713 = vld [vmem:[#allocation2 + $0x70] sm:$0xff]
          %v714 = vld [vmem:[#allocation2 + $0x78] sm:$0xff]
          %v715 = vld [vmem:[%s383] sm:$0xf]
          %v716 = vunpack.c.l.bf16 %v715
          %v717 = vld [vmem:[%s390] sm:$0x1]
          %v719 = vlaneseq
          %v720 = vshrl.u32 %v719, 7
          %v721 = vsub.s32 0, %v720
          %v722 = vrot.slane %v717, %v721
          %v725 = vsel %vm678, %v699, 0
          %v728 = vsel %vm678, %v700, 0
          %v731 = vsel %vm678, %v701, 0
          %v734 = vsel %vm678, %v702, 0
          %v737 = vsel %vm678, %v703, 0
          %v740 = vsel %vm678, %v704, 0
          %v743 = vsel %vm678, %v705, 0
          %v746 = vsel %vm678, %v706, 0
          %v749 = vsel %vm678, %v707, 0
          %v752 = vsel %vm678, %v708, 0
          %v755 = vsel %vm678, %v709, 0
          %v758 = vsel %vm678, %v710, 0
          %v761 = vsel %vm678, %v711, 0
          %v764 = vsel %vm678, %v712, 0
          %v767 = vsel %vm678, %v713, 0
          %v770 = vsel %vm678, %v714, 0
          %772 = vmatprep.subr.mxu0 0.0
          %773 = vmatpush1.msra.mxu0 %v716
          %774 = vmatprep.subr.mxu0 0.0
          %775 = vmatpush1.msra.mxu0 0.0
          %776 = vmatprep.subr.mxu0 0.0
          %777 = vmatpush1.msra.mxu0 0.0
          %778 = vmatprep.subr.mxu0 0.0
          %779 = vmatpush1.msra.mxu0 0.0
          %780 = vmatprep.subr.mxu0 0.0
          %781 = vmatpush1.msra.mxu0 0.0
          %782 = vmatprep.subr.mxu0 0.0
          %783 = vmatpush1.msra.mxu0 0.0
          %784 = vmatprep.subr.mxu0 0.0
          %785 = vmatpush1.msra.mxu0 0.0
          %786 = vmatprep.subr.mxu0 0.0
          %787 = vmatpush1.msra.mxu0 0.0
          %788 = vmatprep.subr.mxu0 0.0
          %789 = vmatpush1.msra.mxu0 0.0
          %790 = vmatprep.subr.mxu0 0.0
          %791 = vmatpush1.msra.mxu0 0.0
          %792 = vmatprep.subr.mxu0 0.0
          %793 = vmatpush1.msra.mxu0 0.0
          %794 = vmatprep.subr.mxu0 0.0
          %795 = vmatpush1.msra.mxu0 0.0
          %796 = vmatprep.subr.mxu0 0.0
          %797 = vmatpush1.msra.mxu0 0.0
          %798 = vmatprep.subr.mxu0 0.0
          %799 = vmatpush1.msra.mxu0 0.0
          %800 = vmatprep.subr.mxu0 0.0
          %801 = vmatpush1.msra.mxu0 0.0
          %802 = vmatprep.subr.mxu0 0.0
          %803 = vmatpush1.msra.mxu0 0.0
          %804 = vmatprep.subr.mxu0 0.0
          %805 = vmatpush1.msra.mxu0 0.0
          %806 = vmatprep.subr.mxu0 0.0
          %807 = vmatpush1.msra.mxu0 0.0
          %808 = vmatprep.subr.mxu0 0.0
          %809 = vmatpush1.msra.mxu0 0.0
          %810 = vmatprep.subr.mxu0 0.0
          %811 = vmatpush1.msra.mxu0 0.0
          %812 = vmatprep.subr.mxu0 0.0
          %813 = vmatpush1.msra.mxu0 0.0
          %814 = vmatprep.subr.mxu0 0.0
          %815 = vmatpush1.msra.mxu0 0.0
          %816 = vmatprep.subr.mxu0 0.0
          %817 = vmatpush1.msra.mxu0 0.0
          %818 = vmatprep.subr.mxu0 0.0
          %819 = vmatpush1.msra.mxu0 0.0
          %820 = vmatprep.subr.mxu0 0.0
          %821 = vmatpush1.msra.mxu0 0.0
          %822 = vmatprep.subr.mxu0 0.0
          %823 = vmatpush1.msra.mxu0 0.0
          %824 = vmatprep.subr.mxu0 0.0
          %825 = vmatpush1.msra.mxu0 0.0
          %826 = vmatprep.subr.mxu0 0.0
          %827 = vmatpush1.msra.mxu0 0.0
          %828 = vmatprep.subr.mxu0 0.0
          %829 = vmatpush1.msra.mxu0 0.0
          %830 = vmatprep.subr.mxu0 0.0
          %831 = vmatpush1.msra.mxu0 0.0
          %832 = vmatprep.subr.mxu0 0.0
          %833 = vmatpush1.msra.mxu0 0.0
          %834 = vmatprep.subr.mxu0 0.0
          %835 = vmatpush1.msra.mxu0 0.0
          %836 = vmatprep.mubr.f32.mxu0 0.0
          %837 = vmatmul.mubr.f32.gmra.mrb[0].mxu0 %v725
          %v838 = vpop.f32.mrb[0].mxu0
          %v839 = vadd.f32 %v722, %v838
          %v840 = vpop.f32.mrb[0].mxu0
          %841 = vmatprep.mubr.f32.mxu0 0.0
          %842 = vmatmul.mubr.f32.gmra.mrb[0].mxu0 %v728
          %v843 = vpop.f32.mrb[0].mxu0
          %v844 = vadd.f32 %v722, %v843
          %v845 = vpop.f32.mrb[0].mxu0
          %846 = vmatprep.mubr.f32.mxu0 0.0
          %847 = vmatmul.mubr.f32.gmra.mrb[0].mxu0 %v731
          %v848 = vpop.f32.mrb[0].mxu0
          %v849 = vadd.f32 %v722, %v848
          %v850 = vpop.f32.mrb[0].mxu0
          %851 = vmatprep.mubr.f32.mxu0 0.0
          %852 = vmatmul.mubr.f32.gmra.mrb[0].mxu0 %v734
          %v853 = vpop.f32.mrb[0].mxu0
          %v854 = vadd.f32 %v722, %v853
          %v855 = vpop.f32.mrb[0].mxu0
          %856 = vmatprep.mubr.f32.mxu0 0.0
          %857 = vmatmul.mubr.f32.gmra.mrb[0].mxu0 %v737
          %v858 = vpop.f32.mrb[0].mxu0
          %v859 = vadd.f32 %v722, %v858
          %v860 = vpop.f32.mrb[0].mxu0
          %861 = vmatprep.mubr.f32.mxu0 0.0
          %862 = vmatmul.mubr.f32.gmra.mrb[0].mxu0 %v740
          %v863 = vpop.f32.mrb[0].mxu0
          %v864 = vadd.f32 %v722, %v863
          %v865 = vpop.f32.mrb[0].mxu0
          %866 = vmatprep.mubr.f32.mxu0 0.0
          %867 = vmatmul.mubr.f32.gmra.mrb[0].mxu0 %v743
          %v868 = vpop.f32.mrb[0].mxu0
          %v869 = vadd.f32 %v722, %v868
          %v870 = vpop.f32.mrb[0].mxu0
          %871 = vmatprep.mubr.f32.mxu0 0.0
          %872 = vmatmul.mubr.f32.gmra.mrb[0].mxu0 %v746
          %v873 = vpop.f32.mrb[0].mxu0
          %v874 = vadd.f32 %v722, %v873
          %v875 = vpop.f32.mrb[0].mxu0
          %876 = vmatprep.mubr.f32.mxu0 0.0
          %877 = vmatmul.mubr.f32.gmra.mrb[0].mxu0 %v749
          %v878 = vpop.f32.mrb[0].mxu0
          %v879 = vadd.f32 %v722, %v878
          %v880 = vpop.f32.mrb[0].mxu0
          %881 = vmatprep.mubr.f32.mxu0 0.0
          %882 = vmatmul.mubr.f32.gmra.mrb[0].mxu0 %v752
          %v883 = vpop.f32.mrb[0].mxu0
          %v884 = vadd.f32 %v722, %v883
          %v885 = vpop.f32.mrb[0].mxu0
          %886 = vmatprep.mubr.f32.mxu0 0.0
          %887 = vmatmul.mubr.f32.gmra.mrb[0].mxu0 %v755
          %v888 = vpop.f32.mrb[0].mxu0
          %v889 = vadd.f32 %v722, %v888
          %v890 = vpop.f32.mrb[0].mxu0
          %891 = vmatprep.mubr.f32.mxu0 0.0
          %892 = vmatmul.mubr.f32.gmra.mrb[0].mxu0 %v758
          %v893 = vpop.f32.mrb[0].mxu0
          %v894 = vadd.f32 %v722, %v893
          %v895 = vpop.f32.mrb[0].mxu0
          %896 = vmatprep.mubr.f32.mxu0 0.0
          %897 = vmatmul.mubr.f32.gmra.mrb[0].mxu0 %v761
          %v898 = vpop.f32.mrb[0].mxu0
          %v899 = vadd.f32 %v722, %v898
          %v900 = vpop.f32.mrb[0].mxu0
          %901 = vmatprep.mubr.f32.mxu0 0.0
          %902 = vmatmul.mubr.f32.gmra.mrb[0].mxu0 %v764
          %v903 = vpop.f32.mrb[0].mxu0
          %v904 = vadd.f32 %v722, %v903
          %v905 = vpop.f32.mrb[0].mxu0
          %906 = vmatprep.mubr.f32.mxu0 0.0
          %907 = vmatmul.mubr.f32.gmra.mrb[0].mxu0 %v767
          %v908 = vpop.f32.mrb[0].mxu0
          %v909 = vadd.f32 %v722, %v908
          %v910 = vpop.f32.mrb[0].mxu0
          %911 = vmatprep.mubr.f32.mxu0 0.0
          %912 = vmatmul.mubr.f32.gmra.mrb[0].mxu0 %v770
          %v913 = vpop.f32.mrb[0].mxu0
          %v914 = vadd.f32 %v722, %v913
          %v915 = vpop.f32.mrb[0].mxu0
          %916 = vdwg.mxu0
          %v917 = vmax.f32 %v839, 0.0
          %v918 = vmax.f32 %v844, 0.0
          %v919 = vmax.f32 %v849, 0.0
          %v920 = vmax.f32 %v854, 0.0
          %v921 = vmax.f32 %v859, 0.0
          %v922 = vmax.f32 %v864, 0.0
          %v923 = vmax.f32 %v869, 0.0
          %v924 = vmax.f32 %v874, 0.0
          %v925 = vmax.f32 %v879, 0.0
          %v926 = vmax.f32 %v884, 0.0
          %v927 = vmax.f32 %v889, 0.0
          %v928 = vmax.f32 %v894, 0.0
          %v929 = vmax.f32 %v899, 0.0
          %v930 = vmax.f32 %v904, 0.0
          %v931 = vmax.f32 %v909, 0.0
          %v932 = vmax.f32 %v914, 0.0
          %v933 = vpack.c.bf16 %v918, %v917
          %v934 = vpack.c.bf16 %v920, %v919
          %v935 = vpack.c.bf16 %v922, %v921
          %v936 = vpack.c.bf16 %v924, %v923
          %v937 = vpack.c.bf16 %v926, %v925
          %v938 = vpack.c.bf16 %v928, %v927
          %v939 = vpack.c.bf16 %v930, %v929
          %v940 = vpack.c.bf16 %v932, %v931
          %v949 = vunpack.c.l.b16 %v933
          %v950 = vunpack.c.h.b16 %v933
          %v951 = vunpack.c.l.b16 %v934
          %v952 = vunpack.c.h.b16 %v934
          %v953 = vunpack.c.l.b16 %v935
          %v954 = vunpack.c.h.b16 %v935
          %v955 = vunpack.c.l.b16 %v936
          %v956 = vunpack.c.h.b16 %v936
          %v957 = vunpack.c.l.b16 %v937
          %v958 = vunpack.c.h.b16 %v937
          %v959 = vunpack.c.l.b16 %v938
          %v960 = vunpack.c.h.b16 %v938
          %v961 = vunpack.c.l.b16 %v939
          %v962 = vunpack.c.h.b16 %v939
          %v963 = vunpack.c.l.b16 %v940
          %v964 = vunpack.c.h.b16 %v940
          %v965 = vpack.c.b16 %v949, %v949
          %v966 = vpack.c.b16 %v950, %v950
          %v967 = vpack.c.b16 %v951, %v951
          %v968 = vpack.c.b16 %v952, %v952
          %v969 = vpack.c.b16 %v953, %v953
          %v970 = vpack.c.b16 %v954, %v954
          %v971 = vpack.c.b16 %v955, %v955
          %v972 = vpack.c.b16 %v956, %v956
          %v973 = vpack.c.b16 %v957, %v957
          %v974 = vpack.c.b16 %v958, %v958
          %v975 = vpack.c.b16 %v959, %v959
          %v976 = vpack.c.b16 %v960, %v960
          %v977 = vpack.c.b16 %v961, %v961
          %v978 = vpack.c.b16 %v962, %v962
          %v979 = vpack.c.b16 %v963, %v963
          %v980 = vpack.c.b16 %v964, %v964
          %997 = vst [vmem:[%s397] sm:$0xf] %v965
          %998 = vst [vmem:[%s397 + $0x4] sm:$0xf] %v966
          %999 = vst [vmem:[%s397 + $0x8] sm:$0xf] %v967
          %1000 = vst [vmem:[%s397 + $0xc] sm:$0xf] %v968
          %1001 = vst [vmem:[%s397 + $0x10] sm:$0xf] %v969
          %1002 = vst [vmem:[%s397 + $0x14] sm:$0xf] %v970
          %1003 = vst [vmem:[%s397 + $0x18] sm:$0xf] %v971
          %1004 = vst [vmem:[%s397 + $0x1c] sm:$0xf] %v972
          %1005 = vst [vmem:[%s397 + $0x20] sm:$0xf] %v973
          %1006 = vst [vmem:[%s397 + $0x24] sm:$0xf] %v974
          %1007 = vst [vmem:[%s397 + $0x28] sm:$0xf] %v975
          %1008 = vst [vmem:[%s397 + $0x2c] sm:$0xf] %v976
          %1009 = vst [vmem:[%s397 + $0x30] sm:$0xf] %v977
          %1010 = vst [vmem:[%s397 + $0x34] sm:$0xf] %v978
          %1011 = vst [vmem:[%s397 + $0x38] sm:$0xf] %v979
          %1012 = vst [vmem:[%s397 + $0x3c] sm:$0xf] %v980
        $region85: #{_mimo_gcn_forward.4} parent=72 // pred_fallthru
          _
        %s1013 = smul.u32 16, %s19
        %p1014 = scmp.lt.s32.totalorder %s1013, 31
        %s1015 = scalar_select %p1014, %s1013, 31
        %s1016 = smul.addr %s1015, 4
        %s1017 = scalar_lea.vmem %s4, %s1016
        // Predicated region
        $region86: #{_mimo_gcn_forward.4} parent=72 // pred_check
          %p1018 = pneg %p159
        $region87: #{_mimo_gcn_forward.4} parent=72 // pred_check_branch
          %1020 = sbr.rel (%p1018) target = $region89
        $region88: #{_mimo_gcn_forward.4} parent=72 // pred_region
          %s1021 = smul.u32 16, %s19
        $region89: #{_mimo_gcn_forward.4} parent=72 // pred_fallthru
          _
      $region73: #{_mimo_gcn_forward.4} parent=5 // pred_fallthru
        _
      %p1022 = scmp.le.s32.totalorder 2, %s10
      // Predicated region
      $region90: #{_mimo_gcn_forward.4} parent=5 // pred_check
        %p1023 = pneg %p1022
      $region91: #{_mimo_gcn_forward.4} parent=5 // pred_check_branch
        %1025 = sbr.rel (%p1023) target = $region93
      $region92: #{_mimo_gcn_forward.4} parent=5 // pred_region
        %s1026 = ssub.s32 %s10, 2
        // Predicated region
        $region94: #{_mimo_gcn_forward.4} parent=92 // pred_check
          %p1027 = pneg %p165
        $region95: #{_mimo_gcn_forward.4} parent=92 // pred_check_branch
          %1029 = sbr.rel (%p1027) target = $region97
        $region96: #{_mimo_gcn_forward.4} parent=92 // pred_region
          %s1030 = smul.u32 16, %s21
          %p1031 = scmp.lt.s32.totalorder %s1030, 31
          %s1032 = scalar_select %p1031, %s1030, 31
          %s1033 = smul.addr %s1032, 4
          %s1034 = scalar_lea.vmem %s4, %s1033
        $region97: #{_mimo_gcn_forward.4} parent=92 // pred_fallthru
          _
      $region93: #{_mimo_gcn_forward.4} parent=5 // pred_fallthru
        _
    $region6: #{_mimo_gcn_forward.4} parent=1 // loop_footer
      %s14 = sadd.s32 1, %s10
    $region7: #{_mimo_gcn_forward.4} parent=1 // loop_footer_branch
      %9 = sbr.rel target = $region3
    $region8: #{_mimo_gcn_forward.4} parent=1 // loop_exit
      _

// kernel: _mimo_gcn_forward.7
$region0: #{_mimo_gcn_forward.7}
  #allocation0 [shape = 'u32[]', space=smem, size = 0x4, offset = 0x4, fixed_abs, tag = 'smem constant byte address 0x4 - core index']
  #allocation1 [shape = 'u32[144,128]{1,0:T(1,128)}', space=vmem, size = 0x12000, scoped, tag = 'internal scratch']
  #allocation2 [shape = 'f32[8,128]{1,0:T(8,128)}', space=vmem, size = 0x1000, scoped, tag = 'scratch operand']
  %s0 = inlined_call_operand.vmem [shape: bf16[2,8,256], index: 0, kind: input, shape index: {}]
  %s1 = inlined_call_operand.vmem [shape: bf16[256,128], index: 1, kind: input, shape index: {}]
  %s2 = inlined_call_operand.vmem [shape: bf16[2,128,128], index: 2, kind: input, shape index: {}]
  %s3 = inlined_call_operand.vmem [shape: f32[2,1,128], index: 3, kind: input, shape index: {}]
  %s4 = inlined_call_operand.vmem [shape: bf16[2,128,128], index: 4, kind: input, shape index: {}]
  %s5 = inlined_call_operand.vmem [shape: f32[2,1,128], index: 5, kind: input, shape index: {}]
  %s6 = inlined_call_operand.vmem [shape: f32[2,8,128], index: 6, kind: output, shape index: {0}]
  %s7 = inlined_call_operand.vmem [shape: f32[2,8,128], index: 7, kind: output, shape index: {1}]
  %8 = xla_tuple %s6, %s7
  %s9 = sld [smem:[#allocation0]]
  $region73: #{_mimo_gcn_forward.7} parent=0
    _
  %s11 = ssub.s32 1, %s9
  %s12 = scalar_select 0, %s11, %s9
  loop: start=0, step=1, limit=6
  $region2: #{_mimo_gcn_forward.7} parent=0 // loop_pre_header
    _
  $region3: #{_mimo_gcn_forward.7} parent=0 // loop_header
    %s14 = sphi 0, %s18
    %p15 = scmp.ge.s32.totalorder %s14, 6
    %s21 = sphi 0, %s33
    %s22 = sphi 0, %s29
    %s23 = sphi 0, %s21
    %s24 = sphi 0, %s22
    %s25 = sphi 0, %s23
    %s26 = sphi 0, %s24
    %s38 = sphi 0, %s40
    %s41 = sphi 0, %s38
    %s42 = sphi 0, %s41
    %s58 = sphi 0, %s42
    %s64 = sphi 0, %s66
    %s67 = sphi 0, %s64
    %s68 = sphi 0, %s67
    %s84 = sphi 0, %s68
    %s90 = sphi 0, %s92
    %s93 = sphi 0, %s90
    %s94 = sphi 0, %s93
    %s110 = sphi 0, %s94
    %s116 = sphi 0, %s118
    %s119 = sphi 0, %s116
    %s120 = sphi 0, %s119
    %s136 = sphi 0, %s120
    %s142 = sphi 0, %s144
    %s145 = sphi 0, %s142
    %s146 = sphi 0, %s145
    %s162 = sphi 0, %s146
    %s168 = sphi 0, %s170
    %s171 = sphi 0, %s168
    %s172 = sphi 0, %s171
    %s188 = sphi 0, %s172
    %s194 = sphi 0, %s196
    %s197 = sphi 0, %s194
    %s198 = sphi 0, %s197
    %s214 = sphi 0, %s198
    %s220 = sphi 0, %s222
    %s223 = sphi 0, %s220
    %s224 = sphi 0, %s223
    %s240 = sphi 0, %s224
  $region4: #{_mimo_gcn_forward.7} parent=0 // loop_header_branch
    %17 = sbr.rel (%p15) target = $region8
  $region5: #{_mimo_gcn_forward.7} parent=0 // loop_body
    %s19 = ssub.s32 %s14, 1
    %s20 = ssub.s32 %s14, 2
    %s27 = sadd.s32 1, %s22
    %p28 = scmp.ge.s32.totalorder %s27, 2
    %s29 = scalar_select %p28, 0, %s27
    %s30 = sadd.s32 1, %s21
    %s31 = scalar_select %p28, %s30, %s21
    %p32 = scmp.ge.s32.totalorder %s31, 2
    %s33 = scalar_select %p32, 0, %s31
    %s34 = ssub.s32 %s21, %s33
    %s35 = ssub.s32 %s22, %s29
    %s36 = sor.u32 %s34, %s35
    %p37 = scmp.eq.s32.totalorder %s36, 0
    %s39 = sadd.s32 %s38, 1
    %s40 = scalar_select %p37, %s38, %s39
    %p43 = pneg %p37
    %p44 = scmp.eq.s32.totalorder %s14, 3
    %p45 = por %p43, %p44
    %p46 = scmp.ne.s32.totalorder %s38, %s41
    %p47 = scmp.eq.s32.totalorder %s14, 0
    %p48 = por %p46, %p47
    %p49 = scmp.ne.s32.totalorder %s38, %s41
    %p50 = scmp.eq.s32.totalorder %s19, 3
    %p51 = por %p49, %p50
    %p52 = scmp.ne.s32.totalorder %s41, %s42
    %p53 = scmp.eq.s32.totalorder %s19, 0
    %p54 = por %p52, %p53
    %p55 = scmp.ne.s32.totalorder %s41, %s42
    %p56 = scmp.eq.s32.totalorder %s20, 3
    %p57 = por %p55, %p56
    %p59 = scmp.ne.s32.totalorder %s42, %s58
    %p60 = scmp.eq.s32.totalorder %s20, 0
    %p61 = por %p59, %p60
    %s62 = ssub.s32 %s22, %s29
    %p63 = scmp.eq.s32.totalorder %s62, 0
    %s65 = sadd.s32 %s64, 1
    %s66 = scalar_select %p63, %s64, %s65
    %p69 = pneg %p63
    %p70 = scmp.eq.s32.totalorder %s14, 3
    %p71 = por %p69, %p70
    %p72 = scmp.ne.s32.totalorder %s64, %s67
    %p73 = scmp.eq.s32.totalorder %s14, 0
    %p74 = por %p72, %p73
    %p75 = scmp.ne.s32.totalorder %s64, %s67
    %p76 = scmp.eq.s32.totalorder %s19, 3
    %p77 = por %p75, %p76
    %p78 = scmp.ne.s32.totalorder %s67, %s68
    %p79 = scmp.eq.s32.totalorder %s19, 0
    %p80 = por %p78, %p79
    %p81 = scmp.ne.s32.totalorder %s67, %s68
    %p82 = scmp.eq.s32.totalorder %s20, 3
    %p83 = por %p81, %p82
    %p85 = scmp.ne.s32.totalorder %s68, %s84
    %p86 = scmp.eq.s32.totalorder %s20, 0
    %p87 = por %p85, %p86
    %s88 = ssub.s32 %s21, %s33
    %p89 = scmp.eq.s32.totalorder %s88, 0
    %s91 = sadd.s32 %s90, 1
    %s92 = scalar_select %p89, %s90, %s91
    %p95 = pneg %p89
    %p96 = scmp.eq.s32.totalorder %s14, 3
    %p97 = por %p95, %p96
    %p98 = scmp.ne.s32.totalorder %s90, %s93
    %p99 = scmp.eq.s32.totalorder %s14, 0
    %p100 = por %p98, %p99
    %p101 = scmp.ne.s32.totalorder %s90, %s93
    %p102 = scmp.eq.s32.totalorder %s19, 3
    %p103 = por %p101, %p102
    %p104 = scmp.ne.s32.totalorder %s93, %s94
    %p105 = scmp.eq.s32.totalorder %s19, 0
    %p106 = por %p104, %p105
    %p107 = scmp.ne.s32.totalorder %s93, %s94
    %p108 = scmp.eq.s32.totalorder %s20, 3
    %p109 = por %p107, %p108
    %p111 = scmp.ne.s32.totalorder %s94, %s110
    %p112 = scmp.eq.s32.totalorder %s20, 0
    %p113 = por %p111, %p112
    %s114 = ssub.s32 %s21, %s33
    %p115 = scmp.eq.s32.totalorder %s114, 0
    %s117 = sadd.s32 %s116, 1
    %s118 = scalar_select %p115, %s116, %s117
    %p121 = pneg %p115
    %p122 = scmp.eq.s32.totalorder %s14, 3
    %p123 = por %p121, %p122
    %p124 = scmp.ne.s32.totalorder %s116, %s119
    %p125 = scmp.eq.s32.totalorder %s14, 0
    %p126 = por %p124, %p125
    %p127 = scmp.ne.s32.totalorder %s116, %s119
    %p128 = scmp.eq.s32.totalorder %s19, 3
    %p129 = por %p127, %p128
    %p130 = scmp.ne.s32.totalorder %s119, %s120
    %p131 = scmp.eq.s32.totalorder %s19, 0
    %p132 = por %p130, %p131
    %p133 = scmp.ne.s32.totalorder %s119, %s120
    %p134 = scmp.eq.s32.totalorder %s20, 3
    %p135 = por %p133, %p134
    %p137 = scmp.ne.s32.totalorder %s120, %s136
    %p138 = scmp.eq.s32.totalorder %s20, 0
    %p139 = por %p137, %p138
    %s140 = ssub.s32 %s21, %s33
    %p141 = scmp.eq.s32.totalorder %s140, 0
    %s143 = sadd.s32 %s142, 1
    %s144 = scalar_select %p141, %s142, %s143
    %p147 = pneg %p141
    %p148 = scmp.eq.s32.totalorder %s14, 3
    %p149 = por %p147, %p148
    %p150 = scmp.ne.s32.totalorder %s142, %s145
    %p151 = scmp.eq.s32.totalorder %s14, 0
    %p152 = por %p150, %p151
    %p153 = scmp.ne.s32.totalorder %s142, %s145
    %p154 = scmp.eq.s32.totalorder %s19, 3
    %p155 = por %p153, %p154
    %p156 = scmp.ne.s32.totalorder %s145, %s146
    %p157 = scmp.eq.s32.totalorder %s19, 0
    %p158 = por %p156, %p157
    %p159 = scmp.ne.s32.totalorder %s145, %s146
    %p160 = scmp.eq.s32.totalorder %s20, 3
    %p161 = por %p159, %p160
    %p163 = scmp.ne.s32.totalorder %s146, %s162
    %p164 = scmp.eq.s32.totalorder %s20, 0
    %p165 = por %p163, %p164
    %s166 = ssub.s32 %s21, %s33
    %p167 = scmp.eq.s32.totalorder %s166, 0
    %s169 = sadd.s32 %s168, 1
    %s170 = scalar_select %p167, %s168, %s169
    %p173 = pneg %p167
    %p174 = scmp.eq.s32.totalorder %s14, 3
    %p175 = por %p173, %p174
    %p176 = scmp.ne.s32.totalorder %s168, %s171
    %p177 = scmp.eq.s32.totalorder %s14, 0
    %p178 = por %p176, %p177
    %p179 = scmp.ne.s32.totalorder %s168, %s171
    %p180 = scmp.eq.s32.totalorder %s19, 3
    %p181 = por %p179, %p180
    %p182 = scmp.ne.s32.totalorder %s171, %s172
    %p183 = scmp.eq.s32.totalorder %s19, 0
    %p184 = por %p182, %p183
    %p185 = scmp.ne.s32.totalorder %s171, %s172
    %p186 = scmp.eq.s32.totalorder %s20, 3
    %p187 = por %p185, %p186
    %p189 = scmp.ne.s32.totalorder %s172, %s188
    %p190 = scmp.eq.s32.totalorder %s20, 0
    %p191 = por %p189, %p190
    %s192 = ssub.s32 %s21, %s33
    %p193 = scmp.eq.s32.totalorder %s192, 0
    %s195 = sadd.s32 %s194, 1
    %s196 = scalar_select %p193, %s194, %s195
    %p199 = pneg %p193
    %p200 = scmp.eq.s32.totalorder %s14, 3
    %p201 = por %p199, %p200
    %p202 = scmp.ne.s32.totalorder %s194, %s197
    %p203 = scmp.eq.s32.totalorder %s14, 0
    %p204 = por %p202, %p203
    %p205 = scmp.ne.s32.totalorder %s194, %s197
    %p206 = scmp.eq.s32.totalorder %s19, 3
    %p207 = por %p205, %p206
    %p208 = scmp.ne.s32.totalorder %s197, %s198
    %p209 = scmp.eq.s32.totalorder %s19, 0
    %p210 = por %p208, %p209
    %p211 = scmp.ne.s32.totalorder %s197, %s198
    %p212 = scmp.eq.s32.totalorder %s20, 3
    %p213 = por %p211, %p212
    %p215 = scmp.ne.s32.totalorder %s198, %s214
    %p216 = scmp.eq.s32.totalorder %s20, 0
    %p217 = por %p215, %p216
    %s218 = ssub.s32 %s21, %s33
    %p219 = scmp.eq.s32.totalorder %s218, 0
    %s221 = sadd.s32 %s220, 1
    %s222 = scalar_select %p219, %s220, %s221
    %p225 = pneg %p219
    %p226 = scmp.eq.s32.totalorder %s14, 3
    %p227 = por %p225, %p226
    %p228 = scmp.ne.s32.totalorder %s220, %s223
    %p229 = scmp.eq.s32.totalorder %s14, 0
    %p230 = por %p228, %p229
    %p231 = scmp.ne.s32.totalorder %s220, %s223
    %p232 = scmp.eq.s32.totalorder %s19, 3
    %p233 = por %p231, %p232
    %p234 = scmp.ne.s32.totalorder %s223, %s224
    %p235 = scmp.eq.s32.totalorder %s19, 0
    %p236 = por %p234, %p235
    %p237 = scmp.ne.s32.totalorder %s223, %s224
    %p238 = scmp.eq.s32.totalorder %s20, 3
    %p239 = por %p237, %p238
    %p241 = scmp.ne.s32.totalorder %s224, %s240
    %p242 = scmp.eq.s32.totalorder %s20, 0
    %p243 = por %p241, %p242
    %p244 = scmp.le.s32.totalorder 1, %s14
    %p245 = scmp.lt.s32.totalorder %s14, 5
    %p246 = pnand %p244, %p245
    %p247 = pneg %p246
    // Predicated region
    $region9: #{_mimo_gcn_forward.7} parent=5 // pred_check
      _
    $region10: #{_mimo_gcn_forward.7} parent=5 // pred_check_branch
      %249 = sbr.rel (%p246) target = $region12
    $region11: #{_mimo_gcn_forward.7} parent=5 // pred_region
      %s250 = ssub.s32 %s14, 1
    $region12: #{_mimo_gcn_forward.7} parent=5 // pred_fallthru
      _
    %p251 = scmp.lt.s32.totalorder %s14, 4
    // Predicated region
    $region13: #{_mimo_gcn_forward.7} parent=5 // pred_check
      %p252 = pneg %p251
    $region14: #{_mimo_gcn_forward.7} parent=5 // pred_check_branch
      %254 = sbr.rel (%p252) target = $region16
    $region15: #{_mimo_gcn_forward.7} parent=5 // pred_region
      // Predicated region
      $region17: #{_mimo_gcn_forward.7} parent=15 // pred_check
        %p255 = pneg %p48
      $region18: #{_mimo_gcn_forward.7} parent=15 // pred_check_branch
        %257 = sbr.rel (%p255) target = $region20
      $region19: #{_mimo_gcn_forward.7} parent=15 // pred_region
        %p258 = scmp.lt.s32.totalorder %s21, 1
        %s259 = scalar_select %p258, %s21, 1
        %p260 = scmp.lt.s32.totalorder %s22, 1
        %s261 = scalar_select %p260, %s22, 1
        %s262 = smul.addr %s259, 2
        %s263 = sadd.s32 %s261, %s262
        %s264 = smul.addr %s263, 4
        %s265 = scalar_lea.vmem %s0, %s264
      $region20: #{_mimo_gcn_forward.7} parent=15 // pred_fallthru
        _
      // Predicated region
      $region21: #{_mimo_gcn_forward.7} parent=15 // pred_check
        %p266 = pneg %p74
      $region22: #{_mimo_gcn_forward.7} parent=15 // pred_check_branch
        %268 = sbr.rel (%p266) target = $region24
      $region23: #{_mimo_gcn_forward.7} parent=15 // pred_region
        %s269 = smul.u32 16, %s22
        %p270 = scmp.lt.s32.totalorder %s269, 31
        %s271 = scalar_select %p270, %s269, 31
        %s272 = smul.addr %s271, 4
        %s273 = scalar_lea.vmem %s1, %s272
        %s274 = smul.u32 16, %s22
      $region24: #{_mimo_gcn_forward.7} parent=15 // pred_fallthru
        _
      // Predicated region
      $region25: #{_mimo_gcn_forward.7} parent=15 // pred_check
        %p275 = pneg %p100
      $region26: #{_mimo_gcn_forward.7} parent=15 // pred_check_branch
        %277 = sbr.rel (%p275) target = $region28
      $region27: #{_mimo_gcn_forward.7} parent=15 // pred_region
        %p278 = scmp.lt.s32.totalorder %s21, 1
        %s279 = scalar_select %p278, %s21, 1
        %s280 = smul.addr %s279, 16
        %s281 = smul.addr %s280, 4
        %s282 = scalar_lea.vmem %s2, %s281
      $region28: #{_mimo_gcn_forward.7} parent=15 // pred_fallthru
        _
      // Predicated region
      $region29: #{_mimo_gcn_forward.7} parent=15 // pred_check
        %p283 = pneg %p126
      $region30: #{_mimo_gcn_forward.7} parent=15 // pred_check_branch
        %285 = sbr.rel (%p283) target = $region32
      $region31: #{_mimo_gcn_forward.7} parent=15 // pred_region
        %p286 = scmp.lt.s32.totalorder %s21, 1
        %s287 = scalar_select %p286, %s21, 1
        %s288 = scalar_lea.vmem %s3, %s287
      $region32: #{_mimo_gcn_forward.7} parent=15 // pred_fallthru
        _
      // Predicated region
      $region33: #{_mimo_gcn_forward.7} parent=15 // pred_check
        %p289 = pneg %p152
      $region34: #{_mimo_gcn_forward.7} parent=15 // pred_check_branch
        %291 = sbr.rel (%p289) target = $region36
      $region35: #{_mimo_gcn_forward.7} parent=15 // pred_region
        %p292 = scmp.lt.s32.totalorder %s21, 1
        %s293 = scalar_select %p292, %s21, 1
        %s294 = smul.addr %s293, 16
        %s295 = smul.addr %s294, 4
        %s296 = scalar_lea.vmem %s4, %s295
      $region36: #{_mimo_gcn_forward.7} parent=15 // pred_fallthru
        _
      // Predicated region
      $region37: #{_mimo_gcn_forward.7} parent=15 // pred_check
        %p297 = pneg %p178
      $region38: #{_mimo_gcn_forward.7} parent=15 // pred_check_branch
        %299 = sbr.rel (%p297) target = $region40
      $region39: #{_mimo_gcn_forward.7} parent=15 // pred_region
        %p300 = scmp.lt.s32.totalorder %s21, 1
        %s301 = scalar_select %p300, %s21, 1
        %s302 = scalar_lea.vmem %s5, %s301
      $region40: #{_mimo_gcn_forward.7} parent=15 // pred_fallthru
        _
    $region16: #{_mimo_gcn_forward.7} parent=5 // pred_fallthru
      _
    %p303 = scmp.le.s32.totalorder 1, %s14
    %p304 = scmp.lt.s32.totalorder %s14, 5
    %p305 = pnand %p303, %p304
    %p306 = pneg %p305
    // Predicated region
    $region41: #{_mimo_gcn_forward.7} parent=5 // pred_check
      _
    $region42: #{_mimo_gcn_forward.7} parent=5 // pred_check_branch
      %308 = sbr.rel (%p305) target = $region44
    $region43: #{_mimo_gcn_forward.7} parent=5 // pred_region
      %s309 = ssub.s32 %s14, 1
      %p310 = scmp.lt.s32.totalorder %s23, 1
      %s311 = scalar_select %p310, %s23, 1
      %p312 = scmp.lt.s32.totalorder %s24, 1
      %s313 = scalar_select %p312, %s24, 1
      %s314 = smul.addr %s311, 2
      %s315 = sadd.s32 %s313, %s314
      %s316 = smul.addr %s315, 4
      %s317 = scalar_lea.vmem %s0, %s316
      %p318 = pneg %p54
      %p319 = pneg %p51
      %s320 = smul.u32 16, %s24
      %p321 = scmp.lt.s32.totalorder %s320, 31
      %s322 = scalar_select %p321, %s320, 31
      %s323 = smul.addr %s322, 4
      %s324 = scalar_lea.vmem %s1, %s323
      %p325 = pneg %p80
      %p326 = pneg %p77
      %p327 = scmp.lt.s32.totalorder %s23, 1
      %s328 = scalar_select %p327, %s23, 1
      %s329 = smul.addr %s328, 16
      %s330 = smul.addr %s329, 4
      %s331 = scalar_lea.vmem %s2, %s330
      %p332 = pneg %p106
      %p333 = pneg %p103
      %p334 = scmp.lt.s32.totalorder %s23, 1
      %s335 = scalar_select %p334, %s23, 1
      %s336 = scalar_lea.vmem %s3, %s335
      %p337 = pneg %p132
      %p338 = pneg %p129
      %p339 = scmp.lt.s32.totalorder %s23, 1
      %s340 = scalar_select %p339, %s23, 1
      %s341 = smul.addr %s340, 16
      %s342 = smul.addr %s341, 4
      %s343 = scalar_lea.vmem %s4, %s342
      %p344 = pneg %p158
      %p345 = pneg %p155
      %p346 = scmp.lt.s32.totalorder %s23, 1
      %s347 = scalar_select %p346, %s23, 1
      %s348 = scalar_lea.vmem %s5, %s347
      %p349 = pneg %p184
      %p350 = pneg %p181
      %p351 = pneg %p210
      %p352 = pneg %p207
      %p353 = scmp.lt.s32.totalorder %s23, 1
      %s354 = scalar_select %p353, %s23, 1
      %s355 = smul.addr %s354, 8
      %s356 = scalar_lea.vmem %s6, %s355
      %p357 = pneg %p236
      %p358 = pneg %p233
      %p359 = scmp.lt.s32.totalorder %s23, 1
      %s360 = scalar_select %p359, %s23, 1
      %s361 = smul.addr %s360, 8
      %s362 = scalar_lea.vmem %s7, %s361
      %p363 = scmp.lt.s32.totalorder %s23, 1
      %s364 = scalar_select %p363, %s23, 1
      %p365 = scmp.lt.s32.totalorder %s24, 1
      %s366 = scalar_select %p365, %s24, 1
      %s367 = smul.addr %s364, 2
      %s368 = sadd.s32 %s366, %s367
      %s369 = smul.addr %s368, 4
      %s370 = scalar_lea.vmem %s0, %s369
      %s371 = smul.u32 16, %s24
      %p372 = scmp.lt.s32.totalorder %s371, 31
      %s373 = scalar_select %p372, %s371, 31
      %s374 = smul.addr %s373, 4
      %s375 = scalar_lea.vmem %s1, %s374
      %s376 = smul.u32 16, %s24
      %p377 = scmp.lt.s32.totalorder %s23, 1
      %s378 = scalar_select %p377, %s23, 1
      %s379 = smul.addr %s378, 16
      %s380 = smul.addr %s379, 4
      %s381 = scalar_lea.vmem %s2, %s380
      %p382 = scmp.lt.s32.totalorder %s23, 1
      %s383 = scalar_select %p382, %s23, 1
      %s384 = scalar_lea.vmem %s3, %s383
      %p385 = scmp.lt.s32.totalorder %s23, 1
      %s386 = scalar_select %p385, %s23, 1
      %s387 = smul.addr %s386, 16
      %s388 = smul.addr %s387, 4
      %s389 = scalar_lea.vmem %s4, %s388
      %p390 = scmp.lt.s32.totalorder %s23, 1
      %s391 = scalar_select %p390, %s23, 1
      %s392 = scalar_lea.vmem %s5, %s391
      %p393 = scmp.lt.s32.totalorder %s23, 1
      %s394 = scalar_select %p393, %s23, 1
      %s395 = smul.addr %s394, 8
      %s396 = scalar_lea.vmem %s6, %s395
      %p397 = scmp.lt.s32.totalorder %s23, 1
      %s398 = scalar_select %p397, %s23, 1
      %s399 = smul.addr %s398, 8
      %s400 = scalar_lea.vmem %s7, %s399
      %p402 = scmp.eq.s32.totalorder %s24, 0
      // Predicated region
      $region45: #{_mimo_gcn_forward.7} parent=43 // pred_check
        %p403 = pneg %p402
      $region46: #{_mimo_gcn_forward.7} parent=43 // pred_check_branch
        %405 = sbr.rel (%p403) target = $region48
      $region47: #{_mimo_gcn_forward.7} parent=43 // pred_region
        %406 = vst [vmem:[#allocation2] sm:$0xff] 0.0
      $region48: #{_mimo_gcn_forward.7} parent=43 // pred_fallthru
        _
      %v407 = vld [vmem:[#allocation2] sm:$0xff]
      %v408 = vld [vmem:[%s370] sm:$0xf]
      %v409 = vld [vmem:[%s375] sm:$0xf]
      %v410 = vld [vmem:[%s375 + $0x4] sm:$0xf]
      %v411 = vld [vmem:[%s375 + $0x8] sm:$0xf]
      %v412 = vld [vmem:[%s375 + $0xc] sm:$0xf]
      %v413 = vld [vmem:[%s375 + $0x10] sm:$0xf]
      %v414 = vld [vmem:[%s375 + $0x14] sm:$0xf]
      %v415 = vld [vmem:[%s375 + $0x18] sm:$0xf]
      %v416 = vld [vmem:[%s375 + $0x1c] sm:$0xf]
      %v417 = vld [vmem:[%s375 + $0x20] sm:$0xf]
      %v418 = vld [vmem:[%s375 + $0x24] sm:$0xf]
      %v419 = vld [vmem:[%s375 + $0x28] sm:$0xf]
      %v420 = vld [vmem:[%s375 + $0x2c] sm:$0xf]
      %v421 = vld [vmem:[%s375 + $0x30] sm:$0xf]
      %v422 = vld [vmem:[%s375 + $0x34] sm:$0xf]
      %v423 = vld [vmem:[%s375 + $0x38] sm:$0xf]
      %v424 = vld [vmem:[%s375 + $0x3c] sm:$0xf]
      %v441 = vunpack.c.l.b16 %v409
      %v442 = vunpack.c.l.b16 %v410
      %v443 = vunpack.c.l.b16 %v411
      %v444 = vunpack.c.l.b16 %v412
      %v445 = vunpack.c.l.b16 %v413
      %v446 = vunpack.c.l.b16 %v414
      %v447 = vunpack.c.l.b16 %v415
      %v448 = vunpack.c.l.b16 %v416
      %v449 = vunpack.c.l.b16 %v417
      %v450 = vunpack.c.l.b16 %v418
      %v451 = vunpack.c.l.b16 %v419
      %v452 = vunpack.c.l.b16 %v420
      %v453 = vunpack.c.l.b16 %v421
      %v454 = vunpack.c.l.b16 %v422
      %v455 = vunpack.c.l.b16 %v423
      %v456 = vunpack.c.l.b16 %v424
      %v457 = vpack.c.b16 %v442, %v441
      %v458 = vpack.c.b16 %v444, %v443
      %v459 = vpack.c.b16 %v446, %v445
      %v460 = vpack.c.b16 %v448, %v447
      %v461 = vpack.c.b16 %v450, %v449
      %v462 = vpack.c.b16 %v452, %v451
      %v463 = vpack.c.b16 %v454, %v453
      %v464 = vpack.c.b16 %v456, %v455
      %473 = vmatprep.subr.bf16.mxu0 0
      %474 = vmatpush1.bf16.msra.mxu0 %v457
      %475 = vmatprep.subr.bf16.mxu0 0
      %476 = vmatpush1.bf16.msra.mxu0 %v458
      %477 = vmatprep.subr.bf16.mxu0 0
      %478 = vmatpush1.bf16.msra.mxu0 %v459
      %479 = vmatprep.subr.bf16.mxu0 0
      %480 = vmatpush1.bf16.msra.mxu0 %v460
      %481 = vmatprep.subr.bf16.mxu0 0
      %482 = vmatpush1.bf16.msra.mxu0 %v461
      %483 = vmatprep.subr.bf16.mxu0 0
      %484 = vmatpush1.bf16.msra.mxu0 %v462
      %485 = vmatprep.subr.bf16.mxu0 0
      %486 = vmatpush1.bf16.msra.mxu0 %v463
      %487 = vmatprep.subr.bf16.mxu0 0
      %488 = vmatpush1.bf16.msra.mxu0 %v464
      %489 = vmatprep.subr.bf16.mxu0 0
      %490 = vmatpush1.bf16.msra.mxu0 0
      %491 = vmatprep.subr.bf16.mxu0 0
      %492 = vmatpush1.bf16.msra.mxu0 0
      %493 = vmatprep.subr.bf16.mxu0 0
      %494 = vmatpush1.bf16.msra.mxu0 0
      %495 = vmatprep.subr.bf16.mxu0 0
      %496 = vmatpush1.bf16.msra.mxu0 0
      %497 = vmatprep.subr.bf16.mxu0 0
      %498 = vmatpush1.bf16.msra.mxu0 0
      %499 = vmatprep.subr.bf16.mxu0 0
      %500 = vmatpush1.bf16.msra.mxu0 0
      %501 = vmatprep.subr.bf16.mxu0 0
      %502 = vmatpush1.bf16.msra.mxu0 0
      %503 = vmatprep.subr.bf16.mxu0 0
      %504 = vmatpush1.bf16.msra.mxu0 0
      %505 = vmatprep.mubr.bf16.mxu0 0
      %506 = vmatmul.mubr.bf16.gmra.mrb[0].mxu0 %v408
      %v507 = vpop.f32.mrb[0].mxu0
      %v508 = vadd.f32 0.0, %v507
      %v509 = vpop.f32.mrb[0].mxu0
      %v510 = vpop.f32.mrb[0].mxu0
      %v511 = vpop.f32.mrb[0].mxu0
      %512 = vdwg.mxu0
      %v513 = vadd.f32 %v407, %v508
      %514 = vst [vmem:[#allocation2] sm:$0xff] %v513
      %p515 = scmp.eq.s32.totalorder %s24, 1
      // Predicated region
      $region49: #{_mimo_gcn_forward.7} parent=43 // pred_check
        %p516 = pneg %p515
      $region50: #{_mimo_gcn_forward.7} parent=43 // pred_check_branch
        %518 = sbr.rel (%p516) target = $region52
      $region51: #{_mimo_gcn_forward.7} parent=43 // pred_region
        %v519 = vld [vmem:[#allocation2] sm:$0xff]
        %520 = vst [vmem:[%s396] sm:$0xff] %v519
        %v521 = vld [vmem:[%s381] sm:$0xf]
        %v522 = vld [vmem:[%s381 + $0x4] sm:$0xf]
        %v523 = vld [vmem:[%s381 + $0x8] sm:$0xf]
        %v524 = vld [vmem:[%s381 + $0xc] sm:$0xf]
        %v525 = vld [vmem:[%s381 + $0x10] sm:$0xf]
        %v526 = vld [vmem:[%s381 + $0x14] sm:$0xf]
        %v527 = vld [vmem:[%s381 + $0x18] sm:$0xf]
        %v528 = vld [vmem:[%s381 + $0x1c] sm:$0xf]
        %v529 = vld [vmem:[%s381 + $0x20] sm:$0xf]
        %v530 = vld [vmem:[%s381 + $0x24] sm:$0xf]
        %v531 = vld [vmem:[%s381 + $0x28] sm:$0xf]
        %v532 = vld [vmem:[%s381 + $0x2c] sm:$0xf]
        %v533 = vld [vmem:[%s381 + $0x30] sm:$0xf]
        %v534 = vld [vmem:[%s381 + $0x34] sm:$0xf]
        %v535 = vld [vmem:[%s381 + $0x38] sm:$0xf]
        %v536 = vld [vmem:[%s381 + $0x3c] sm:$0xf]
        %v537 = vunpack.c.l.bf16 %v521
        %v538 = vunpack.c.l.bf16 %v522
        %v539 = vunpack.c.l.bf16 %v523
        %v540 = vunpack.c.l.bf16 %v524
        %v541 = vunpack.c.l.bf16 %v525
        %v542 = vunpack.c.l.bf16 %v526
        %v543 = vunpack.c.l.bf16 %v527
        %v544 = vunpack.c.l.bf16 %v528
        %v545 = vunpack.c.l.bf16 %v529
        %v546 = vunpack.c.l.bf16 %v530
        %v547 = vunpack.c.l.bf16 %v531
        %v548 = vunpack.c.l.bf16 %v532
        %v549 = vunpack.c.l.bf16 %v533
        %v550 = vunpack.c.l.bf16 %v534
        %v551 = vunpack.c.l.bf16 %v535
        %v552 = vunpack.c.l.bf16 %v536
        %v553 = vld [vmem:[%s384] sm:$0x1]
        %v555 = vlaneseq
        %v556 = vshrl.u32 %v555, 7
        %v557 = vsub.s32 0, %v556
        %v558 = vrot.slane %v553, %v557
        %560 = vmatprep.subr.mxu0 0.0
        %561 = vmatpush1.msra.mxu0 %v537
        %562 = vmatprep.subr.mxu0 0.0
        %563 = vmatpush1.msra.mxu0 %v538
        %564 = vmatprep.subr.mxu0 0.0
        %565 = vmatpush1.msra.mxu0 %v539
        %566 = vmatprep.subr.mxu0 0.0
        %567 = vmatpush1.msra.mxu0 %v540
        %568 = vmatprep.subr.mxu0 0.0
        %569 = vmatpush1.msra.mxu0 %v541
        %570 = vmatprep.subr.mxu0 0.0
        %571 = vmatpush1.msra.mxu0 %v542
        %572 = vmatprep.subr.mxu0 0.0
        %573 = vmatpush1.msra.mxu0 %v543
        %574 = vmatprep.subr.mxu0 0.0
        %575 = vmatpush1.msra.mxu0 %v544
        %576 = vmatprep.subr.mxu0 0.0
        %577 = vmatpush1.msra.mxu0 %v545
        %578 = vmatprep.subr.mxu0 0.0
        %579 = vmatpush1.msra.mxu0 %v546
        %580 = vmatprep.subr.mxu0 0.0
        %581 = vmatpush1.msra.mxu0 %v547
        %582 = vmatprep.subr.mxu0 0.0
        %583 = vmatpush1.msra.mxu0 %v548
        %584 = vmatprep.subr.mxu0 0.0
        %585 = vmatpush1.msra.mxu0 %v549
        %586 = vmatprep.subr.mxu0 0.0
        %587 = vmatpush1.msra.mxu0 %v550
        %588 = vmatprep.subr.mxu0 0.0
        %589 = vmatpush1.msra.mxu0 %v551
        %590 = vmatprep.subr.mxu0 0.0
        %591 = vmatpush1.msra.mxu0 %v552
        %592 = vmatprep.subr.mxu0 0.0
        %593 = vmatpush1.msra.mxu0 0.0
        %594 = vmatprep.subr.mxu0 0.0
        %595 = vmatpush1.msra.mxu0 0.0
        %596 = vmatprep.subr.mxu0 0.0
        %597 = vmatpush1.msra.mxu0 0.0
        %598 = vmatprep.subr.mxu0 0.0
        %599 = vmatpush1.msra.mxu0 0.0
        %600 = vmatprep.subr.mxu0 0.0
        %601 = vmatpush1.msra.mxu0 0.0
        %602 = vmatprep.subr.mxu0 0.0
        %603 = vmatpush1.msra.mxu0 0.0
        %604 = vmatprep.subr.mxu0 0.0
        %605 = vmatpush1.msra.mxu0 0.0
        %606 = vmatprep.subr.mxu0 0.0
        %607 = vmatpush1.msra.mxu0 0.0
        %608 = vmatprep.subr.mxu0 0.0
        %609 = vmatpush1.msra.mxu0 0.0
        %610 = vmatprep.subr.mxu0 0.0
        %611 = vmatpush1.msra.mxu0 0.0
        %612 = vmatprep.subr.mxu0 0.0
        %613 = vmatpush1.msra.mxu0 0.0
        %614 = vmatprep.subr.mxu0 0.0
        %615 = vmatpush1.msra.mxu0 0.0
        %616 = vmatprep.subr.mxu0 0.0
        %617 = vmatpush1.msra.mxu0 0.0
        %618 = vmatprep.subr.mxu0 0.0
        %619 = vmatpush1.msra.mxu0 0.0
        %620 = vmatprep.subr.mxu0 0.0
        %621 = vmatpush1.msra.mxu0 0.0
        %622 = vmatprep.subr.mxu0 0.0
        %623 = vmatpush1.msra.mxu0 0.0
        %624 = vmatprep.mubr.f32.mxu0 0.0
        %625 = vmatmul.mubr.f32.gmra.mrb[0].mxu0 %v519
        %v626 = vpop.f32.mrb[0].mxu0
        %v627 = vadd.f32 %v558, %v626
        %v628 = vpop.f32.mrb[0].mxu0
        %629 = vdwg.mxu0
        %v630 = vmax.f32 %v627, 0.0
        %v631 = vld [vmem:[%s389] sm:$0xf]
        %v632 = vld [vmem:[%s389 + $0x4] sm:$0xf]
        %v633 = vld [vmem:[%s389 + $0x8] sm:$0xf]
        %v634 = vld [vmem:[%s389 + $0xc] sm:$0xf]
        %v635 = vld [vmem:[%s389 + $0x10] sm:$0xf]
        %v636 = vld [vmem:[%s389 + $0x14] sm:$0xf]
        %v637 = vld [vmem:[%s389 + $0x18] sm:$0xf]
        %v638 = vld [vmem:[%s389 + $0x1c] sm:$0xf]
        %v639 = vld [vmem:[%s389 + $0x20] sm:$0xf]
        %v640 = vld [vmem:[%s389 + $0x24] sm:$0xf]
        %v641 = vld [vmem:[%s389 + $0x28] sm:$0xf]
        %v642 = vld [vmem:[%s389 + $0x2c] sm:$0xf]
        %v643 = vld [vmem:[%s389 + $0x30] sm:$0xf]
        %v644 = vld [vmem:[%s389 + $0x34] sm:$0xf]
        %v645 = vld [vmem:[%s389 + $0x38] sm:$0xf]
        %v646 = vld [vmem:[%s389 + $0x3c] sm:$0xf]
        %v647 = vunpack.c.l.bf16 %v631
        %v648 = vunpack.c.l.bf16 %v632
        %v649 = vunpack.c.l.bf16 %v633
        %v650 = vunpack.c.l.bf16 %v634
        %v651 = vunpack.c.l.bf16 %v635
        %v652 = vunpack.c.l.bf16 %v636
        %v653 = vunpack.c.l.bf16 %v637
        %v654 = vunpack.c.l.bf16 %v638
        %v655 = vunpack.c.l.bf16 %v639
        %v656 = vunpack.c.l.bf16 %v640
        %v657 = vunpack.c.l.bf16 %v641
        %v658 = vunpack.c.l.bf16 %v642
        %v659 = vunpack.c.l.bf16 %v643
        %v660 = vunpack.c.l.bf16 %v644
        %v661 = vunpack.c.l.bf16 %v645
        %v662 = vunpack.c.l.bf16 %v646
        %v663 = vld [vmem:[%s392] sm:$0x1]
        %v665 = vlaneseq
        %v666 = vshrl.u32 %v665, 7
        %v667 = vsub.s32 0, %v666
        %v668 = vrot.slane %v663, %v667
        %670 = vmatprep.subr.mxu0 0.0
        %671 = vmatpush1.msra.mxu0 %v647
        %672 = vmatprep.subr.mxu0 0.0
        %673 = vmatpush1.msra.mxu0 %v648
        %674 = vmatprep.subr.mxu0 0.0
        %675 = vmatpush1.msra.mxu0 %v649
        %676 = vmatprep.subr.mxu0 0.0
        %677 = vmatpush1.msra.mxu0 %v650
        %678 = vmatprep.subr.mxu0 0.0
        %679 = vmatpush1.msra.mxu0 %v651
        %680 = vmatprep.subr.mxu0 0.0
        %681 = vmatpush1.msra.mxu0 %v652
        %682 = vmatprep.subr.mxu0 0.0
        %683 = vmatpush1.msra.mxu0 %v653
        %684 = vmatprep.subr.mxu0 0.0
        %685 = vmatpush1.msra.mxu0 %v654
        %686 = vmatprep.subr.mxu0 0.0
        %687 = vmatpush1.msra.mxu0 %v655
        %688 = vmatprep.subr.mxu0 0.0
        %689 = vmatpush1.msra.mxu0 %v656
        %690 = vmatprep.subr.mxu0 0.0
        %691 = vmatpush1.msra.mxu0 %v657
        %692 = vmatprep.subr.mxu0 0.0
        %693 = vmatpush1.msra.mxu0 %v658
        %694 = vmatprep.subr.mxu0 0.0
        %695 = vmatpush1.msra.mxu0 %v659
        %696 = vmatprep.subr.mxu0 0.0
        %697 = vmatpush1.msra.mxu0 %v660
        %698 = vmatprep.subr.mxu0 0.0
        %699 = vmatpush1.msra.mxu0 %v661
        %700 = vmatprep.subr.mxu0 0.0
        %701 = vmatpush1.msra.mxu0 %v662
        %702 = vmatprep.subr.mxu0 0.0
        %703 = vmatpush1.msra.mxu0 0.0
        %704 = vmatprep.subr.mxu0 0.0
        %705 = vmatpush1.msra.mxu0 0.0
        %706 = vmatprep.subr.mxu0 0.0
        %707 = vmatpush1.msra.mxu0 0.0
        %708 = vmatprep.subr.mxu0 0.0
        %709 = vmatpush1.msra.mxu0 0.0
        %710 = vmatprep.subr.mxu0 0.0
        %711 = vmatpush1.msra.mxu0 0.0
        %712 = vmatprep.subr.mxu0 0.0
        %713 = vmatpush1.msra.mxu0 0.0
        %714 = vmatprep.subr.mxu0 0.0
        %715 = vmatpush1.msra.mxu0 0.0
        %716 = vmatprep.subr.mxu0 0.0
        %717 = vmatpush1.msra.mxu0 0.0
        %718 = vmatprep.subr.mxu0 0.0
        %719 = vmatpush1.msra.mxu0 0.0
        %720 = vmatprep.subr.mxu0 0.0
        %721 = vmatpush1.msra.mxu0 0.0
        %722 = vmatprep.subr.mxu0 0.0
        %723 = vmatpush1.msra.mxu0 0.0
        %724 = vmatprep.subr.mxu0 0.0
        %725 = vmatpush1.msra.mxu0 0.0
        %726 = vmatprep.subr.mxu0 0.0
        %727 = vmatpush1.msra.mxu0 0.0
        %728 = vmatprep.subr.mxu0 0.0
        %729 = vmatpush1.msra.mxu0 0.0
        %730 = vmatprep.subr.mxu0 0.0
        %731 = vmatpush1.msra.mxu0 0.0
        %732 = vmatprep.subr.mxu0 0.0
        %733 = vmatpush1.msra.mxu0 0.0
        %734 = vmatprep.mubr.f32.mxu0 0.0
        %735 = vmatmul.mubr.f32.gmra.mrb[0].mxu0 %v630
        %v736 = vpop.f32.mrb[0].mxu0
        %v737 = vadd.f32 %v668, %v736
        %v738 = vpop.f32.mrb[0].mxu0
        %739 = vdwg.mxu0
        %740 = vst [vmem:[%s400] sm:$0xff] %v737
      $region52: #{_mimo_gcn_forward.7} parent=43 // pred_fallthru
        _
      %p741 = scmp.lt.s32.totalorder %s23, 1
      %s742 = scalar_select %p741, %s23, 1
      %s743 = smul.addr %s742, 8
      %s744 = scalar_lea.vmem %s6, %s743
      %p745 = scmp.lt.s32.totalorder %s23, 1
      %s746 = scalar_select %p745, %s23, 1
      %s747 = smul.addr %s746, 8
      %s748 = scalar_lea.vmem %s7, %s747
      // Predicated region
      $region53: #{_mimo_gcn_forward.7} parent=43 // pred_check
        %p749 = pneg %p207
      $region54: #{_mimo_gcn_forward.7} parent=43 // pred_check_branch
        %751 = sbr.rel (%p749) target = $region56
      $region55: #{_mimo_gcn_forward.7} parent=43 // pred_region
        _
      $region56: #{_mimo_gcn_forward.7} parent=43 // pred_fallthru
        _
      // Predicated region
      $region57: #{_mimo_gcn_forward.7} parent=43 // pred_check
        %p752 = pneg %p233
      $region58: #{_mimo_gcn_forward.7} parent=43 // pred_check_branch
        %754 = sbr.rel (%p752) target = $region60
      $region59: #{_mimo_gcn_forward.7} parent=43 // pred_region
        _
      $region60: #{_mimo_gcn_forward.7} parent=43 // pred_fallthru
        _
    $region44: #{_mimo_gcn_forward.7} parent=5 // pred_fallthru
      _
    %p755 = scmp.le.s32.totalorder 2, %s14
    // Predicated region
    $region61: #{_mimo_gcn_forward.7} parent=5 // pred_check
      %p756 = pneg %p755
    $region62: #{_mimo_gcn_forward.7} parent=5 // pred_check_branch
      %758 = sbr.rel (%p756) target = $region64
    $region63: #{_mimo_gcn_forward.7} parent=5 // pred_region
      %s759 = ssub.s32 %s14, 2
      // Predicated region
      $region65: #{_mimo_gcn_forward.7} parent=63 // pred_check
        %p760 = pneg %p213
      $region66: #{_mimo_gcn_forward.7} parent=63 // pred_check_branch
        %762 = sbr.rel (%p760) target = $region68
      $region67: #{_mimo_gcn_forward.7} parent=63 // pred_region
        %p763 = scmp.lt.s32.totalorder %s25, 1
        %s764 = scalar_select %p763, %s25, 1
        %s765 = smul.addr %s764, 8
        %s766 = scalar_lea.vmem %s6, %s765
      $region68: #{_mimo_gcn_forward.7} parent=63 // pred_fallthru
        _
      // Predicated region
      $region69: #{_mimo_gcn_forward.7} parent=63 // pred_check
        %p767 = pneg %p239
      $region70: #{_mimo_gcn_forward.7} parent=63 // pred_check_branch
        %769 = sbr.rel (%p767) target = $region72
      $region71: #{_mimo_gcn_forward.7} parent=63 // pred_region
        %p770 = scmp.lt.s32.totalorder %s25, 1
        %s771 = scalar_select %p770, %s25, 1
        %s772 = smul.addr %s771, 8
        %s773 = scalar_lea.vmem %s7, %s772
      $region72: #{_mimo_gcn_forward.7} parent=63 // pred_fallthru
        _
    $region64: #{_mimo_gcn_forward.7} parent=5 // pred_fallthru
      _
  $region6: #{_mimo_gcn_forward.7} parent=0 // loop_footer
    %s18 = sadd.s32 1, %s14
  $region7: #{_mimo_gcn_forward.7} parent=0 // loop_footer_branch
    %13 = sbr.rel target = $region3
  $region8: #{_mimo_gcn_forward.7} parent=0 // loop_exit
    _

</llo_original>
